<compile_context>
chip_gen: v7x
topology: tpu7x:2x2x1
jax: 0.10.0
libtpu: 0.0.40
codegen_flags: <defaults>
</compile_context>

<pallas_src>
import functools
import math

import jax
import jax.numpy as jnp
from jax import lax
from jax.experimental import pallas as pl
from jax.experimental.pallas import tpu as pltpu


def _pick_row_tile(h, target):
    """Largest divisor of h that is <= target (keeps the grid exact, no masking)."""
    t = min(h, max(1, target))
    while h % t:
        t -= 1
    return t


# ------------------------------ Pallas kernel --------------------------------

def _upconv_kernel(xpad_hbm, wc_ref, b_ref, o_ref, xbuf, sem, *, TH, W, Cin, Cout):
    """Fused nearest-x2-upsample + 3x3 conv for one (batch, row-tile) block.

    xpad_hbm : (N, H+2, W+2, Cin) raw HBM ref (1-pixel zero pad already applied)
    wc_ref   : (16, Cin, Cout) VMEM, combined tap weights, flat index
               ((di*2 + dj)*2 + tr)*2 + tc
    b_ref    : (1, Cout) VMEM bias (f32)
    o_ref    : (1, TH, 2, W, 2*Cout) output block
    xbuf     : (TH+2, W+2, Cin) VMEM scratch (halo'd input rows)
    """
    n = pl.program_id(0)
    h = pl.program_id(1)
    row0 = pl.multiple_of(h * TH, TH)

    # Manual DMA of the halo'd row window (rows overlap between tiles, which a
    # Blocked index_map cannot express).
    cp = pltpu.make_async_copy(xpad_hbm.at[n, pl.ds(row0, TH + 2)], xbuf, sem)
    cp.start()
    cp.wait()

    bias = b_ref[...].astype(jnp.float32)                      # (1, Cout)

    for di in range(2):
        halves = []
        for dj in range(2):
            acc = jnp.zeros((TH * W, Cout), jnp.float32) + bias
            for tr in range(2):
                for tc in range(2):
                    # out[2a+di, 2b+dj] += x[a-1+di+tr, b-1+dj+tc] @ Wc[di,dj,tr,tc]
                    win = xbuf[di + tr: di + tr + TH,
                               dj + tc: dj + tc + W, :]          # (TH, W, Cin)
                    wtap = wc_ref[((di * 2 + dj) * 2 + tr) * 2 + tc]
                    acc = acc + jnp.dot(win.reshape(TH * W, Cin), wtap,
                                        preferred_element_type=jnp.float32)
            halves.append(acc.reshape(TH, W, Cout))
        # Lane-dense write: (TH, W, 2*Cout) slab, minor dim 2*Cout.
        o_ref[0, :, di, :, :] = jnp.concatenate(halves, axis=-1).astype(o_ref.dtype)


# --------------------------------- wrapper -----------------------------------

def upsample_forward(x_nchw, weight_oihw, bias, *, row_block=32, compute_dtype=None):
    """PyTorch Upsample.forward: conv3x3(nearest_upsample_x2(x)), NCHW in/out."""
    N, C, H, W = x_nchw.shape
    Cout, Cin, kh, kw = weight_oihw.shape
    assert (Cin, kh, kw) == (C, 3, 3)
    cdt = compute_dtype if compute_dtype is not None else x_nchw.dtype
    out_dtype = x_nchw.dtype

    # NCHW -> NHWC (channels on the lane dim for the MXU); single 1-pixel spatial
    # zero-pad of the *small* (pre-upsample) tensor replaces all halo handling.
    x = jnp.transpose(x_nchw, (0, 2, 3, 1))
    xpad = jnp.pad(x, ((0, 0), (1, 1), (1, 1), (0, 0))).astype(cdt)

    # Fold upsample+conv:  out[2a+di, 2b+dj] =
    #   bias + sum_{tr,tc} x[a-1+di+tr, b-1+dj+tc] @ Wc[di,dj,tr,tc]
    # with Wc[d,e,r,s] = sum_{kh,kw} R[d,r,kh] * R[e,s,kw] * W3[kh,kw]
    w3 = jnp.transpose(weight_oihw, (2, 3, 1, 0)).astype(jnp.float32)  # (3,3,Cin,Cout)
    R = jnp.array([[[1., 0., 0.], [0., 1., 1.]],
                   [[1., 1., 0.], [0., 0., 1.]]], jnp.float32)          # R[d, t, k]
    wc = jnp.einsum('ark,bsl,klio->abrsio', R, R, w3)       # (2,2,2,2,Cin,Cout)
    wc = wc.reshape(16, Cin, Cout).astype(cdt)
    b2 = bias.reshape(1, Cout).astype(jnp.float32)

    TH = _pick_row_tile(H, row_block)

    grid_spec = pltpu.PrefetchScalarGridSpec(
        num_scalar_prefetch=0,
        grid=(N, H // TH),
        in_specs=[
            pl.BlockSpec(memory_space=pl.ANY),                      # padded x (HBM)
            pl.BlockSpec((16, Cin, Cout), lambda n, h: (0, 0, 0)),  # folded weights
            pl.BlockSpec((1, Cout), lambda n, h: (0, 0)),           # bias
        ],
        out_specs=pl.BlockSpec((1, TH, 2, W, 2 * Cout),
                               lambda n, h: (n, h, 0, 0, 0)),
        scratch_shapes=[pltpu.VMEM((TH + 2, W + 2, Cin), cdt),
                        pltpu.SemaphoreType.DMA(())],
    )

    out6 = pl.pallas_call(
        functools.partial(_upconv_kernel, TH=TH, W=W, Cin=Cin, Cout=Cout),
        out_shape=jax.ShapeDtypeStruct((N, H, 2, W, 2 * Cout), out_dtype),
        grid_spec=grid_spec,
        compiler_params=pltpu.CompilerParams(
            dimension_semantics=("parallel", "parallel"),
            vmem_limit_bytes=32 * 1024 * 1024),
    )(xpad, wc, b2)

    # (N, H, 2, W, 2*C) -> (N, 2H, 2W, C) is a pure-metadata (zero-copy) reshape.
    out = out6.reshape(N, 2 * H, 2 * W, Cout)
    return jnp.transpose(out, (0, 3, 1, 2))                          # NHWC -> NCHW


# ----------------------------------- main -------------------------------------

if __name__ == "__main__":
    dim, N, H, W = 128, 2, 16, 16

    key = jax.random.PRNGKey(0)
    kx, kw_, kb = jax.random.split(key, 3)
    bound = 1.0 / math.sqrt(dim * 9)                       # torch Conv2d default init
    w = jax.random.uniform(kw_, (dim, dim, 3, 3), jnp.float32, -bound, bound)  # OIHW
    b = jax.random.uniform(kb, (dim,), jnp.float32, -bound, bound)
    x = jax.random.normal(kx, (N, dim, H, W), jnp.float32)

    fwd = jax.jit(lambda x_, w_, b_: upsample_forward(x_, w_, b_, row_block=8))
    out = fwd(x, w, b)
    jax.block_until_ready(out)
    assert out.shape == (N, dim, 2 * H, 2 * W)
    assert bool(jnp.all(jnp.isfinite(out)))

    # Reference: explicit nearest x2 upsample + 3x3 conv via XLA.
    up = jnp.repeat(jnp.repeat(x, 2, axis=2), 2, axis=3)
    ref = lax.conv_general_dilated(
        up, w, (1, 1), ((1, 1), (1, 1)),
        dimension_numbers=("NCHW", "OIHW", "NCHW"),
        precision=lax.Precision.HIGHEST) + b[None, :, None, None]
    assert bool(jnp.allclose(out, ref, atol=3e-2, rtol=3e-2)), \
        float(jnp.max(jnp.abs(out - ref)))

    # bf16 compute path (halved DMA bytes / bf16 MXU), f32 accumulation.
    out_bf16 = jax.jit(lambda x_, w_, b_: upsample_forward(
        x_, w_, b_, row_block=8, compute_dtype=jnp.bfloat16))(x, w, b)
    jax.block_until_ready(out_bf16)
    assert out_bf16.shape == (N, dim, 2 * H, 2 * W)
    assert bool(jnp.all(jnp.isfinite(out_bf16)))

    print("KERNEL_OK")
</pallas_src>

<mosaic_0001>
module attributes {stable_mosaic.version = 11 : i64} {
  func.func @_upconv_kernel(%arg0: i32, %arg1: i32, %arg2: memref<2x18x18x128xf32, #tpu.memory_space<any>>, %arg3: memref<16x128x128xf32, #tpu.memory_space<vmem>>, %arg4: memref<1x128xf32, #tpu.memory_space<vmem>>, %arg5: memref<1x8x2x16x256xf32, #tpu.memory_space<vmem>>, %arg6: memref<10x18x128xf32, #tpu.memory_space<vmem>>, %arg7: memref<!tpu.dma_semaphore, #tpu.memory_space<semaphore_mem>>) attributes {dimension_semantics = [#tpu.dimension_semantics<parallel>, #tpu.dimension_semantics<parallel>], iteration_bounds = array<i64: 2, 2>, scalar_prefetch = 0 : i64, scratch_operands = 2 : i64, tpu.core_type = #tpu.core_type<tc>, window_params = [{}, {pipeline_mode = #tpu.pipeline_mode<synchronous>, transform_indices = @transform_1, window_bounds = array<i64: 16, 128, 128>}, {pipeline_mode = #tpu.pipeline_mode<synchronous>, transform_indices = @transform_2, window_bounds = array<i64: 1, 128>}, {transform_indices = @transform_3, window_bounds = array<i64: 1, 8, 2, 16, 256>}]} {
    %c8_i32 = arith.constant 8 : i32
    %0 = arith.muli %arg1, %c8_i32 : i32
    %1 = tpu.assume_multiple %0, 8 : i32
    %c0_i32 = arith.constant 0 : i32
    %c0_i32_0 = arith.constant 0 : i32
    %2 = tpu.memref_slice %arg2[%arg0, %1, %c0_i32, %c0_i32_0] : memref<2x18x18x128xf32, #tpu.memory_space<any>> -> memref<1x10x18x128xf32, #tpu.memory_space<any>>
    %3 = tpu.memref_squeeze %2 : memref<1x10x18x128xf32, #tpu.memory_space<any>> -> memref<10x18x128xf32, #tpu.memory_space<any>>
    tpu.enqueue_dma source(%3 : memref<10x18x128xf32, #tpu.memory_space<any>>) target(%arg6 : memref<10x18x128xf32, #tpu.memory_space<vmem>>) target_semaphore(%arg7 : memref<!tpu.dma_semaphore, #tpu.memory_space<semaphore_mem>>)
    %c0_i32_1 = arith.constant 0 : i32
    %c0_i32_2 = arith.constant 0 : i32
    %4 = tpu.memref_slice %arg2[%arg0, %1, %c0_i32_1, %c0_i32_2] : memref<2x18x18x128xf32, #tpu.memory_space<any>> -> memref<1x10x18x128xf32, #tpu.memory_space<any>>
    %5 = tpu.memref_squeeze %4 : memref<1x10x18x128xf32, #tpu.memory_space<any>> -> memref<10x18x128xf32, #tpu.memory_space<any>>
    tpu.wait_dma2 semaphore(%arg7 : memref<!tpu.dma_semaphore, #tpu.memory_space<semaphore_mem>>) src(%5 : memref<10x18x128xf32, #tpu.memory_space<any>>) dst(%arg6 : memref<10x18x128xf32, #tpu.memory_space<vmem>>)
    %c0 = arith.constant 0 : index
    %c0_3 = arith.constant 0 : index
    %6 = vector.load %arg4[%c0, %c0_3] : memref<1x128xf32, #tpu.memory_space<vmem>>, vector<1x128xf32>
    %cst = arith.constant 0.000000e+00 : f32
    %7 = vector.broadcast %cst : f32 to vector<128x128xf32>
    %8 = vector.broadcast %6 : vector<1x128xf32> to vector<128x128xf32>
    %9 = arith.addf %7, %8 : vector<128x128xf32>
    %c0_4 = arith.constant 0 : index
    %c0_5 = arith.constant 0 : index
    %c0_6 = arith.constant 0 : index
    %10 = vector.load %arg6[%c0_4, %c0_5, %c0_6] : memref<10x18x128xf32, #tpu.memory_space<vmem>>, vector<8x16x128xf32>
    %c0_7 = arith.constant 0 : index
    %c0_8 = arith.constant 0 : index
    %c0_9 = arith.constant 0 : index
    %11 = vector.load %arg3[%c0_7, %c0_8, %c0_9] : memref<16x128x128xf32, #tpu.memory_space<vmem>>, vector<1x128x128xf32>
    %12 = vector.shape_cast %11 : vector<1x128x128xf32> to vector<128x128xf32>
    %13 = vector.shape_cast %10 : vector<8x16x128xf32> to vector<128x128xf32>
    %cst_10 = arith.constant dense<0.000000e+00> : vector<128x128xf32>
    %14 = tpu.matmul %13, %12, %cst_10 {dimension_numbers = #tpu.dot_dimension_numbers<[1], [0], [0], [1], [0, 0, 1, 1], [], []>} : vector<128x128xf32>, vector<128x128xf32>, vector<128x128xf32> -> vector<128x128xf32>
    %15 = arith.addf %9, %14 : vector<128x128xf32>
    %c0_11 = arith.constant 0 : index
    %c1 = arith.constant 1 : index
    %c0_12 = arith.constant 0 : index
    %16 = vector.load %arg6[%c0_11, %c1, %c0_12] : memref<10x18x128xf32, #tpu.memory_space<vmem>>, vector<8x16x128xf32>
    %c1_13 = arith.constant 1 : index
    %c0_14 = arith.constant 0 : index
    %c0_15 = arith.constant 0 : index
    %17 = vector.load %arg3[%c1_13, %c0_14, %c0_15] : memref<16x128x128xf32, #tpu.memory_space<vmem>>, vector<1x128x128xf32>
    %18 = vector.shape_cast %17 : vector<1x128x128xf32> to vector<128x128xf32>
    %19 = vector.shape_cast %16 : vector<8x16x128xf32> to vector<128x128xf32>
    %cst_16 = arith.constant dense<0.000000e+00> : vector<128x128xf32>
    %20 = tpu.matmul %19, %18, %cst_16 {dimension_numbers = #tpu.dot_dimension_numbers<[1], [0], [0], [1], [0, 0, 1, 1], [], []>} : vector<128x128xf32>, vector<128x128xf32>, vector<128x128xf32> -> vector<128x128xf32>
    %21 = arith.addf %15, %20 : vector<128x128xf32>
    %c1_17 = arith.constant 1 : index
    %c0_18 = arith.constant 0 : index
    %c0_19 = arith.constant 0 : index
    %22 = vector.load %arg6[%c1_17, %c0_18, %c0_19] : memref<10x18x128xf32, #tpu.memory_space<vmem>>, vector<8x16x128xf32>
    %c2 = arith.constant 2 : index
    %c0_20 = arith.constant 0 : index
    %c0_21 = arith.constant 0 : index
    %23 = vector.load %arg3[%c2, %c0_20, %c0_21] : memref<16x128x128xf32, #tpu.memory_space<vmem>>, vector<1x128x128xf32>
    %24 = vector.shape_cast %23 : vector<1x128x128xf32> to vector<128x128xf32>
    %25 = vector.shape_cast %22 : vector<8x16x128xf32> to vector<128x128xf32>
    %cst_22 = arith.constant dense<0.000000e+00> : vector<128x128xf32>
    %26 = tpu.matmul %25, %24, %cst_22 {dimension_numbers = #tpu.dot_dimension_numbers<[1], [0], [0], [1], [0, 0, 1, 1], [], []>} : vector<128x128xf32>, vector<128x128xf32>, vector<128x128xf32> -> vector<128x128xf32>
    %27 = arith.addf %21, %26 : vector<128x128xf32>
    %c1_23 = arith.constant 1 : index
    %c1_24 = arith.constant 1 : index
    %c0_25 = arith.constant 0 : index
    %28 = vector.load %arg6[%c1_23, %c1_24, %c0_25] : memref<10x18x128xf32, #tpu.memory_space<vmem>>, vector<8x16x128xf32>
    %c3 = arith.constant 3 : index
    %c0_26 = arith.constant 0 : index
    %c0_27 = arith.constant 0 : index
    %29 = vector.load %arg3[%c3, %c0_26, %c0_27] : memref<16x128x128xf32, #tpu.memory_space<vmem>>, vector<1x128x128xf32>
    %30 = vector.shape_cast %29 : vector<1x128x128xf32> to vector<128x128xf32>
    %31 = vector.shape_cast %28 : vector<8x16x128xf32> to vector<128x128xf32>
    %cst_28 = arith.constant dense<0.000000e+00> : vector<128x128xf32>
    %32 = tpu.matmul %31, %30, %cst_28 {dimension_numbers = #tpu.dot_dimension_numbers<[1], [0], [0], [1], [0, 0, 1, 1], [], []>} : vector<128x128xf32>, vector<128x128xf32>, vector<128x128xf32> -> vector<128x128xf32>
    %33 = arith.addf %27, %32 : vector<128x128xf32>
    %34 = vector.shape_cast %33 : vector<128x128xf32> to vector<8x16x128xf32>
    %cst_29 = arith.constant 0.000000e+00 : f32
    %35 = vector.broadcast %cst_29 : f32 to vector<128x128xf32>
    %36 = vector.broadcast %6 : vector<1x128xf32> to vector<128x128xf32>
    %37 = arith.addf %35, %36 : vector<128x128xf32>
    %c0_30 = arith.constant 0 : index
    %c1_31 = arith.constant 1 : index
    %c0_32 = arith.constant 0 : index
    %38 = vector.load %arg6[%c0_30, %c1_31, %c0_32] : memref<10x18x128xf32, #tpu.memory_space<vmem>>, vector<8x16x128xf32>
    %c4 = arith.constant 4 : index
    %c0_33 = arith.constant 0 : index
    %c0_34 = arith.constant 0 : index
    %39 = vector.load %arg3[%c4, %c0_33, %c0_34] : memref<16x128x128xf32, #tpu.memory_space<vmem>>, vector<1x128x128xf32>
    %40 = vector.shape_cast %39 : vector<1x128x128xf32> to vector<128x128xf32>
    %41 = vector.shape_cast %38 : vector<8x16x128xf32> to vector<128x128xf32>
    %cst_35 = arith.constant dense<0.000000e+00> : vector<128x128xf32>
    %42 = tpu.matmul %41, %40, %cst_35 {dimension_numbers = #tpu.dot_dimension_numbers<[1], [0], [0], [1], [0, 0, 1, 1], [], []>} : vector<128x128xf32>, vector<128x128xf32>, vector<128x128xf32> -> vector<128x128xf32>
    %43 = arith.addf %37, %42 : vector<128x128xf32>
    %c0_36 = arith.constant 0 : index
    %c2_37 = arith.constant 2 : index
    %c0_38 = arith.constant 0 : index
    %44 = vector.load %arg6[%c0_36, %c2_37, %c0_38] : memref<10x18x128xf32, #tpu.memory_space<vmem>>, vector<8x16x128xf32>
    %c5 = arith.constant 5 : index
    %c0_39 = arith.constant 0 : index
    %c0_40 = arith.constant 0 : index
    %45 = vector.load %arg3[%c5, %c0_39, %c0_40] : memref<16x128x128xf32, #tpu.memory_space<vmem>>, vector<1x128x128xf32>
    %46 = vector.shape_cast %45 : vector<1x128x128xf32> to vector<128x128xf32>
    %47 = vector.shape_cast %44 : vector<8x16x128xf32> to vector<128x128xf32>
    %cst_41 = arith.constant dense<0.000000e+00> : vector<128x128xf32>
    %48 = tpu.matmul %47, %46, %cst_41 {dimension_numbers = #tpu.dot_dimension_numbers<[1], [0], [0], [1], [0, 0, 1, 1], [], []>} : vector<128x128xf32>, vector<128x128xf32>, vector<128x128xf32> -> vector<128x128xf32>
    %49 = arith.addf %43, %48 : vector<128x128xf32>
    %c1_42 = arith.constant 1 : index
    %c1_43 = arith.constant 1 : index
    %c0_44 = arith.constant 0 : index
    %50 = vector.load %arg6[%c1_42, %c1_43, %c0_44] : memref<10x18x128xf32, #tpu.memory_space<vmem>>, vector<8x16x128xf32>
    %c6 = arith.constant 6 : index
    %c0_45 = arith.constant 0 : index
    %c0_46 = arith.constant 0 : index
    %51 = vector.load %arg3[%c6, %c0_45, %c0_46] : memref<16x128x128xf32, #tpu.memory_space<vmem>>, vector<1x128x128xf32>
    %52 = vector.shape_cast %51 : vector<1x128x128xf32> to vector<128x128xf32>
    %53 = vector.shape_cast %50 : vector<8x16x128xf32> to vector<128x128xf32>
    %cst_47 = arith.constant dense<0.000000e+00> : vector<128x128xf32>
    %54 = tpu.matmul %53, %52, %cst_47 {dimension_numbers = #tpu.dot_dimension_numbers<[1], [0], [0], [1], [0, 0, 1, 1], [], []>} : vector<128x128xf32>, vector<128x128xf32>, vector<128x128xf32> -> vector<128x128xf32>
    %55 = arith.addf %49, %54 : vector<128x128xf32>
    %c1_48 = arith.constant 1 : index
    %c2_49 = arith.constant 2 : index
    %c0_50 = arith.constant 0 : index
    %56 = vector.load %arg6[%c1_48, %c2_49, %c0_50] : memref<10x18x128xf32, #tpu.memory_space<vmem>>, vector<8x16x128xf32>
    %c7 = arith.constant 7 : index
    %c0_51 = arith.constant 0 : index
    %c0_52 = arith.constant 0 : index
    %57 = vector.load %arg3[%c7, %c0_51, %c0_52] : memref<16x128x128xf32, #tpu.memory_space<vmem>>, vector<1x128x128xf32>
    %58 = vector.shape_cast %57 : vector<1x128x128xf32> to vector<128x128xf32>
    %59 = vector.shape_cast %56 : vector<8x16x128xf32> to vector<128x128xf32>
    %cst_53 = arith.constant dense<0.000000e+00> : vector<128x128xf32>
    %60 = tpu.matmul %59, %58, %cst_53 {dimension_numbers = #tpu.dot_dimension_numbers<[1], [0], [0], [1], [0, 0, 1, 1], [], []>} : vector<128x128xf32>, vector<128x128xf32>, vector<128x128xf32> -> vector<128x128xf32>
    %61 = arith.addf %55, %60 : vector<128x128xf32>
    %62 = vector.shape_cast %61 : vector<128x128xf32> to vector<8x16x128xf32>
    %63 = tpu.concatenate %34, %62 in 2 : vector<8x16x128xf32>, vector<8x16x128xf32> -> vector<8x16x256xf32>
    %c0_54 = arith.constant 0 : index
    %c0_55 = arith.constant 0 : index
    %c0_56 = arith.constant 0 : index
    %c0_57 = arith.constant 0 : index
    %c0_58 = arith.constant 0 : index
    %64 = vector.load %arg5[%c0_54, %c0_55, %c0_56, %c0_57, %c0_58] : memref<1x8x2x16x256xf32, #tpu.memory_space<vmem>>, vector<1x8x1x16x256xf32>
    %65 = vector.shape_cast %64 : vector<1x8x1x16x256xf32> to vector<8x16x256xf32>
    %66 = vector.shape_cast %63 : vector<8x16x256xf32> to vector<1x8x1x16x256xf32>
    tpu.vector_store %arg5[%c0_54, %c0_55, %c0_56, %c0_57, %c0_58], %66 {strides = array<i32>} : memref<1x8x2x16x256xf32, #tpu.memory_space<vmem>>, vector<1x8x1x16x256xf32>,
    %cst_59 = arith.constant 0.000000e+00 : f32
    %67 = vector.broadcast %cst_59 : f32 to vector<128x128xf32>
    %68 = vector.broadcast %6 : vector<1x128xf32> to vector<128x128xf32>
    %69 = arith.addf %67, %68 : vector<128x128xf32>
    %c1_60 = arith.constant 1 : index
    %c0_61 = arith.constant 0 : index
    %c0_62 = arith.constant 0 : index
    %70 = vector.load %arg6[%c1_60, %c0_61, %c0_62] : memref<10x18x128xf32, #tpu.memory_space<vmem>>, vector<8x16x128xf32>
    %c8 = arith.constant 8 : index
    %c0_63 = arith.constant 0 : index
    %c0_64 = arith.constant 0 : index
    %71 = vector.load %arg3[%c8, %c0_63, %c0_64] : memref<16x128x128xf32, #tpu.memory_space<vmem>>, vector<1x128x128xf32>
    %72 = vector.shape_cast %71 : vector<1x128x128xf32> to vector<128x128xf32>
    %73 = vector.shape_cast %70 : vector<8x16x128xf32> to vector<128x128xf32>
    %cst_65 = arith.constant dense<0.000000e+00> : vector<128x128xf32>
    %74 = tpu.matmul %73, %72, %cst_65 {dimension_numbers = #tpu.dot_dimension_numbers<[1], [0], [0], [1], [0, 0, 1, 1], [], []>} : vector<128x128xf32>, vector<128x128xf32>, vector<128x128xf32> -> vector<128x128xf32>
    %75 = arith.addf %69, %74 : vector<128x128xf32>
    %c1_66 = arith.constant 1 : index
    %c1_67 = arith.constant 1 : index
    %c0_68 = arith.constant 0 : index
    %76 = vector.load %arg6[%c1_66, %c1_67, %c0_68] : memref<10x18x128xf32, #tpu.memory_space<vmem>>, vector<8x16x128xf32>
    %c9 = arith.constant 9 : index
    %c0_69 = arith.constant 0 : index
    %c0_70 = arith.constant 0 : index
    %77 = vector.load %arg3[%c9, %c0_69, %c0_70] : memref<16x128x128xf32, #tpu.memory_space<vmem>>, vector<1x128x128xf32>
    %78 = vector.shape_cast %77 : vector<1x128x128xf32> to vector<128x128xf32>
    %79 = vector.shape_cast %76 : vector<8x16x128xf32> to vector<128x128xf32>
    %cst_71 = arith.constant dense<0.000000e+00> : vector<128x128xf32>
    %80 = tpu.matmul %79, %78, %cst_71 {dimension_numbers = #tpu.dot_dimension_numbers<[1], [0], [0], [1], [0, 0, 1, 1], [], []>} : vector<128x128xf32>, vector<128x128xf32>, vector<128x128xf32> -> vector<128x128xf32>
    %81 = arith.addf %75, %80 : vector<128x128xf32>
    %c2_72 = arith.constant 2 : index
    %c0_73 = arith.constant 0 : index
    %c0_74 = arith.constant 0 : index
    %82 = vector.load %arg6[%c2_72, %c0_73, %c0_74] : memref<10x18x128xf32, #tpu.memory_space<vmem>>, vector<8x16x128xf32>
    %c10 = arith.constant 10 : index
    %c0_75 = arith.constant 0 : index
    %c0_76 = arith.constant 0 : index
    %83 = vector.load %arg3[%c10, %c0_75, %c0_76] : memref<16x128x128xf32, #tpu.memory_space<vmem>>, vector<1x128x128xf32>
    %84 = vector.shape_cast %83 : vector<1x128x128xf32> to vector<128x128xf32>
    %85 = vector.shape_cast %82 : vector<8x16x128xf32> to vector<128x128xf32>
    %cst_77 = arith.constant dense<0.000000e+00> : vector<128x128xf32>
    %86 = tpu.matmul %85, %84, %cst_77 {dimension_numbers = #tpu.dot_dimension_numbers<[1], [0], [0], [1], [0, 0, 1, 1], [], []>} : vector<128x128xf32>, vector<128x128xf32>, vector<128x128xf32> -> vector<128x128xf32>
    %87 = arith.addf %81, %86 : vector<128x128xf32>
    %c2_78 = arith.constant 2 : index
    %c1_79 = arith.constant 1 : index
    %c0_80 = arith.constant 0 : index
    %88 = vector.load %arg6[%c2_78, %c1_79, %c0_80] : memref<10x18x128xf32, #tpu.memory_space<vmem>>, vector<8x16x128xf32>
    %c11 = arith.constant 11 : index
    %c0_81 = arith.constant 0 : index
    %c0_82 = arith.constant 0 : index
    %89 = vector.load %arg3[%c11, %c0_81, %c0_82] : memref<16x128x128xf32, #tpu.memory_space<vmem>>, vector<1x128x128xf32>
    %90 = vector.shape_cast %89 : vector<1x128x128xf32> to vector<128x128xf32>
    %91 = vector.shape_cast %88 : vector<8x16x128xf32> to vector<128x128xf32>
    %cst_83 = arith.constant dense<0.000000e+00> : vector<128x128xf32>
    %92 = tpu.matmul %91, %90, %cst_83 {dimension_numbers = #tpu.dot_dimension_numbers<[1], [0], [0], [1], [0, 0, 1, 1], [], []>} : vector<128x128xf32>, vector<128x128xf32>, vector<128x128xf32> -> vector<128x128xf32>
    %93 = arith.addf %87, %92 : vector<128x128xf32>
    %94 = vector.shape_cast %93 : vector<128x128xf32> to vector<8x16x128xf32>
    %cst_84 = arith.constant 0.000000e+00 : f32
    %95 = vector.broadcast %cst_84 : f32 to vector<128x128xf32>
    %96 = vector.broadcast %6 : vector<1x128xf32> to vector<128x128xf32>
    %97 = arith.addf %95, %96 : vector<128x128xf32>
    %c1_85 = arith.constant 1 : index
    %c1_86 = arith.constant 1 : index
    %c0_87 = arith.constant 0 : index
    %98 = vector.load %arg6[%c1_85, %c1_86, %c0_87] : memref<10x18x128xf32, #tpu.memory_space<vmem>>, vector<8x16x128xf32>
    %c12 = arith.constant 12 : index
    %c0_88 = arith.constant 0 : index
    %c0_89 = arith.constant 0 : index
    %99 = vector.load %arg3[%c12, %c0_88, %c0_89] : memref<16x128x128xf32, #tpu.memory_space<vmem>>, vector<1x128x128xf32>
    %100 = vector.shape_cast %99 : vector<1x128x128xf32> to vector<128x128xf32>
    %101 = vector.shape_cast %98 : vector<8x16x128xf32> to vector<128x128xf32>
    %cst_90 = arith.constant dense<0.000000e+00> : vector<128x128xf32>
    %102 = tpu.matmul %101, %100, %cst_90 {dimension_numbers = #tpu.dot_dimension_numbers<[1], [0], [0], [1], [0, 0, 1, 1], [], []>} : vector<128x128xf32>, vector<128x128xf32>, vector<128x128xf32> -> vector<128x128xf32>
    %103 = arith.addf %97, %102 : vector<128x128xf32>
    %c1_91 = arith.constant 1 : index
    %c2_92 = arith.constant 2 : index
    %c0_93 = arith.constant 0 : index
    %104 = vector.load %arg6[%c1_91, %c2_92, %c0_93] : memref<10x18x128xf32, #tpu.memory_space<vmem>>, vector<8x16x128xf32>
    %c13 = arith.constant 13 : index
    %c0_94 = arith.constant 0 : index
    %c0_95 = arith.constant 0 : index
    %105 = vector.load %arg3[%c13, %c0_94, %c0_95] : memref<16x128x128xf32, #tpu.memory_space<vmem>>, vector<1x128x128xf32>
    %106 = vector.shape_cast %105 : vector<1x128x128xf32> to vector<128x128xf32>
    %107 = vector.shape_cast %104 : vector<8x16x128xf32> to vector<128x128xf32>
    %cst_96 = arith.constant dense<0.000000e+00> : vector<128x128xf32>
    %108 = tpu.matmul %107, %106, %cst_96 {dimension_numbers = #tpu.dot_dimension_numbers<[1], [0], [0], [1], [0, 0, 1, 1], [], []>} : vector<128x128xf32>, vector<128x128xf32>, vector<128x128xf32> -> vector<128x128xf32>
    %109 = arith.addf %103, %108 : vector<128x128xf32>
    %c2_97 = arith.constant 2 : index
    %c1_98 = arith.constant 1 : index
    %c0_99 = arith.constant 0 : index
    %110 = vector.load %arg6[%c2_97, %c1_98, %c0_99] : memref<10x18x128xf32, #tpu.memory_space<vmem>>, vector<8x16x128xf32>
    %c14 = arith.constant 14 : index
    %c0_100 = arith.constant 0 : index
    %c0_101 = arith.constant 0 : index
    %111 = vector.load %arg3[%c14, %c0_100, %c0_101] : memref<16x128x128xf32, #tpu.memory_space<vmem>>, vector<1x128x128xf32>
    %112 = vector.shape_cast %111 : vector<1x128x128xf32> to vector<128x128xf32>
    %113 = vector.shape_cast %110 : vector<8x16x128xf32> to vector<128x128xf32>
    %cst_102 = arith.constant dense<0.000000e+00> : vector<128x128xf32>
    %114 = tpu.matmul %113, %112, %cst_102 {dimension_numbers = #tpu.dot_dimension_numbers<[1], [0], [0], [1], [0, 0, 1, 1], [], []>} : vector<128x128xf32>, vector<128x128xf32>, vector<128x128xf32> -> vector<128x128xf32>
    %115 = arith.addf %109, %114 : vector<128x128xf32>
    %c2_103 = arith.constant 2 : index
    %c2_104 = arith.constant 2 : index
    %c0_105 = arith.constant 0 : index
    %116 = vector.load %arg6[%c2_103, %c2_104, %c0_105] : memref<10x18x128xf32, #tpu.memory_space<vmem>>, vector<8x16x128xf32>
    %c15 = arith.constant 15 : index
    %c0_106 = arith.constant 0 : index
    %c0_107 = arith.constant 0 : index
    %117 = vector.load %arg3[%c15, %c0_106, %c0_107] : memref<16x128x128xf32, #tpu.memory_space<vmem>>, vector<1x128x128xf32>
    %118 = vector.shape_cast %117 : vector<1x128x128xf32> to vector<128x128xf32>
    %119 = vector.shape_cast %116 : vector<8x16x128xf32> to vector<128x128xf32>
    %cst_108 = arith.constant dense<0.000000e+00> : vector<128x128xf32>
    %120 = tpu.matmul %119, %118, %cst_108 {dimension_numbers = #tpu.dot_dimension_numbers<[1], [0], [0], [1], [0, 0, 1, 1], [], []>} : vector<128x128xf32>, vector<128x128xf32>, vector<128x128xf32> -> vector<128x128xf32>
    %121 = arith.addf %115, %120 : vector<128x128xf32>
    %122 = vector.shape_cast %121 : vector<128x128xf32> to vector<8x16x128xf32>
    %123 = tpu.concatenate %94, %122 in 2 : vector<8x16x128xf32>, vector<8x16x128xf32> -> vector<8x16x256xf32>
    %c0_109 = arith.constant 0 : index
    %c0_110 = arith.constant 0 : index
    %c1_111 = arith.constant 1 : index
    %c0_112 = arith.constant 0 : index
    %c0_113 = arith.constant 0 : index
    %124 = vector.load %arg5[%c0_109, %c0_110, %c1_111, %c0_112, %c0_113] : memref<1x8x2x16x256xf32, #tpu.memory_space<vmem>>, vector<1x8x1x16x256xf32>
    %125 = vector.shape_cast %124 : vector<1x8x1x16x256xf32> to vector<8x16x256xf32>
    %126 = vector.shape_cast %123 : vector<8x16x256xf32> to vector<1x8x1x16x256xf32>
    tpu.vector_store %arg5[%c0_109, %c0_110, %c1_111, %c0_112, %c0_113], %126 {strides = array<i32>} : memref<1x8x2x16x256xf32, #tpu.memory_space<vmem>>, vector<1x8x1x16x256xf32>,
    return
  }
  func.func @transform_1(%arg0: i32, %arg1: i32) -> (i32, i32, i32) {
    %c0_i32 = arith.constant 0 : i32
    %c0_i32_0 = arith.constant 0 : i32
    %c0_i32_1 = arith.constant 0 : i32
    %c0_i32_2 = arith.constant 0 : i32
    return %c0_i32, %c0_i32_0, %c0_i32_1 : i32, i32, i32
  }
  func.func @transform_2(%arg0: i32, %arg1: i32) -> (i32, i32) {
    %c0_i32 = arith.constant 0 : i32
    %c0_i32_0 = arith.constant 0 : i32
    %c0_i32_1 = arith.constant 0 : i32
    return %c0_i32, %c0_i32_0 : i32, i32
  }
  func.func @transform_3(%arg0: i32, %arg1: i32) -> (i32, i32, i32, i32, i32) {
    %c0_i32 = arith.constant 0 : i32
    %c0_i32_0 = arith.constant 0 : i32
    %c0_i32_1 = arith.constant 0 : i32
    %c0_i32_2 = arith.constant 0 : i32
    return %arg0, %arg1, %c0_i32, %c0_i32_0, %c0_i32_1 : i32, i32, i32, i32, i32
  }
}

</mosaic_0001>

<llo_original>
// kernel: _lambda_.1
$region0: #{_lambda_.1}
  #allocation0 [shape = 'u32[]', space=smem, size = 0x4, offset = 0x4, fixed_abs, tag = 'smem constant byte address 0x4 - core index']
  #allocation1 [shape = 'u32[144,128]{1,0:T(1,128)}', space=vmem, size = 0x12000, scoped, tag = 'internal scratch']
  #allocation2 [shape = 'f32[10,18,128]{2,1,0:T(8,128)}', space=vmem, size = 0x1e000, scoped, tag = 'scratch operand']
  #allocation3 [shape = 's32[1]{0}', space=sflag, size = 0x4, scoped, tag = 'scratch operand']
  #allocation4 [shape = 's32[]', space=sflag, size = 0x4, offset = 0, fixed_abs, tag = 'sflag constant byte address 0x0 - dummy sync flag']
  %s0 = inlined_call_operand.vmem [shape: f32[2,18,18,128], index: 0, kind: input, shape index: {}]
  %s1 = inlined_call_operand.vmem [shape: f32[16,128,128], index: 1, kind: input, shape index: {}]
  %s2 = inlined_call_operand.vmem [shape: f32[1,128], index: 2, kind: input, shape index: {}]
  %s3 = inlined_call_operand.vmem [shape: f32[2,16,2,16,256], index: 3, kind: output, shape index: {}]
  %s4 = sld [smem:[#allocation0]]
  $region78: #{_lambda_.1} parent=0
    _
  %s6 = ssub.s32 1, %s4
  %s7 = scalar_select 0, %s6, %s4
  loop: start=0, step=1, limit=6
  $region2: #{_lambda_.1} parent=0 // loop_pre_header
    _
  $region3: #{_lambda_.1} parent=0 // loop_header
    %s9 = sphi 0, %s13
    %p10 = scmp.ge.s32.totalorder %s9, 6
    %s16 = sphi 0, %s28
    %s17 = sphi 0, %s24
    %s18 = sphi 0, %s16
    %s19 = sphi 0, %s17
    %s20 = sphi 0, %s18
    %s21 = sphi 0, %s19
    %s29 = sphi 0, %s29
    %s31 = sphi 0, %s29
    %s32 = sphi 0, %s31
    %s46 = sphi 0, %s32
    %s50 = sphi 0, %s50
    %s52 = sphi 0, %s50
    %s53 = sphi 0, %s52
    %s67 = sphi 0, %s53
    %s75 = sphi 0, %s77
    %s78 = sphi 0, %s75
    %s79 = sphi 0, %s78
    %s95 = sphi 0, %s79
  $region4: #{_lambda_.1} parent=0 // loop_header_branch
    %12 = sbr.rel (%p10) target = $region8
  $region5: #{_lambda_.1} parent=0 // loop_body
    %s14 = ssub.s32 %s9, 1
    %s15 = ssub.s32 %s9, 2
    %s22 = sadd.s32 1, %s17
    %p23 = scmp.ge.s32.totalorder %s22, 2
    %s24 = scalar_select %p23, 0, %s22
    %s25 = sadd.s32 1, %s16
    %s26 = scalar_select %p23, %s25, %s16
    %p27 = scmp.ge.s32.totalorder %s26, 2
    %s28 = scalar_select %p27, 0, %s26
    %s30 = sadd.s32 %s29, 1
    %p33 = scmp.eq.s32.totalorder %s9, 3
    %p34 = scmp.ne.s32.totalorder %s29, %s31
    %p35 = scmp.eq.s32.totalorder %s9, 0
    %p36 = por %p34, %p35
    %p37 = scmp.ne.s32.totalorder %s29, %s31
    %p38 = scmp.eq.s32.totalorder %s14, 3
    %p39 = por %p37, %p38
    %p40 = scmp.ne.s32.totalorder %s31, %s32
    %p41 = scmp.eq.s32.totalorder %s14, 0
    %p42 = por %p40, %p41
    %p43 = scmp.ne.s32.totalorder %s31, %s32
    %p44 = scmp.eq.s32.totalorder %s15, 3
    %p45 = por %p43, %p44
    %p47 = scmp.ne.s32.totalorder %s32, %s46
    %p48 = scmp.eq.s32.totalorder %s15, 0
    %p49 = por %p47, %p48
    %s51 = sadd.s32 %s50, 1
    %p54 = scmp.eq.s32.totalorder %s9, 3
    %p55 = scmp.ne.s32.totalorder %s50, %s52
    %p56 = scmp.eq.s32.totalorder %s9, 0
    %p57 = por %p55, %p56
    %p58 = scmp.ne.s32.totalorder %s50, %s52
    %p59 = scmp.eq.s32.totalorder %s14, 3
    %p60 = por %p58, %p59
    %p61 = scmp.ne.s32.totalorder %s52, %s53
    %p62 = scmp.eq.s32.totalorder %s14, 0
    %p63 = por %p61, %p62
    %p64 = scmp.ne.s32.totalorder %s52, %s53
    %p65 = scmp.eq.s32.totalorder %s15, 3
    %p66 = por %p64, %p65
    %p68 = scmp.ne.s32.totalorder %s53, %s67
    %p69 = scmp.eq.s32.totalorder %s15, 0
    %p70 = por %p68, %p69
    %s71 = ssub.s32 %s16, %s28
    %s72 = ssub.s32 %s17, %s24
    %s73 = sor.u32 %s71, %s72
    %p74 = scmp.eq.s32.totalorder %s73, 0
    %s76 = sadd.s32 %s75, 1
    %s77 = scalar_select %p74, %s75, %s76
    %p80 = pneg %p74
    %p81 = scmp.eq.s32.totalorder %s9, 3
    %p82 = por %p80, %p81
    %p83 = scmp.ne.s32.totalorder %s75, %s78
    %p84 = scmp.eq.s32.totalorder %s9, 0
    %p85 = por %p83, %p84
    %p86 = scmp.ne.s32.totalorder %s75, %s78
    %p87 = scmp.eq.s32.totalorder %s14, 3
    %p88 = por %p86, %p87
    %p89 = scmp.ne.s32.totalorder %s78, %s79
    %p90 = scmp.eq.s32.totalorder %s14, 0
    %p91 = por %p89, %p90
    %p92 = scmp.ne.s32.totalorder %s78, %s79
    %p93 = scmp.eq.s32.totalorder %s15, 3
    %p94 = por %p92, %p93
    %p96 = scmp.ne.s32.totalorder %s79, %s95
    %p97 = scmp.eq.s32.totalorder %s15, 0
    %p98 = por %p96, %p97
    %p99 = scmp.le.s32.totalorder 1, %s9
    %p100 = scmp.lt.s32.totalorder %s9, 5
    %p101 = pnand %p99, %p100
    %p102 = pneg %p101
    // Predicated region
    $region9: #{_lambda_.1} parent=5 // pred_check
      _
    $region10: #{_lambda_.1} parent=5 // pred_check_branch
      %104 = sbr.rel (%p101) target = $region12
    $region11: #{_lambda_.1} parent=5 // pred_region
      %s105 = ssub.s32 %s9, 1
      // Predicated region
      $region13: #{_lambda_.1} parent=11 // pred_check
        %p106 = pneg %p42
      $region14: #{_lambda_.1} parent=11 // pred_check_branch
        %108 = sbr.rel (%p106) target = $region16
      $region15: #{_lambda_.1} parent=11 // pred_region
        _
      $region16: #{_lambda_.1} parent=11 // pred_fallthru
        _
      // Predicated region
      $region17: #{_lambda_.1} parent=11 // pred_check
        %p109 = pneg %p63
      $region18: #{_lambda_.1} parent=11 // pred_check_branch
        %111 = sbr.rel (%p109) target = $region20
      $region19: #{_lambda_.1} parent=11 // pred_region
        _
      $region20: #{_lambda_.1} parent=11 // pred_fallthru
        _
    $region12: #{_lambda_.1} parent=5 // pred_fallthru
      _
    %p112 = scmp.lt.s32.totalorder %s9, 4
    // Predicated region
    $region21: #{_lambda_.1} parent=5 // pred_check
      %p113 = pneg %p112
    $region22: #{_lambda_.1} parent=5 // pred_check_branch
      %115 = sbr.rel (%p113) target = $region24
    $region23: #{_lambda_.1} parent=5 // pred_region
      _
    $region24: #{_lambda_.1} parent=5 // pred_fallthru
      _
    %p116 = scmp.le.s32.totalorder 1, %s9
    %p117 = scmp.lt.s32.totalorder %s9, 5
    %p118 = pnand %p116, %p117
    %p119 = pneg %p118
    // Predicated region
    $region25: #{_lambda_.1} parent=5 // pred_check
      _
    $region26: #{_lambda_.1} parent=5 // pred_check_branch
      %121 = sbr.rel (%p118) target = $region28
    $region27: #{_lambda_.1} parent=5 // pred_region
      %s122 = ssub.s32 %s9, 1
      %p123 = pneg %p42
      %p124 = pneg %p39
      %p125 = pneg %p63
      %p126 = pneg %p60
      %p127 = pneg %p91
      %p128 = pneg %p88
      %s129 = smul.u32 8, %s19
      %p130 = scmp.lt.s32.totalorder %s18, 1
      %s131 = scalar_select %p130, %s18, 1
      %p132 = scmp.lt.s32.totalorder %s129, 15
      %s133 = scalar_select %p132, %s129, 15
      %s134 = smul.addr %s133, 8
      %s135 = smul.addr %s131, 128
      %s136 = sadd.s32 %s134, %s135
      %s137 = smul.addr %s136, 8
      %s138 = scalar_lea.vmem %s3, %s137
      %s139 = smul.u32 8, %s19
      %p140 = scmp.lt.s32.totalorder %s18, 1
      %s141 = scalar_select %p140, %s18, 1
      %p142 = scmp.lt.s32.totalorder %s139, 15
      %s143 = scalar_select %p142, %s139, 15
      %s144 = smul.addr %s143, 8
      %s145 = smul.addr %s141, 128
      %s146 = sadd.s32 %s144, %s145
      %s147 = smul.addr %s146, 8
      %s148 = scalar_lea.vmem %s3, %s147
      %s149 = smul.u32 8, %s19
      %s150 = smul.u32 %s19, 8
      %s151 = smul.u32 %s150, 24
      %s152 = smul.u32 %s18, 432
      %s153 = sadd.s32 %s151, %s152
      %s154 = scalar_lea.vmem %s0, %s153
      %p156 = scmp.lt.u32.totalorder 18, 8
      %p157 = pneg %p156
      // Predicated region
      $region29: #{_lambda_.1} parent=27 // pred_check
        _
      $region30: #{_lambda_.1} parent=27 // pred_check_branch
        %159 = sbr.rel (%p156) target = $region32
      $region31: #{_lambda_.1} parent=27 // pred_region
        %s192 = sand.u32 18, 7
        %p193 = scmp.eq.s32.totalorder %s192, 0
        %p194 = pneg %p193
        // Predicated region
        $region44: #{_lambda_.1} parent=31 // pred_check
          _
        $region45: #{_lambda_.1} parent=31 // pred_check_branch
          %196 = sbr.rel (%p193) target = $region47
        $region46: #{_lambda_.1} parent=31 // pred_region
          %s197 = sand.u32 18, 7
          %s198 = ssub.s32 18, %s197
          %s199 = scalar_lea.vmem %s154, %s198
          %s200 = ssub.s32 18, %s197
          %s201 = scalar_lea.vmem [#allocation2], %s200
          loop: start=0, step=1, limit=1
          $region48: #{_lambda_.1} parent=46 // loop_pre_header
            _
          $region49: #{_lambda_.1} parent=46 // loop_header
            %s203 = sphi 0, %s207
            %p204 = scmp.ge.s32.totalorder %s203, 1
            %s208 = sphi %s154, %s154
            %s209 = sphi [#allocation2], [#allocation2]
          $region50: #{_lambda_.1} parent=46 // loop_header_branch
            %206 = sbr.rel (%p204) target = $region54
          $region51: #{_lambda_.1} parent=46 // loop_body
            %v210 = vld [vmem:[%s208] sm:$0xff]
            %211 = vst [vmem:[%s209] sm:$0xff] %v210
            %v212 = vld [vmem:[%s208 + $0x8] sm:$0xff]
            %213 = vst [vmem:[%s209 + $0x8] sm:$0xff] %v212
            %v214 = vld [vmem:[%s208 + $0x18] sm:$0xff]
            %215 = vst [vmem:[%s209 + $0x18] sm:$0xff] %v214
            %v216 = vld [vmem:[%s208 + $0x20] sm:$0xff]
            %217 = vst [vmem:[%s209 + $0x20] sm:$0xff] %v216
            %v218 = vld [vmem:[%s208 + $0x30] sm:$0xff]
            %219 = vst [vmem:[%s209 + $0x30] sm:$0xff] %v218
            %v220 = vld [vmem:[%s208 + $0x38] sm:$0xff]
            %221 = vst [vmem:[%s209 + $0x38] sm:$0xff] %v220
            %v222 = vld [vmem:[%s208 + $0x48] sm:$0xff]
            %223 = vst [vmem:[%s209 + $0x48] sm:$0xff] %v222
            %v224 = vld [vmem:[%s208 + $0x50] sm:$0xff]
            %225 = vst [vmem:[%s209 + $0x50] sm:$0xff] %v224
            %v226 = vld [vmem:[%s208 + $0x60] sm:$0xff]
            %227 = vst [vmem:[%s209 + $0x60] sm:$0xff] %v226
            %v228 = vld [vmem:[%s208 + $0x68] sm:$0xff]
            %229 = vst [vmem:[%s209 + $0x68] sm:$0xff] %v228
            %v230 = vld [vmem:[%s208 + $0x78] sm:$0xff]
            %231 = vst [vmem:[%s209 + $0x78] sm:$0xff] %v230
            %v232 = vld [vmem:[%s208 + $0x80] sm:$0xff]
            %233 = vst [vmem:[%s209 + $0x80] sm:$0xff] %v232
            %v234 = vld [vmem:[%s208 + $0x90] sm:$0xff]
            %235 = vst [vmem:[%s209 + $0x90] sm:$0xff] %v234
            %v236 = vld [vmem:[%s208 + $0x98] sm:$0xff]
            %237 = vst [vmem:[%s209 + $0x98] sm:$0xff] %v236
            %v238 = vld [vmem:[%s208 + $0xa8] sm:$0xff]
            %239 = vst [vmem:[%s209 + $0xa8] sm:$0xff] %v238
            %v240 = vld [vmem:[%s208 + $0xb0] sm:$0xff]
            %241 = vst [vmem:[%s209 + $0xb0] sm:$0xff] %v240
            %v242 = vld [vmem:[%s208 + $0xc0] sm:$0xff]
            %243 = vst [vmem:[%s209 + $0xc0] sm:$0xff] %v242
            %v244 = vld [vmem:[%s208 + $0xc8] sm:$0xff]
            %245 = vst [vmem:[%s209 + $0xc8] sm:$0xff] %v244
            %v246 = vld [vmem:[%s208 + $0xd8] sm:$0xff]
            %247 = vst [vmem:[%s209 + $0xd8] sm:$0xff] %v246
            %v248 = vld [vmem:[%s208 + $0xe0] sm:$0xff]
            %249 = vst [vmem:[%s209 + $0xe0] sm:$0xff] %v248
          $region52: #{_lambda_.1} parent=46 // loop_footer
            %s207 = sadd.s32 1, %s203
          $region53: #{_lambda_.1} parent=46 // loop_footer_branch
            %202 = sbr.rel target = $region49
          $region54: #{_lambda_.1} parent=46 // loop_exit
            _
          %s250 = sshllo.u32 0, %s197
          loop: start=0, step=1, limit=1
          $region55: #{_lambda_.1} parent=46 // loop_pre_header
            _
          $region56: #{_lambda_.1} parent=46 // loop_header
            %s252 = sphi 0, %s256
            %p253 = scmp.ge.s32.totalorder %s252, 1
            %s257 = sphi %s199, %s199
            %s258 = sphi %s201, %s201
          $region57: #{_lambda_.1} parent=46 // loop_header_branch
            %255 = sbr.rel (%p253) target = $region61
          $region58: #{_lambda_.1} parent=46 // loop_body
            %v259 = vld [vmem:[%s257] sm:%s250]
            %260 = vst [vmem:[%s258] sm:%s250] %v259
            %v261 = vld [vmem:[%s257 + $0x18] sm:%s250]
            %262 = vst [vmem:[%s258 + $0x18] sm:%s250] %v261
            %v263 = vld [vmem:[%s257 + $0x30] sm:%s250]
            %264 = vst [vmem:[%s258 + $0x30] sm:%s250] %v263
            %v265 = vld [vmem:[%s257 + $0x48] sm:%s250]
            %266 = vst [vmem:[%s258 + $0x48] sm:%s250] %v265
            %v267 = vld [vmem:[%s257 + $0x60] sm:%s250]
            %268 = vst [vmem:[%s258 + $0x60] sm:%s250] %v267
            %v269 = vld [vmem:[%s257 + $0x78] sm:%s250]
            %270 = vst [vmem:[%s258 + $0x78] sm:%s250] %v269
            %v271 = vld [vmem:[%s257 + $0x90] sm:%s250]
            %272 = vst [vmem:[%s258 + $0x90] sm:%s250] %v271
            %v273 = vld [vmem:[%s257 + $0xa8] sm:%s250]
            %274 = vst [vmem:[%s258 + $0xa8] sm:%s250] %v273
            %v275 = vld [vmem:[%s257 + $0xc0] sm:%s250]
            %276 = vst [vmem:[%s258 + $0xc0] sm:%s250] %v275
            %v277 = vld [vmem:[%s257 + $0xd8] sm:%s250]
            %278 = vst [vmem:[%s258 + $0xd8] sm:%s250] %v277
          $region59: #{_lambda_.1} parent=46 // loop_footer
            %s256 = sadd.s32 1, %s252
          $region60: #{_lambda_.1} parent=46 // loop_footer_branch
            %251 = sbr.rel target = $region56
          $region61: #{_lambda_.1} parent=46 // loop_exit
            _
        $region47: #{_lambda_.1} parent=31 // pred_fallthru
          _
      $region32: #{_lambda_.1} parent=27 // pred_fallthru
        _
      // Predicated region
      $region33: #{_lambda_.1} parent=27 // pred_check
        %p160 = pneg %p156
      $region34: #{_lambda_.1} parent=27 // pred_check_branch
        %162 = sbr.rel (%p160) target = $region36
      $region35: #{_lambda_.1} parent=27 // pred_region
        %s163 = sshllo.u32 0, 18
        loop: start=0, step=1, limit=1
        $region37: #{_lambda_.1} parent=35 // loop_pre_header
          _
        $region38: #{_lambda_.1} parent=35 // loop_header
          %s165 = sphi 0, %s169
          %p166 = scmp.ge.s32.totalorder %s165, 1
          %s170 = sphi %s154, %s154
          %s171 = sphi [#allocation2], [#allocation2]
        $region39: #{_lambda_.1} parent=35 // loop_header_branch
          %168 = sbr.rel (%p166) target = $region43
        $region40: #{_lambda_.1} parent=35 // loop_body
          %v172 = vld [vmem:[%s170] sm:%s163]
          %173 = vst [vmem:[%s171] sm:%s163] %v172
          %v174 = vld [vmem:[%s170 + $0x18] sm:%s163]
          %175 = vst [vmem:[%s171 + $0x18] sm:%s163] %v174
          %v176 = vld [vmem:[%s170 + $0x30] sm:%s163]
          %177 = vst [vmem:[%s171 + $0x30] sm:%s163] %v176
          %v178 = vld [vmem:[%s170 + $0x48] sm:%s163]
          %179 = vst [vmem:[%s171 + $0x48] sm:%s163] %v178
          %v180 = vld [vmem:[%s170 + $0x60] sm:%s163]
          %181 = vst [vmem:[%s171 + $0x60] sm:%s163] %v180
          %v182 = vld [vmem:[%s170 + $0x78] sm:%s163]
          %183 = vst [vmem:[%s171 + $0x78] sm:%s163] %v182
          %v184 = vld [vmem:[%s170 + $0x90] sm:%s163]
          %185 = vst [vmem:[%s171 + $0x90] sm:%s163] %v184
          %v186 = vld [vmem:[%s170 + $0xa8] sm:%s163]
          %187 = vst [vmem:[%s171 + $0xa8] sm:%s163] %v186
          %v188 = vld [vmem:[%s170 + $0xc0] sm:%s163]
          %189 = vst [vmem:[%s171 + $0xc0] sm:%s163] %v188
          %v190 = vld [vmem:[%s170 + $0xd8] sm:%s163]
          %191 = vst [vmem:[%s171 + $0xd8] sm:%s163] %v190
        $region41: #{_lambda_.1} parent=35 // loop_footer
          %s169 = sadd.s32 1, %s165
        $region42: #{_lambda_.1} parent=35 // loop_footer_branch
          %164 = sbr.rel target = $region38
        $region43: #{_lambda_.1} parent=35 // loop_exit
          _
      $region36: #{_lambda_.1} parent=27 // pred_fallthru
        _
      // Predicated region
      $region62: #{_lambda_.1} parent=27 // pred_check
        _
      $region63: #{_lambda_.1} parent=27 // pred_check_branch
        %281 = sbr.rel (0) target = $region65
      $region64: #{_lambda_.1} parent=27 // pred_region
        %282 = vsyncadd [#allocation3], 2880
      $region65: #{_lambda_.1} parent=27 // pred_fallthru
        _
      %s283 = smul.u32 10, 18
      %s284 = smul.u32 %s283, 1
      %s285 = sshll.u32 %s284, 4
      %286 = dma.done [#allocation3], %s285
      %v287 = vld [vmem:[%s2] sm:$0x1]
      %v289 = vlaneseq
      %v290 = vshrl.u32 %v289, 7
      %v291 = vsub.s32 0, %v290
      %v292 = vrot.slane %v287, %v291
      %v294 = vadd.f32 %v292, 0.0
      %v295 = vld [vmem:[#allocation2] sm:$0xff]
      %v296 = vld [vmem:[#allocation2 + $0x8] sm:$0xff]
      %v297 = vld [vmem:[#allocation2 + $0x18] sm:$0xff]
      %v298 = vld [vmem:[#allocation2 + $0x20] sm:$0xff]
      %v299 = vld [vmem:[#allocation2 + $0x30] sm:$0xff]
      %v300 = vld [vmem:[#allocation2 + $0x38] sm:$0xff]
      %v301 = vld [vmem:[#allocation2 + $0x48] sm:$0xff]
      %v302 = vld [vmem:[#allocation2 + $0x50] sm:$0xff]
      %v303 = vld [vmem:[#allocation2 + $0x60] sm:$0xff]
      %v304 = vld [vmem:[#allocation2 + $0x68] sm:$0xff]
      %v305 = vld [vmem:[#allocation2 + $0x78] sm:$0xff]
      %v306 = vld [vmem:[#allocation2 + $0x80] sm:$0xff]
      %v307 = vld [vmem:[#allocation2 + $0x90] sm:$0xff]
      %v308 = vld [vmem:[#allocation2 + $0x98] sm:$0xff]
      %v309 = vld [vmem:[#allocation2 + $0xa8] sm:$0xff]
      %v310 = vld [vmem:[#allocation2 + $0xb0] sm:$0xff]
      %v311 = vld [vmem:[%s1] sm:$0xff]
      %v312 = vld [vmem:[%s1 + $0x8] sm:$0xff]
      %v313 = vld [vmem:[%s1 + $0x10] sm:$0xff]
      %v314 = vld [vmem:[%s1 + $0x18] sm:$0xff]
      %v315 = vld [vmem:[%s1 + $0x20] sm:$0xff]
      %v316 = vld [vmem:[%s1 + $0x28] sm:$0xff]
      %v317 = vld [vmem:[%s1 + $0x30] sm:$0xff]
      %v318 = vld [vmem:[%s1 + $0x38] sm:$0xff]
      %v319 = vld [vmem:[%s1 + $0x40] sm:$0xff]
      %v320 = vld [vmem:[%s1 + $0x48] sm:$0xff]
      %v321 = vld [vmem:[%s1 + $0x50] sm:$0xff]
      %v322 = vld [vmem:[%s1 + $0x58] sm:$0xff]
      %v323 = vld [vmem:[%s1 + $0x60] sm:$0xff]
      %v324 = vld [vmem:[%s1 + $0x68] sm:$0xff]
      %v325 = vld [vmem:[%s1 + $0x70] sm:$0xff]
      %v326 = vld [vmem:[%s1 + $0x78] sm:$0xff]
      %327 = vmatprep.subr.mxu0 0.0
      %328 = vmatpush1.msra.mxu0 %v311
      %329 = vmatprep.subr.mxu0 0.0
      %330 = vmatpush1.msra.mxu0 %v312
      %331 = vmatprep.subr.mxu0 0.0
      %332 = vmatpush1.msra.mxu0 %v313
      %333 = vmatprep.subr.mxu0 0.0
      %334 = vmatpush1.msra.mxu0 %v314
      %335 = vmatprep.subr.mxu0 0.0
      %336 = vmatpush1.msra.mxu0 %v315
      %337 = vmatprep.subr.mxu0 0.0
      %338 = vmatpush1.msra.mxu0 %v316
      %339 = vmatprep.subr.mxu0 0.0
      %340 = vmatpush1.msra.mxu0 %v317
      %341 = vmatprep.subr.mxu0 0.0
      %342 = vmatpush1.msra.mxu0 %v318
      %343 = vmatprep.subr.mxu0 0.0
      %344 = vmatpush1.msra.mxu0 %v319
      %345 = vmatprep.subr.mxu0 0.0
      %346 = vmatpush1.msra.mxu0 %v320
      %347 = vmatprep.subr.mxu0 0.0
      %348 = vmatpush1.msra.mxu0 %v321
      %349 = vmatprep.subr.mxu0 0.0
      %350 = vmatpush1.msra.mxu0 %v322
      %351 = vmatprep.subr.mxu0 0.0
      %352 = vmatpush1.msra.mxu0 %v323
      %353 = vmatprep.subr.mxu0 0.0
      %354 = vmatpush1.msra.mxu0 %v324
      %355 = vmatprep.subr.mxu0 0.0
      %356 = vmatpush1.msra.mxu0 %v325
      %357 = vmatprep.subr.mxu0 0.0
      %358 = vmatpush1.msra.mxu0 %v326
      %359 = vmatprep.subr.mxu0 0.0
      %360 = vmatpush1.msra.mxu0 0.0
      %361 = vmatprep.subr.mxu0 0.0
      %362 = vmatpush1.msra.mxu0 0.0
      %363 = vmatprep.subr.mxu0 0.0
      %364 = vmatpush1.msra.mxu0 0.0
      %365 = vmatprep.subr.mxu0 0.0
      %366 = vmatpush1.msra.mxu0 0.0
      %367 = vmatprep.subr.mxu0 0.0
      %368 = vmatpush1.msra.mxu0 0.0
      %369 = vmatprep.subr.mxu0 0.0
      %370 = vmatpush1.msra.mxu0 0.0
      %371 = vmatprep.subr.mxu0 0.0
      %372 = vmatpush1.msra.mxu0 0.0
      %373 = vmatprep.subr.mxu0 0.0
      %374 = vmatpush1.msra.mxu0 0.0
      %375 = vmatprep.subr.mxu0 0.0
      %376 = vmatpush1.msra.mxu0 0.0
      %377 = vmatprep.subr.mxu0 0.0
      %378 = vmatpush1.msra.mxu0 0.0
      %379 = vmatprep.subr.mxu0 0.0
      %380 = vmatpush1.msra.mxu0 0.0
      %381 = vmatprep.subr.mxu0 0.0
      %382 = vmatpush1.msra.mxu0 0.0
      %383 = vmatprep.subr.mxu0 0.0
      %384 = vmatpush1.msra.mxu0 0.0
      %385 = vmatprep.subr.mxu0 0.0
      %386 = vmatpush1.msra.mxu0 0.0
      %387 = vmatprep.subr.mxu0 0.0
      %388 = vmatpush1.msra.mxu0 0.0
      %389 = vmatprep.subr.mxu0 0.0
      %390 = vmatpush1.msra.mxu0 0.0
      %391 = vmatprep.mubr.f32.mxu0 0.0
      %392 = vmatmul.mubr.f32.gmra.mrb[0].mxu0 %v295
      %v393 = vpop.f32.mrb[0].mxu0
      %v394 = vadd.f32 0.0, %v393
      %v395 = vpop.f32.mrb[0].mxu0
      %396 = vmatprep.mubr.f32.mxu0 0.0
      %397 = vmatmul.mubr.f32.gmra.mrb[0].mxu0 %v296
      %v398 = vpop.f32.mrb[0].mxu0
      %v399 = vadd.f32 0.0, %v398
      %v400 = vpop.f32.mrb[0].mxu0
      %401 = vmatprep.mubr.f32.mxu0 0.0
      %402 = vmatmul.mubr.f32.gmra.mrb[0].mxu0 %v297
      %v403 = vpop.f32.mrb[0].mxu0
      %v404 = vadd.f32 0.0, %v403
      %v405 = vpop.f32.mrb[0].mxu0
      %406 = vmatprep.mubr.f32.mxu0 0.0
      %407 = vmatmul.mubr.f32.gmra.mrb[0].mxu0 %v298
      %v408 = vpop.f32.mrb[0].mxu0
      %v409 = vadd.f32 0.0, %v408
      %v410 = vpop.f32.mrb[0].mxu0
      %411 = vmatprep.mubr.f32.mxu0 0.0
      %412 = vmatmul.mubr.f32.gmra.mrb[0].mxu0 %v299
      %v413 = vpop.f32.mrb[0].mxu0
      %v414 = vadd.f32 0.0, %v413
      %v415 = vpop.f32.mrb[0].mxu0
      %416 = vmatprep.mubr.f32.mxu0 0.0
      %417 = vmatmul.mubr.f32.gmra.mrb[0].mxu0 %v300
      %v418 = vpop.f32.mrb[0].mxu0
      %v419 = vadd.f32 0.0, %v418
      %v420 = vpop.f32.mrb[0].mxu0
      %421 = vmatprep.mubr.f32.mxu0 0.0
      %422 = vmatmul.mubr.f32.gmra.mrb[0].mxu0 %v301
      %v423 = vpop.f32.mrb[0].mxu0
      %v424 = vadd.f32 0.0, %v423
      %v425 = vpop.f32.mrb[0].mxu0
      %426 = vmatprep.mubr.f32.mxu0 0.0
      %427 = vmatmul.mubr.f32.gmra.mrb[0].mxu0 %v302
      %v428 = vpop.f32.mrb[0].mxu0
      %v429 = vadd.f32 0.0, %v428
      %v430 = vpop.f32.mrb[0].mxu0
      %431 = vmatprep.mubr.f32.mxu0 0.0
      %432 = vmatmul.mubr.f32.gmra.mrb[0].mxu0 %v303
      %v433 = vpop.f32.mrb[0].mxu0
      %v434 = vadd.f32 0.0, %v433
      %v435 = vpop.f32.mrb[0].mxu0
      %436 = vmatprep.mubr.f32.mxu0 0.0
      %437 = vmatmul.mubr.f32.gmra.mrb[0].mxu0 %v304
      %v438 = vpop.f32.mrb[0].mxu0
      %v439 = vadd.f32 0.0, %v438
      %v440 = vpop.f32.mrb[0].mxu0
      %441 = vmatprep.mubr.f32.mxu0 0.0
      %442 = vmatmul.mubr.f32.gmra.mrb[0].mxu0 %v305
      %v443 = vpop.f32.mrb[0].mxu0
      %v444 = vadd.f32 0.0, %v443
      %v445 = vpop.f32.mrb[0].mxu0
      %446 = vmatprep.mubr.f32.mxu0 0.0
      %447 = vmatmul.mubr.f32.gmra.mrb[0].mxu0 %v306
      %v448 = vpop.f32.mrb[0].mxu0
      %v449 = vadd.f32 0.0, %v448
      %v450 = vpop.f32.mrb[0].mxu0
      %451 = vmatprep.mubr.f32.mxu0 0.0
      %452 = vmatmul.mubr.f32.gmra.mrb[0].mxu0 %v307
      %v453 = vpop.f32.mrb[0].mxu0
      %v454 = vadd.f32 0.0, %v453
      %v455 = vpop.f32.mrb[0].mxu0
      %456 = vmatprep.mubr.f32.mxu0 0.0
      %457 = vmatmul.mubr.f32.gmra.mrb[0].mxu0 %v308
      %v458 = vpop.f32.mrb[0].mxu0
      %v459 = vadd.f32 0.0, %v458
      %v460 = vpop.f32.mrb[0].mxu0
      %461 = vmatprep.mubr.f32.mxu0 0.0
      %462 = vmatmul.mubr.f32.gmra.mrb[0].mxu0 %v309
      %v463 = vpop.f32.mrb[0].mxu0
      %v464 = vadd.f32 0.0, %v463
      %v465 = vpop.f32.mrb[0].mxu0
      %466 = vmatprep.mubr.f32.mxu0 0.0
      %467 = vmatmul.mubr.f32.gmra.mrb[0].mxu0 %v310
      %v468 = vpop.f32.mrb[0].mxu0
      %v469 = vadd.f32 0.0, %v468
      %v470 = vpop.f32.mrb[0].mxu0
      %471 = vdwg.mxu0
      %v472 = vadd.f32 %v294, %v394
      %v473 = vadd.f32 %v294, %v399
      %v474 = vadd.f32 %v294, %v404
      %v475 = vadd.f32 %v294, %v409
      %v476 = vadd.f32 %v294, %v414
      %v477 = vadd.f32 %v294, %v419
      %v478 = vadd.f32 %v294, %v424
      %v479 = vadd.f32 %v294, %v429
      %v480 = vadd.f32 %v294, %v434
      %v481 = vadd.f32 %v294, %v439
      %v482 = vadd.f32 %v294, %v444
      %v483 = vadd.f32 %v294, %v449
      %v484 = vadd.f32 %v294, %v454
      %v485 = vadd.f32 %v294, %v459
      %v486 = vadd.f32 %v294, %v464
      %v487 = vadd.f32 %v294, %v469
      %v488 = vld [vmem:[#allocation2 + $0x1] sm:$0xff]
      %v489 = vld [vmem:[#allocation2 + $0x9] sm:$0xff]
      %v490 = vld [vmem:[#allocation2 + $0x19] sm:$0xff]
      %v491 = vld [vmem:[#allocation2 + $0x21] sm:$0xff]
      %v492 = vld [vmem:[#allocation2 + $0x31] sm:$0xff]
      %v493 = vld [vmem:[#allocation2 + $0x39] sm:$0xff]
      %v494 = vld [vmem:[#allocation2 + $0x49] sm:$0xff]
      %v495 = vld [vmem:[#allocation2 + $0x51] sm:$0xff]
      %v496 = vld [vmem:[#allocation2 + $0x61] sm:$0xff]
      %v497 = vld [vmem:[#allocation2 + $0x69] sm:$0xff]
      %v498 = vld [vmem:[#allocation2 + $0x79] sm:$0xff]
      %v499 = vld [vmem:[#allocation2 + $0x81] sm:$0xff]
      %v500 = vld [vmem:[#allocation2 + $0x91] sm:$0xff]
      %v501 = vld [vmem:[#allocation2 + $0x99] sm:$0xff]
      %v502 = vld [vmem:[#allocation2 + $0xa9] sm:$0xff]
      %v503 = vld [vmem:[#allocation2 + $0xb1] sm:$0xff]
      %s504 = scalar_lea.vmem %s1, 128
      %v505 = vld [vmem:[%s504] sm:$0xff]
      %v506 = vld [vmem:[%s504 + $0x8] sm:$0xff]
      %v507 = vld [vmem:[%s504 + $0x10] sm:$0xff]
      %v508 = vld [vmem:[%s504 + $0x18] sm:$0xff]
      %v509 = vld [vmem:[%s504 + $0x20] sm:$0xff]
      %v510 = vld [vmem:[%s504 + $0x28] sm:$0xff]
      %v511 = vld [vmem:[%s504 + $0x30] sm:$0xff]
      %v512 = vld [vmem:[%s504 + $0x38] sm:$0xff]
      %v513 = vld [vmem:[%s504 + $0x40] sm:$0xff]
      %v514 = vld [vmem:[%s504 + $0x48] sm:$0xff]
      %v515 = vld [vmem:[%s504 + $0x50] sm:$0xff]
      %v516 = vld [vmem:[%s504 + $0x58] sm:$0xff]
      %v517 = vld [vmem:[%s504 + $0x60] sm:$0xff]
      %v518 = vld [vmem:[%s504 + $0x68] sm:$0xff]
      %v519 = vld [vmem:[%s504 + $0x70] sm:$0xff]
      %v520 = vld [vmem:[%s504 + $0x78] sm:$0xff]
      %521 = vmatprep.subr.mxu0 0.0
      %522 = vmatpush1.msra.mxu0 %v505
      %523 = vmatprep.subr.mxu0 0.0
      %524 = vmatpush1.msra.mxu0 %v506
      %525 = vmatprep.subr.mxu0 0.0
      %526 = vmatpush1.msra.mxu0 %v507
      %527 = vmatprep.subr.mxu0 0.0
      %528 = vmatpush1.msra.mxu0 %v508
      %529 = vmatprep.subr.mxu0 0.0
      %530 = vmatpush1.msra.mxu0 %v509
      %531 = vmatprep.subr.mxu0 0.0
      %532 = vmatpush1.msra.mxu0 %v510
      %533 = vmatprep.subr.mxu0 0.0
      %534 = vmatpush1.msra.mxu0 %v511
      %535 = vmatprep.subr.mxu0 0.0
      %536 = vmatpush1.msra.mxu0 %v512
      %537 = vmatprep.subr.mxu0 0.0
      %538 = vmatpush1.msra.mxu0 %v513
      %539 = vmatprep.subr.mxu0 0.0
      %540 = vmatpush1.msra.mxu0 %v514
      %541 = vmatprep.subr.mxu0 0.0
      %542 = vmatpush1.msra.mxu0 %v515
      %543 = vmatprep.subr.mxu0 0.0
      %544 = vmatpush1.msra.mxu0 %v516
      %545 = vmatprep.subr.mxu0 0.0
      %546 = vmatpush1.msra.mxu0 %v517
      %547 = vmatprep.subr.mxu0 0.0
      %548 = vmatpush1.msra.mxu0 %v518
      %549 = vmatprep.subr.mxu0 0.0
      %550 = vmatpush1.msra.mxu0 %v519
      %551 = vmatprep.subr.mxu0 0.0
      %552 = vmatpush1.msra.mxu0 %v520
      %553 = vmatprep.subr.mxu0 0.0
      %554 = vmatpush1.msra.mxu0 0.0
      %555 = vmatprep.subr.mxu0 0.0
      %556 = vmatpush1.msra.mxu0 0.0
      %557 = vmatprep.subr.mxu0 0.0
      %558 = vmatpush1.msra.mxu0 0.0
      %559 = vmatprep.subr.mxu0 0.0
      %560 = vmatpush1.msra.mxu0 0.0
      %561 = vmatprep.subr.mxu0 0.0
      %562 = vmatpush1.msra.mxu0 0.0
      %563 = vmatprep.subr.mxu0 0.0
      %564 = vmatpush1.msra.mxu0 0.0
      %565 = vmatprep.subr.mxu0 0.0
      %566 = vmatpush1.msra.mxu0 0.0
      %567 = vmatprep.subr.mxu0 0.0
      %568 = vmatpush1.msra.mxu0 0.0
      %569 = vmatprep.subr.mxu0 0.0
      %570 = vmatpush1.msra.mxu0 0.0
      %571 = vmatprep.subr.mxu0 0.0
      %572 = vmatpush1.msra.mxu0 0.0
      %573 = vmatprep.subr.mxu0 0.0
      %574 = vmatpush1.msra.mxu0 0.0
      %575 = vmatprep.subr.mxu0 0.0
      %576 = vmatpush1.msra.mxu0 0.0
      %577 = vmatprep.subr.mxu0 0.0
      %578 = vmatpush1.msra.mxu0 0.0
      %579 = vmatprep.subr.mxu0 0.0
      %580 = vmatpush1.msra.mxu0 0.0
      %581 = vmatprep.subr.mxu0 0.0
      %582 = vmatpush1.msra.mxu0 0.0
      %583 = vmatprep.subr.mxu0 0.0
      %584 = vmatpush1.msra.mxu0 0.0
      %585 = vmatprep.mubr.f32.mxu0 0.0
      %586 = vmatmul.mubr.f32.gmra.mrb[0].mxu0 %v488
      %v587 = vpop.f32.mrb[0].mxu0
      %v588 = vadd.f32 0.0, %v587
      %v589 = vpop.f32.mrb[0].mxu0
      %590 = vmatprep.mubr.f32.mxu0 0.0
      %591 = vmatmul.mubr.f32.gmra.mrb[0].mxu0 %v489
      %v592 = vpop.f32.mrb[0].mxu0
      %v593 = vadd.f32 0.0, %v592
      %v594 = vpop.f32.mrb[0].mxu0
      %595 = vmatprep.mubr.f32.mxu0 0.0
      %596 = vmatmul.mubr.f32.gmra.mrb[0].mxu0 %v490
      %v597 = vpop.f32.mrb[0].mxu0
      %v598 = vadd.f32 0.0, %v597
      %v599 = vpop.f32.mrb[0].mxu0
      %600 = vmatprep.mubr.f32.mxu0 0.0
      %601 = vmatmul.mubr.f32.gmra.mrb[0].mxu0 %v491
      %v602 = vpop.f32.mrb[0].mxu0
      %v603 = vadd.f32 0.0, %v602
      %v604 = vpop.f32.mrb[0].mxu0
      %605 = vmatprep.mubr.f32.mxu0 0.0
      %606 = vmatmul.mubr.f32.gmra.mrb[0].mxu0 %v492
      %v607 = vpop.f32.mrb[0].mxu0
      %v608 = vadd.f32 0.0, %v607
      %v609 = vpop.f32.mrb[0].mxu0
      %610 = vmatprep.mubr.f32.mxu0 0.0
      %611 = vmatmul.mubr.f32.gmra.mrb[0].mxu0 %v493
      %v612 = vpop.f32.mrb[0].mxu0
      %v613 = vadd.f32 0.0, %v612
      %v614 = vpop.f32.mrb[0].mxu0
      %615 = vmatprep.mubr.f32.mxu0 0.0
      %616 = vmatmul.mubr.f32.gmra.mrb[0].mxu0 %v494
      %v617 = vpop.f32.mrb[0].mxu0
      %v618 = vadd.f32 0.0, %v617
      %v619 = vpop.f32.mrb[0].mxu0
      %620 = vmatprep.mubr.f32.mxu0 0.0
      %621 = vmatmul.mubr.f32.gmra.mrb[0].mxu0 %v495
      %v622 = vpop.f32.mrb[0].mxu0
      %v623 = vadd.f32 0.0, %v622
      %v624 = vpop.f32.mrb[0].mxu0
      %625 = vmatprep.mubr.f32.mxu0 0.0
      %626 = vmatmul.mubr.f32.gmra.mrb[0].mxu0 %v496
      %v627 = vpop.f32.mrb[0].mxu0
      %v628 = vadd.f32 0.0, %v627
      %v629 = vpop.f32.mrb[0].mxu0
      %630 = vmatprep.mubr.f32.mxu0 0.0
      %631 = vmatmul.mubr.f32.gmra.mrb[0].mxu0 %v497
      %v632 = vpop.f32.mrb[0].mxu0
      %v633 = vadd.f32 0.0, %v632
      %v634 = vpop.f32.mrb[0].mxu0
      %635 = vmatprep.mubr.f32.mxu0 0.0
      %636 = vmatmul.mubr.f32.gmra.mrb[0].mxu0 %v498
      %v637 = vpop.f32.mrb[0].mxu0
      %v638 = vadd.f32 0.0, %v637
      %v639 = vpop.f32.mrb[0].mxu0
      %640 = vmatprep.mubr.f32.mxu0 0.0
      %641 = vmatmul.mubr.f32.gmra.mrb[0].mxu0 %v499
      %v642 = vpop.f32.mrb[0].mxu0
      %v643 = vadd.f32 0.0, %v642
      %v644 = vpop.f32.mrb[0].mxu0
      %645 = vmatprep.mubr.f32.mxu0 0.0
      %646 = vmatmul.mubr.f32.gmra.mrb[0].mxu0 %v500
      %v647 = vpop.f32.mrb[0].mxu0
      %v648 = vadd.f32 0.0, %v647
      %v649 = vpop.f32.mrb[0].mxu0
      %650 = vmatprep.mubr.f32.mxu0 0.0
      %651 = vmatmul.mubr.f32.gmra.mrb[0].mxu0 %v501
      %v652 = vpop.f32.mrb[0].mxu0
      %v653 = vadd.f32 0.0, %v652
      %v654 = vpop.f32.mrb[0].mxu0
      %655 = vmatprep.mubr.f32.mxu0 0.0
      %656 = vmatmul.mubr.f32.gmra.mrb[0].mxu0 %v502
      %v657 = vpop.f32.mrb[0].mxu0
      %v658 = vadd.f32 0.0, %v657
      %v659 = vpop.f32.mrb[0].mxu0
      %660 = vmatprep.mubr.f32.mxu0 0.0
      %661 = vmatmul.mubr.f32.gmra.mrb[0].mxu0 %v503
      %v662 = vpop.f32.mrb[0].mxu0
      %v663 = vadd.f32 0.0, %v662
      %v664 = vpop.f32.mrb[0].mxu0
      %665 = vdwg.mxu0
      %v666 = vadd.f32 %v472, %v588
      %v667 = vadd.f32 %v473, %v593
      %v668 = vadd.f32 %v474, %v598
      %v669 = vadd.f32 %v475, %v603
      %v670 = vadd.f32 %v476, %v608
      %v671 = vadd.f32 %v477, %v613
      %v672 = vadd.f32 %v478, %v618
      %v673 = vadd.f32 %v479, %v623
      %v674 = vadd.f32 %v480, %v628
      %v675 = vadd.f32 %v481, %v633
      %v676 = vadd.f32 %v482, %v638
      %v677 = vadd.f32 %v483, %v643
      %v678 = vadd.f32 %v484, %v648
      %v679 = vadd.f32 %v485, %v653
      %v680 = vadd.f32 %v486, %v658
      %v681 = vadd.f32 %v487, %v663
      %s682 = scalar_lea.vmem [#allocation2], 24
      %v683 = vld [vmem:[%s682] sm:$0xff]
      %v684 = vld [vmem:[%s682 + $0x8] sm:$0xff]
      %v685 = vld [vmem:[%s682 + $0x18] sm:$0xff]
      %v686 = vld [vmem:[%s682 + $0x20] sm:$0xff]
      %v687 = vld [vmem:[%s682 + $0x30] sm:$0xff]
      %v688 = vld [vmem:[%s682 + $0x38] sm:$0xff]
      %v689 = vld [vmem:[%s682 + $0x48] sm:$0xff]
      %v690 = vld [vmem:[%s682 + $0x50] sm:$0xff]
      %v691 = vld [vmem:[%s682 + $0x60] sm:$0xff]
      %v692 = vld [vmem:[%s682 + $0x68] sm:$0xff]
      %v693 = vld [vmem:[%s682 + $0x78] sm:$0xff]
      %v694 = vld [vmem:[%s682 + $0x80] sm:$0xff]
      %v695 = vld [vmem:[%s682 + $0x90] sm:$0xff]
      %v696 = vld [vmem:[%s682 + $0x98] sm:$0xff]
      %v697 = vld [vmem:[%s682 + $0xa8] sm:$0xff]
      %v698 = vld [vmem:[%s682 + $0xb0] sm:$0xff]
      %s699 = scalar_lea.vmem %s1, 256
      %v700 = vld [vmem:[%s699] sm:$0xff]
      %v701 = vld [vmem:[%s699 + $0x8] sm:$0xff]
      %v702 = vld [vmem:[%s699 + $0x10] sm:$0xff]
      %v703 = vld [vmem:[%s699 + $0x18] sm:$0xff]
      %v704 = vld [vmem:[%s699 + $0x20] sm:$0xff]
      %v705 = vld [vmem:[%s699 + $0x28] sm:$0xff]
      %v706 = vld [vmem:[%s699 + $0x30] sm:$0xff]
      %v707 = vld [vmem:[%s699 + $0x38] sm:$0xff]
      %v708 = vld [vmem:[%s699 + $0x40] sm:$0xff]
      %v709 = vld [vmem:[%s699 + $0x48] sm:$0xff]
      %v710 = vld [vmem:[%s699 + $0x50] sm:$0xff]
      %v711 = vld [vmem:[%s699 + $0x58] sm:$0xff]
      %v712 = vld [vmem:[%s699 + $0x60] sm:$0xff]
      %v713 = vld [vmem:[%s699 + $0x68] sm:$0xff]
      %v714 = vld [vmem:[%s699 + $0x70] sm:$0xff]
      %v715 = vld [vmem:[%s699 + $0x78] sm:$0xff]
      %716 = vmatprep.subr.mxu0 0.0
      %717 = vmatpush1.msra.mxu0 %v700
      %718 = vmatprep.subr.mxu0 0.0
      %719 = vmatpush1.msra.mxu0 %v701
      %720 = vmatprep.subr.mxu0 0.0
      %721 = vmatpush1.msra.mxu0 %v702
      %722 = vmatprep.subr.mxu0 0.0
      %723 = vmatpush1.msra.mxu0 %v703
      %724 = vmatprep.subr.mxu0 0.0
      %725 = vmatpush1.msra.mxu0 %v704
      %726 = vmatprep.subr.mxu0 0.0
      %727 = vmatpush1.msra.mxu0 %v705
      %728 = vmatprep.subr.mxu0 0.0
      %729 = vmatpush1.msra.mxu0 %v706
      %730 = vmatprep.subr.mxu0 0.0
      %731 = vmatpush1.msra.mxu0 %v707
      %732 = vmatprep.subr.mxu0 0.0
      %733 = vmatpush1.msra.mxu0 %v708
      %734 = vmatprep.subr.mxu0 0.0
      %735 = vmatpush1.msra.mxu0 %v709
      %736 = vmatprep.subr.mxu0 0.0
      %737 = vmatpush1.msra.mxu0 %v710
      %738 = vmatprep.subr.mxu0 0.0
      %739 = vmatpush1.msra.mxu0 %v711
      %740 = vmatprep.subr.mxu0 0.0
      %741 = vmatpush1.msra.mxu0 %v712
      %742 = vmatprep.subr.mxu0 0.0
      %743 = vmatpush1.msra.mxu0 %v713
      %744 = vmatprep.subr.mxu0 0.0
      %745 = vmatpush1.msra.mxu0 %v714
      %746 = vmatprep.subr.mxu0 0.0
      %747 = vmatpush1.msra.mxu0 %v715
      %748 = vmatprep.subr.mxu0 0.0
      %749 = vmatpush1.msra.mxu0 0.0
      %750 = vmatprep.subr.mxu0 0.0
      %751 = vmatpush1.msra.mxu0 0.0
      %752 = vmatprep.subr.mxu0 0.0
      %753 = vmatpush1.msra.mxu0 0.0
      %754 = vmatprep.subr.mxu0 0.0
      %755 = vmatpush1.msra.mxu0 0.0
      %756 = vmatprep.subr.mxu0 0.0
      %757 = vmatpush1.msra.mxu0 0.0
      %758 = vmatprep.subr.mxu0 0.0
      %759 = vmatpush1.msra.mxu0 0.0
      %760 = vmatprep.subr.mxu0 0.0
      %761 = vmatpush1.msra.mxu0 0.0
      %762 = vmatprep.subr.mxu0 0.0
      %763 = vmatpush1.msra.mxu0 0.0
      %764 = vmatprep.subr.mxu0 0.0
      %765 = vmatpush1.msra.mxu0 0.0
      %766 = vmatprep.subr.mxu0 0.0
      %767 = vmatpush1.msra.mxu0 0.0
      %768 = vmatprep.subr.mxu0 0.0
      %769 = vmatpush1.msra.mxu0 0.0
      %770 = vmatprep.subr.mxu0 0.0
      %771 = vmatpush1.msra.mxu0 0.0
      %772 = vmatprep.subr.mxu0 0.0
      %773 = vmatpush1.msra.mxu0 0.0
      %774 = vmatprep.subr.mxu0 0.0
      %775 = vmatpush1.msra.mxu0 0.0
      %776 = vmatprep.subr.mxu0 0.0
      %777 = vmatpush1.msra.mxu0 0.0
      %778 = vmatprep.subr.mxu0 0.0
      %779 = vmatpush1.msra.mxu0 0.0
      %780 = vmatprep.mubr.f32.mxu0 0.0
      %781 = vmatmul.mubr.f32.gmra.mrb[0].mxu0 %v683
      %v782 = vpop.f32.mrb[0].mxu0
      %v783 = vadd.f32 0.0, %v782
      %v784 = vpop.f32.mrb[0].mxu0
      %785 = vmatprep.mubr.f32.mxu0 0.0
      %786 = vmatmul.mubr.f32.gmra.mrb[0].mxu0 %v684
      %v787 = vpop.f32.mrb[0].mxu0
      %v788 = vadd.f32 0.0, %v787
      %v789 = vpop.f32.mrb[0].mxu0
      %790 = vmatprep.mubr.f32.mxu0 0.0
      %791 = vmatmul.mubr.f32.gmra.mrb[0].mxu0 %v685
      %v792 = vpop.f32.mrb[0].mxu0
      %v793 = vadd.f32 0.0, %v792
      %v794 = vpop.f32.mrb[0].mxu0
      %795 = vmatprep.mubr.f32.mxu0 0.0
      %796 = vmatmul.mubr.f32.gmra.mrb[0].mxu0 %v686
      %v797 = vpop.f32.mrb[0].mxu0
      %v798 = vadd.f32 0.0, %v797
      %v799 = vpop.f32.mrb[0].mxu0
      %800 = vmatprep.mubr.f32.mxu0 0.0
      %801 = vmatmul.mubr.f32.gmra.mrb[0].mxu0 %v687
      %v802 = vpop.f32.mrb[0].mxu0
      %v803 = vadd.f32 0.0, %v802
      %v804 = vpop.f32.mrb[0].mxu0
      %805 = vmatprep.mubr.f32.mxu0 0.0
      %806 = vmatmul.mubr.f32.gmra.mrb[0].mxu0 %v688
      %v807 = vpop.f32.mrb[0].mxu0
      %v808 = vadd.f32 0.0, %v807
      %v809 = vpop.f32.mrb[0].mxu0
      %810 = vmatprep.mubr.f32.mxu0 0.0
      %811 = vmatmul.mubr.f32.gmra.mrb[0].mxu0 %v689
      %v812 = vpop.f32.mrb[0].mxu0
      %v813 = vadd.f32 0.0, %v812
      %v814 = vpop.f32.mrb[0].mxu0
      %815 = vmatprep.mubr.f32.mxu0 0.0
      %816 = vmatmul.mubr.f32.gmra.mrb[0].mxu0 %v690
      %v817 = vpop.f32.mrb[0].mxu0
      %v818 = vadd.f32 0.0, %v817
      %v819 = vpop.f32.mrb[0].mxu0
      %820 = vmatprep.mubr.f32.mxu0 0.0
      %821 = vmatmul.mubr.f32.gmra.mrb[0].mxu0 %v691
      %v822 = vpop.f32.mrb[0].mxu0
      %v823 = vadd.f32 0.0, %v822
      %v824 = vpop.f32.mrb[0].mxu0
      %825 = vmatprep.mubr.f32.mxu0 0.0
      %826 = vmatmul.mubr.f32.gmra.mrb[0].mxu0 %v692
      %v827 = vpop.f32.mrb[0].mxu0
      %v828 = vadd.f32 0.0, %v827
      %v829 = vpop.f32.mrb[0].mxu0
      %830 = vmatprep.mubr.f32.mxu0 0.0
      %831 = vmatmul.mubr.f32.gmra.mrb[0].mxu0 %v693
      %v832 = vpop.f32.mrb[0].mxu0
      %v833 = vadd.f32 0.0, %v832
      %v834 = vpop.f32.mrb[0].mxu0
      %835 = vmatprep.mubr.f32.mxu0 0.0
      %836 = vmatmul.mubr.f32.gmra.mrb[0].mxu0 %v694
      %v837 = vpop.f32.mrb[0].mxu0
      %v838 = vadd.f32 0.0, %v837
      %v839 = vpop.f32.mrb[0].mxu0
      %840 = vmatprep.mubr.f32.mxu0 0.0
      %841 = vmatmul.mubr.f32.gmra.mrb[0].mxu0 %v695
      %v842 = vpop.f32.mrb[0].mxu0
      %v843 = vadd.f32 0.0, %v842
      %v844 = vpop.f32.mrb[0].mxu0
      %845 = vmatprep.mubr.f32.mxu0 0.0
      %846 = vmatmul.mubr.f32.gmra.mrb[0].mxu0 %v696
      %v847 = vpop.f32.mrb[0].mxu0
      %v848 = vadd.f32 0.0, %v847
      %v849 = vpop.f32.mrb[0].mxu0
      %850 = vmatprep.mubr.f32.mxu0 0.0
      %851 = vmatmul.mubr.f32.gmra.mrb[0].mxu0 %v697
      %v852 = vpop.f32.mrb[0].mxu0
      %v853 = vadd.f32 0.0, %v852
      %v854 = vpop.f32.mrb[0].mxu0
      %855 = vmatprep.mubr.f32.mxu0 0.0
      %856 = vmatmul.mubr.f32.gmra.mrb[0].mxu0 %v698
      %v857 = vpop.f32.mrb[0].mxu0
      %v858 = vadd.f32 0.0, %v857
      %v859 = vpop.f32.mrb[0].mxu0
      %860 = vdwg.mxu0
      %v861 = vadd.f32 %v666, %v783
      %v862 = vadd.f32 %v667, %v788
      %v863 = vadd.f32 %v668, %v793
      %v864 = vadd.f32 %v669, %v798
      %v865 = vadd.f32 %v670, %v803
      %v866 = vadd.f32 %v671, %v808
      %v867 = vadd.f32 %v672, %v813
      %v868 = vadd.f32 %v673, %v818
      %v869 = vadd.f32 %v674, %v823
      %v870 = vadd.f32 %v675, %v828
      %v871 = vadd.f32 %v676, %v833
      %v872 = vadd.f32 %v677, %v838
      %v873 = vadd.f32 %v678, %v843
      %v874 = vadd.f32 %v679, %v848
      %v875 = vadd.f32 %v680, %v853
      %v876 = vadd.f32 %v681, %v858
      %v877 = vld [vmem:[%s682 + $0x1] sm:$0xff]
      %v878 = vld [vmem:[%s682 + $0x9] sm:$0xff]
      %v879 = vld [vmem:[%s682 + $0x19] sm:$0xff]
      %v880 = vld [vmem:[%s682 + $0x21] sm:$0xff]
      %v881 = vld [vmem:[%s682 + $0x31] sm:$0xff]
      %v882 = vld [vmem:[%s682 + $0x39] sm:$0xff]
      %v883 = vld [vmem:[%s682 + $0x49] sm:$0xff]
      %v884 = vld [vmem:[%s682 + $0x51] sm:$0xff]
      %v885 = vld [vmem:[%s682 + $0x61] sm:$0xff]
      %v886 = vld [vmem:[%s682 + $0x69] sm:$0xff]
      %v887 = vld [vmem:[%s682 + $0x79] sm:$0xff]
      %v888 = vld [vmem:[%s682 + $0x81] sm:$0xff]
      %v889 = vld [vmem:[%s682 + $0x91] sm:$0xff]
      %v890 = vld [vmem:[%s682 + $0x99] sm:$0xff]
      %v891 = vld [vmem:[%s682 + $0xa9] sm:$0xff]
      %v892 = vld [vmem:[%s682 + $0xb1] sm:$0xff]
      %s893 = scalar_lea.vmem %s1, 384
      %v894 = vld [vmem:[%s893] sm:$0xff]
      %v895 = vld [vmem:[%s893 + $0x8] sm:$0xff]
      %v896 = vld [vmem:[%s893 + $0x10] sm:$0xff]
      %v897 = vld [vmem:[%s893 + $0x18] sm:$0xff]
      %v898 = vld [vmem:[%s893 + $0x20] sm:$0xff]
      %v899 = vld [vmem:[%s893 + $0x28] sm:$0xff]
      %v900 = vld [vmem:[%s893 + $0x30] sm:$0xff]
      %v901 = vld [vmem:[%s893 + $0x38] sm:$0xff]
      %v902 = vld [vmem:[%s893 + $0x40] sm:$0xff]
      %v903 = vld [vmem:[%s893 + $0x48] sm:$0xff]
      %v904 = vld [vmem:[%s893 + $0x50] sm:$0xff]
      %v905 = vld [vmem:[%s893 + $0x58] sm:$0xff]
      %v906 = vld [vmem:[%s893 + $0x60] sm:$0xff]
      %v907 = vld [vmem:[%s893 + $0x68] sm:$0xff]
      %v908 = vld [vmem:[%s893 + $0x70] sm:$0xff]
      %v909 = vld [vmem:[%s893 + $0x78] sm:$0xff]
      %910 = vmatprep.subr.mxu0 0.0
      %911 = vmatpush1.msra.mxu0 %v894
      %912 = vmatprep.subr.mxu0 0.0
      %913 = vmatpush1.msra.mxu0 %v895
      %914 = vmatprep.subr.mxu0 0.0
      %915 = vmatpush1.msra.mxu0 %v896
      %916 = vmatprep.subr.mxu0 0.0
      %917 = vmatpush1.msra.mxu0 %v897
      %918 = vmatprep.subr.mxu0 0.0
      %919 = vmatpush1.msra.mxu0 %v898
      %920 = vmatprep.subr.mxu0 0.0
      %921 = vmatpush1.msra.mxu0 %v899
      %922 = vmatprep.subr.mxu0 0.0
      %923 = vmatpush1.msra.mxu0 %v900
      %924 = vmatprep.subr.mxu0 0.0
      %925 = vmatpush1.msra.mxu0 %v901
      %926 = vmatprep.subr.mxu0 0.0
      %927 = vmatpush1.msra.mxu0 %v902
      %928 = vmatprep.subr.mxu0 0.0
      %929 = vmatpush1.msra.mxu0 %v903
      %930 = vmatprep.subr.mxu0 0.0
      %931 = vmatpush1.msra.mxu0 %v904
      %932 = vmatprep.subr.mxu0 0.0
      %933 = vmatpush1.msra.mxu0 %v905
      %934 = vmatprep.subr.mxu0 0.0
      %935 = vmatpush1.msra.mxu0 %v906
      %936 = vmatprep.subr.mxu0 0.0
      %937 = vmatpush1.msra.mxu0 %v907
      %938 = vmatprep.subr.mxu0 0.0
      %939 = vmatpush1.msra.mxu0 %v908
      %940 = vmatprep.subr.mxu0 0.0
      %941 = vmatpush1.msra.mxu0 %v909
      %942 = vmatprep.subr.mxu0 0.0
      %943 = vmatpush1.msra.mxu0 0.0
      %944 = vmatprep.subr.mxu0 0.0
      %945 = vmatpush1.msra.mxu0 0.0
      %946 = vmatprep.subr.mxu0 0.0
      %947 = vmatpush1.msra.mxu0 0.0
      %948 = vmatprep.subr.mxu0 0.0
      %949 = vmatpush1.msra.mxu0 0.0
      %950 = vmatprep.subr.mxu0 0.0
      %951 = vmatpush1.msra.mxu0 0.0
      %952 = vmatprep.subr.mxu0 0.0
      %953 = vmatpush1.msra.mxu0 0.0
      %954 = vmatprep.subr.mxu0 0.0
      %955 = vmatpush1.msra.mxu0 0.0
      %956 = vmatprep.subr.mxu0 0.0
      %957 = vmatpush1.msra.mxu0 0.0
      %958 = vmatprep.subr.mxu0 0.0
      %959 = vmatpush1.msra.mxu0 0.0
      %960 = vmatprep.subr.mxu0 0.0
      %961 = vmatpush1.msra.mxu0 0.0
      %962 = vmatprep.subr.mxu0 0.0
      %963 = vmatpush1.msra.mxu0 0.0
      %964 = vmatprep.subr.mxu0 0.0
      %965 = vmatpush1.msra.mxu0 0.0
      %966 = vmatprep.subr.mxu0 0.0
      %967 = vmatpush1.msra.mxu0 0.0
      %968 = vmatprep.subr.mxu0 0.0
      %969 = vmatpush1.msra.mxu0 0.0
      %970 = vmatprep.subr.mxu0 0.0
      %971 = vmatpush1.msra.mxu0 0.0
      %972 = vmatprep.subr.mxu0 0.0
      %973 = vmatpush1.msra.mxu0 0.0
      %974 = vmatprep.mubr.f32.mxu0 0.0
      %975 = vmatmul.mubr.f32.gmra.mrb[0].mxu0 %v877
      %v976 = vpop.f32.mrb[0].mxu0
      %v977 = vadd.f32 0.0, %v976
      %v978 = vpop.f32.mrb[0].mxu0
      %979 = vmatprep.mubr.f32.mxu0 0.0
      %980 = vmatmul.mubr.f32.gmra.mrb[0].mxu0 %v878
      %v981 = vpop.f32.mrb[0].mxu0
      %v982 = vadd.f32 0.0, %v981
      %v983 = vpop.f32.mrb[0].mxu0
      %984 = vmatprep.mubr.f32.mxu0 0.0
      %985 = vmatmul.mubr.f32.gmra.mrb[0].mxu0 %v879
      %v986 = vpop.f32.mrb[0].mxu0
      %v987 = vadd.f32 0.0, %v986
      %v988 = vpop.f32.mrb[0].mxu0
      %989 = vmatprep.mubr.f32.mxu0 0.0
      %990 = vmatmul.mubr.f32.gmra.mrb[0].mxu0 %v880
      %v991 = vpop.f32.mrb[0].mxu0
      %v992 = vadd.f32 0.0, %v991
      %v993 = vpop.f32.mrb[0].mxu0
      %994 = vmatprep.mubr.f32.mxu0 0.0
      %995 = vmatmul.mubr.f32.gmra.mrb[0].mxu0 %v881
      %v996 = vpop.f32.mrb[0].mxu0
      %v997 = vadd.f32 0.0, %v996
      %v998 = vpop.f32.mrb[0].mxu0
      %999 = vmatprep.mubr.f32.mxu0 0.0
      %1000 = vmatmul.mubr.f32.gmra.mrb[0].mxu0 %v882
      %v1001 = vpop.f32.mrb[0].mxu0
      %v1002 = vadd.f32 0.0, %v1001
      %v1003 = vpop.f32.mrb[0].mxu0
      %1004 = vmatprep.mubr.f32.mxu0 0.0
      %1005 = vmatmul.mubr.f32.gmra.mrb[0].mxu0 %v883
      %v1006 = vpop.f32.mrb[0].mxu0
      %v1007 = vadd.f32 0.0, %v1006
      %v1008 = vpop.f32.mrb[0].mxu0
      %1009 = vmatprep.mubr.f32.mxu0 0.0
      %1010 = vmatmul.mubr.f32.gmra.mrb[0].mxu0 %v884
      %v1011 = vpop.f32.mrb[0].mxu0
      %v1012 = vadd.f32 0.0, %v1011
      %v1013 = vpop.f32.mrb[0].mxu0
      %1014 = vmatprep.mubr.f32.mxu0 0.0
      %1015 = vmatmul.mubr.f32.gmra.mrb[0].mxu0 %v885
      %v1016 = vpop.f32.mrb[0].mxu0
      %v1017 = vadd.f32 0.0, %v1016
      %v1018 = vpop.f32.mrb[0].mxu0
      %1019 = vmatprep.mubr.f32.mxu0 0.0
      %1020 = vmatmul.mubr.f32.gmra.mrb[0].mxu0 %v886
      %v1021 = vpop.f32.mrb[0].mxu0
      %v1022 = vadd.f32 0.0, %v1021
      %v1023 = vpop.f32.mrb[0].mxu0
      %1024 = vmatprep.mubr.f32.mxu0 0.0
      %1025 = vmatmul.mubr.f32.gmra.mrb[0].mxu0 %v887
      %v1026 = vpop.f32.mrb[0].mxu0
      %v1027 = vadd.f32 0.0, %v1026
      %v1028 = vpop.f32.mrb[0].mxu0
      %1029 = vmatprep.mubr.f32.mxu0 0.0
      %1030 = vmatmul.mubr.f32.gmra.mrb[0].mxu0 %v888
      %v1031 = vpop.f32.mrb[0].mxu0
      %v1032 = vadd.f32 0.0, %v1031
      %v1033 = vpop.f32.mrb[0].mxu0
      %1034 = vmatprep.mubr.f32.mxu0 0.0
      %1035 = vmatmul.mubr.f32.gmra.mrb[0].mxu0 %v889
      %v1036 = vpop.f32.mrb[0].mxu0
      %v1037 = vadd.f32 0.0, %v1036
      %v1038 = vpop.f32.mrb[0].mxu0
      %1039 = vmatprep.mubr.f32.mxu0 0.0
      %1040 = vmatmul.mubr.f32.gmra.mrb[0].mxu0 %v890
      %v1041 = vpop.f32.mrb[0].mxu0
      %v1042 = vadd.f32 0.0, %v1041
      %v1043 = vpop.f32.mrb[0].mxu0
      %1044 = vmatprep.mubr.f32.mxu0 0.0
      %1045 = vmatmul.mubr.f32.gmra.mrb[0].mxu0 %v891
      %v1046 = vpop.f32.mrb[0].mxu0
      %v1047 = vadd.f32 0.0, %v1046
      %v1048 = vpop.f32.mrb[0].mxu0
      %1049 = vmatprep.mubr.f32.mxu0 0.0
      %1050 = vmatmul.mubr.f32.gmra.mrb[0].mxu0 %v892
      %v1051 = vpop.f32.mrb[0].mxu0
      %v1052 = vadd.f32 0.0, %v1051
      %v1053 = vpop.f32.mrb[0].mxu0
      %1054 = vdwg.mxu0
      %v1055 = vadd.f32 %v861, %v977
      %v1056 = vadd.f32 %v862, %v982
      %v1057 = vadd.f32 %v863, %v987
      %v1058 = vadd.f32 %v864, %v992
      %v1059 = vadd.f32 %v865, %v997
      %v1060 = vadd.f32 %v866, %v1002
      %v1061 = vadd.f32 %v867, %v1007
      %v1062 = vadd.f32 %v868, %v1012
      %v1063 = vadd.f32 %v869, %v1017
      %v1064 = vadd.f32 %v870, %v1022
      %v1065 = vadd.f32 %v871, %v1027
      %v1066 = vadd.f32 %v872, %v1032
      %v1067 = vadd.f32 %v873, %v1037
      %v1068 = vadd.f32 %v874, %v1042
      %v1069 = vadd.f32 %v875, %v1047
      %v1070 = vadd.f32 %v876, %v1052
      %s1071 = scalar_lea.vmem %s1, 512
      %v1072 = vld [vmem:[%s1071] sm:$0xff]
      %v1073 = vld [vmem:[%s1071 + $0x8] sm:$0xff]
      %v1074 = vld [vmem:[%s1071 + $0x10] sm:$0xff]
      %v1075 = vld [vmem:[%s1071 + $0x18] sm:$0xff]
      %v1076 = vld [vmem:[%s1071 + $0x20] sm:$0xff]
      %v1077 = vld [vmem:[%s1071 + $0x28] sm:$0xff]
      %v1078 = vld [vmem:[%s1071 + $0x30] sm:$0xff]
      %v1079 = vld [vmem:[%s1071 + $0x38] sm:$0xff]
      %v1080 = vld [vmem:[%s1071 + $0x40] sm:$0xff]
      %v1081 = vld [vmem:[%s1071 + $0x48] sm:$0xff]
      %v1082 = vld [vmem:[%s1071 + $0x50] sm:$0xff]
      %v1083 = vld [vmem:[%s1071 + $0x58] sm:$0xff]
      %v1084 = vld [vmem:[%s1071 + $0x60] sm:$0xff]
      %v1085 = vld [vmem:[%s1071 + $0x68] sm:$0xff]
      %v1086 = vld [vmem:[%s1071 + $0x70] sm:$0xff]
      %v1087 = vld [vmem:[%s1071 + $0x78] sm:$0xff]
      %1088 = vmatprep.subr.mxu0 0.0
      %1089 = vmatpush1.msra.mxu0 %v1072
      %1090 = vmatprep.subr.mxu0 0.0
      %1091 = vmatpush1.msra.mxu0 %v1073
      %1092 = vmatprep.subr.mxu0 0.0
      %1093 = vmatpush1.msra.mxu0 %v1074
      %1094 = vmatprep.subr.mxu0 0.0
      %1095 = vmatpush1.msra.mxu0 %v1075
      %1096 = vmatprep.subr.mxu0 0.0
      %1097 = vmatpush1.msra.mxu0 %v1076
      %1098 = vmatprep.subr.mxu0 0.0
      %1099 = vmatpush1.msra.mxu0 %v1077
      %1100 = vmatprep.subr.mxu0 0.0
      %1101 = vmatpush1.msra.mxu0 %v1078
      %1102 = vmatprep.subr.mxu0 0.0
      %1103 = vmatpush1.msra.mxu0 %v1079
      %1104 = vmatprep.subr.mxu0 0.0
      %1105 = vmatpush1.msra.mxu0 %v1080
      %1106 = vmatprep.subr.mxu0 0.0
      %1107 = vmatpush1.msra.mxu0 %v1081
      %1108 = vmatprep.subr.mxu0 0.0
      %1109 = vmatpush1.msra.mxu0 %v1082
      %1110 = vmatprep.subr.mxu0 0.0
      %1111 = vmatpush1.msra.mxu0 %v1083
      %1112 = vmatprep.subr.mxu0 0.0
      %1113 = vmatpush1.msra.mxu0 %v1084
      %1114 = vmatprep.subr.mxu0 0.0
      %1115 = vmatpush1.msra.mxu0 %v1085
      %1116 = vmatprep.subr.mxu0 0.0
      %1117 = vmatpush1.msra.mxu0 %v1086
      %1118 = vmatprep.subr.mxu0 0.0
      %1119 = vmatpush1.msra.mxu0 %v1087
      %1120 = vmatprep.subr.mxu0 0.0
      %1121 = vmatpush1.msra.mxu0 0.0
      %1122 = vmatprep.subr.mxu0 0.0
      %1123 = vmatpush1.msra.mxu0 0.0
      %1124 = vmatprep.subr.mxu0 0.0
      %1125 = vmatpush1.msra.mxu0 0.0
      %1126 = vmatprep.subr.mxu0 0.0
      %1127 = vmatpush1.msra.mxu0 0.0
      %1128 = vmatprep.subr.mxu0 0.0
      %1129 = vmatpush1.msra.mxu0 0.0
      %1130 = vmatprep.subr.mxu0 0.0
      %1131 = vmatpush1.msra.mxu0 0.0
      %1132 = vmatprep.subr.mxu0 0.0
      %1133 = vmatpush1.msra.mxu0 0.0
      %1134 = vmatprep.subr.mxu0 0.0
      %1135 = vmatpush1.msra.mxu0 0.0
      %1136 = vmatprep.subr.mxu0 0.0
      %1137 = vmatpush1.msra.mxu0 0.0
      %1138 = vmatprep.subr.mxu0 0.0
      %1139 = vmatpush1.msra.mxu0 0.0
      %1140 = vmatprep.subr.mxu0 0.0
      %1141 = vmatpush1.msra.mxu0 0.0
      %1142 = vmatprep.subr.mxu0 0.0
      %1143 = vmatpush1.msra.mxu0 0.0
      %1144 = vmatprep.subr.mxu0 0.0
      %1145 = vmatpush1.msra.mxu0 0.0
      %1146 = vmatprep.subr.mxu0 0.0
      %1147 = vmatpush1.msra.mxu0 0.0
      %1148 = vmatprep.subr.mxu0 0.0
      %1149 = vmatpush1.msra.mxu0 0.0
      %1150 = vmatprep.subr.mxu0 0.0
      %1151 = vmatpush1.msra.mxu0 0.0
      %1152 = vmatprep.mubr.f32.mxu0 0.0
      %1153 = vmatmul.mubr.f32.gmra.mrb[0].mxu0 %v488
      %v1154 = vpop.f32.mrb[0].mxu0
      %v1155 = vadd.f32 0.0, %v1154
      %v1156 = vpop.f32.mrb[0].mxu0
      %1157 = vmatprep.mubr.f32.mxu0 0.0
      %1158 = vmatmul.mubr.f32.gmra.mrb[0].mxu0 %v489
      %v1159 = vpop.f32.mrb[0].mxu0
      %v1160 = vadd.f32 0.0, %v1159
      %v1161 = vpop.f32.mrb[0].mxu0
      %1162 = vmatprep.mubr.f32.mxu0 0.0
      %1163 = vmatmul.mubr.f32.gmra.mrb[0].mxu0 %v490
      %v1164 = vpop.f32.mrb[0].mxu0
      %v1165 = vadd.f32 0.0, %v1164
      %v1166 = vpop.f32.mrb[0].mxu0
      %1167 = vmatprep.mubr.f32.mxu0 0.0
      %1168 = vmatmul.mubr.f32.gmra.mrb[0].mxu0 %v491
      %v1169 = vpop.f32.mrb[0].mxu0
      %v1170 = vadd.f32 0.0, %v1169
      %v1171 = vpop.f32.mrb[0].mxu0
      %1172 = vmatprep.mubr.f32.mxu0 0.0
      %1173 = vmatmul.mubr.f32.gmra.mrb[0].mxu0 %v492
      %v1174 = vpop.f32.mrb[0].mxu0
      %v1175 = vadd.f32 0.0, %v1174
      %v1176 = vpop.f32.mrb[0].mxu0
      %1177 = vmatprep.mubr.f32.mxu0 0.0
      %1178 = vmatmul.mubr.f32.gmra.mrb[0].mxu0 %v493
      %v1179 = vpop.f32.mrb[0].mxu0
      %v1180 = vadd.f32 0.0, %v1179
      %v1181 = vpop.f32.mrb[0].mxu0
      %1182 = vmatprep.mubr.f32.mxu0 0.0
      %1183 = vmatmul.mubr.f32.gmra.mrb[0].mxu0 %v494
      %v1184 = vpop.f32.mrb[0].mxu0
      %v1185 = vadd.f32 0.0, %v1184
      %v1186 = vpop.f32.mrb[0].mxu0
      %1187 = vmatprep.mubr.f32.mxu0 0.0
      %1188 = vmatmul.mubr.f32.gmra.mrb[0].mxu0 %v495
      %v1189 = vpop.f32.mrb[0].mxu0
      %v1190 = vadd.f32 0.0, %v1189
      %v1191 = vpop.f32.mrb[0].mxu0
      %1192 = vmatprep.mubr.f32.mxu0 0.0
      %1193 = vmatmul.mubr.f32.gmra.mrb[0].mxu0 %v496
      %v1194 = vpop.f32.mrb[0].mxu0
      %v1195 = vadd.f32 0.0, %v1194
      %v1196 = vpop.f32.mrb[0].mxu0
      %1197 = vmatprep.mubr.f32.mxu0 0.0
      %1198 = vmatmul.mubr.f32.gmra.mrb[0].mxu0 %v497
      %v1199 = vpop.f32.mrb[0].mxu0
      %v1200 = vadd.f32 0.0, %v1199
      %v1201 = vpop.f32.mrb[0].mxu0
      %1202 = vmatprep.mubr.f32.mxu0 0.0
      %1203 = vmatmul.mubr.f32.gmra.mrb[0].mxu0 %v498
      %v1204 = vpop.f32.mrb[0].mxu0
      %v1205 = vadd.f32 0.0, %v1204
      %v1206 = vpop.f32.mrb[0].mxu0
      %1207 = vmatprep.mubr.f32.mxu0 0.0
      %1208 = vmatmul.mubr.f32.gmra.mrb[0].mxu0 %v499
      %v1209 = vpop.f32.mrb[0].mxu0
      %v1210 = vadd.f32 0.0, %v1209
      %v1211 = vpop.f32.mrb[0].mxu0
      %1212 = vmatprep.mubr.f32.mxu0 0.0
      %1213 = vmatmul.mubr.f32.gmra.mrb[0].mxu0 %v500
      %v1214 = vpop.f32.mrb[0].mxu0
      %v1215 = vadd.f32 0.0, %v1214
      %v1216 = vpop.f32.mrb[0].mxu0
      %1217 = vmatprep.mubr.f32.mxu0 0.0
      %1218 = vmatmul.mubr.f32.gmra.mrb[0].mxu0 %v501
      %v1219 = vpop.f32.mrb[0].mxu0
      %v1220 = vadd.f32 0.0, %v1219
      %v1221 = vpop.f32.mrb[0].mxu0
      %1222 = vmatprep.mubr.f32.mxu0 0.0
      %1223 = vmatmul.mubr.f32.gmra.mrb[0].mxu0 %v502
      %v1224 = vpop.f32.mrb[0].mxu0
      %v1225 = vadd.f32 0.0, %v1224
      %v1226 = vpop.f32.mrb[0].mxu0
      %1227 = vmatprep.mubr.f32.mxu0 0.0
      %1228 = vmatmul.mubr.f32.gmra.mrb[0].mxu0 %v503
      %v1229 = vpop.f32.mrb[0].mxu0
      %v1230 = vadd.f32 0.0, %v1229
      %v1231 = vpop.f32.mrb[0].mxu0
      %1232 = vdwg.mxu0
      %v1233 = vadd.f32 %v294, %v1155
      %v1234 = vadd.f32 %v294, %v1160
      %v1235 = vadd.f32 %v294, %v1165
      %v1236 = vadd.f32 %v294, %v1170
      %v1237 = vadd.f32 %v294, %v1175
      %v1238 = vadd.f32 %v294, %v1180
      %v1239 = vadd.f32 %v294, %v1185
      %v1240 = vadd.f32 %v294, %v1190
      %v1241 = vadd.f32 %v294, %v1195
      %v1242 = vadd.f32 %v294, %v1200
      %v1243 = vadd.f32 %v294, %v1205
      %v1244 = vadd.f32 %v294, %v1210
      %v1245 = vadd.f32 %v294, %v1215
      %v1246 = vadd.f32 %v294, %v1220
      %v1247 = vadd.f32 %v294, %v1225
      %v1248 = vadd.f32 %v294, %v1230
      %v1249 = vld [vmem:[#allocation2 + $0x2] sm:$0xff]
      %v1250 = vld [vmem:[#allocation2 + $0xa] sm:$0xff]
      %v1251 = vld [vmem:[#allocation2 + $0x1a] sm:$0xff]
      %v1252 = vld [vmem:[#allocation2 + $0x22] sm:$0xff]
      %v1253 = vld [vmem:[#allocation2 + $0x32] sm:$0xff]
      %v1254 = vld [vmem:[#allocation2 + $0x3a] sm:$0xff]
      %v1255 = vld [vmem:[#allocation2 + $0x4a] sm:$0xff]
      %v1256 = vld [vmem:[#allocation2 + $0x52] sm:$0xff]
      %v1257 = vld [vmem:[#allocation2 + $0x62] sm:$0xff]
      %v1258 = vld [vmem:[#allocation2 + $0x6a] sm:$0xff]
      %v1259 = vld [vmem:[#allocation2 + $0x7a] sm:$0xff]
      %v1260 = vld [vmem:[#allocation2 + $0x82] sm:$0xff]
      %v1261 = vld [vmem:[#allocation2 + $0x92] sm:$0xff]
      %v1262 = vld [vmem:[#allocation2 + $0x9a] sm:$0xff]
      %v1263 = vld [vmem:[#allocation2 + $0xaa] sm:$0xff]
      %v1264 = vld [vmem:[#allocation2 + $0xb2] sm:$0xff]
      %s1265 = scalar_lea.vmem %s1, 640
      %v1266 = vld [vmem:[%s1265] sm:$0xff]
      %v1267 = vld [vmem:[%s1265 + $0x8] sm:$0xff]
      %v1268 = vld [vmem:[%s1265 + $0x10] sm:$0xff]
      %v1269 = vld [vmem:[%s1265 + $0x18] sm:$0xff]
      %v1270 = vld [vmem:[%s1265 + $0x20] sm:$0xff]
      %v1271 = vld [vmem:[%s1265 + $0x28] sm:$0xff]
      %v1272 = vld [vmem:[%s1265 + $0x30] sm:$0xff]
      %v1273 = vld [vmem:[%s1265 + $0x38] sm:$0xff]
      %v1274 = vld [vmem:[%s1265 + $0x40] sm:$0xff]
      %v1275 = vld [vmem:[%s1265 + $0x48] sm:$0xff]
      %v1276 = vld [vmem:[%s1265 + $0x50] sm:$0xff]
      %v1277 = vld [vmem:[%s1265 + $0x58] sm:$0xff]
      %v1278 = vld [vmem:[%s1265 + $0x60] sm:$0xff]
      %v1279 = vld [vmem:[%s1265 + $0x68] sm:$0xff]
      %v1280 = vld [vmem:[%s1265 + $0x70] sm:$0xff]
      %v1281 = vld [vmem:[%s1265 + $0x78] sm:$0xff]
      %1282 = vmatprep.subr.mxu0 0.0
      %1283 = vmatpush1.msra.mxu0 %v1266
      %1284 = vmatprep.subr.mxu0 0.0
      %1285 = vmatpush1.msra.mxu0 %v1267
      %1286 = vmatprep.subr.mxu0 0.0
      %1287 = vmatpush1.msra.mxu0 %v1268
      %1288 = vmatprep.subr.mxu0 0.0
      %1289 = vmatpush1.msra.mxu0 %v1269
      %1290 = vmatprep.subr.mxu0 0.0
      %1291 = vmatpush1.msra.mxu0 %v1270
      %1292 = vmatprep.subr.mxu0 0.0
      %1293 = vmatpush1.msra.mxu0 %v1271
      %1294 = vmatprep.subr.mxu0 0.0
      %1295 = vmatpush1.msra.mxu0 %v1272
      %1296 = vmatprep.subr.mxu0 0.0
      %1297 = vmatpush1.msra.mxu0 %v1273
      %1298 = vmatprep.subr.mxu0 0.0
      %1299 = vmatpush1.msra.mxu0 %v1274
      %1300 = vmatprep.subr.mxu0 0.0
      %1301 = vmatpush1.msra.mxu0 %v1275
      %1302 = vmatprep.subr.mxu0 0.0
      %1303 = vmatpush1.msra.mxu0 %v1276
      %1304 = vmatprep.subr.mxu0 0.0
      %1305 = vmatpush1.msra.mxu0 %v1277
      %1306 = vmatprep.subr.mxu0 0.0
      %1307 = vmatpush1.msra.mxu0 %v1278
      %1308 = vmatprep.subr.mxu0 0.0
      %1309 = vmatpush1.msra.mxu0 %v1279
      %1310 = vmatprep.subr.mxu0 0.0
      %1311 = vmatpush1.msra.mxu0 %v1280
      %1312 = vmatprep.subr.mxu0 0.0
      %1313 = vmatpush1.msra.mxu0 %v1281
      %1314 = vmatprep.subr.mxu0 0.0
      %1315 = vmatpush1.msra.mxu0 0.0
      %1316 = vmatprep.subr.mxu0 0.0
      %1317 = vmatpush1.msra.mxu0 0.0
      %1318 = vmatprep.subr.mxu0 0.0
      %1319 = vmatpush1.msra.mxu0 0.0
      %1320 = vmatprep.subr.mxu0 0.0
      %1321 = vmatpush1.msra.mxu0 0.0
      %1322 = vmatprep.subr.mxu0 0.0
      %1323 = vmatpush1.msra.mxu0 0.0
      %1324 = vmatprep.subr.mxu0 0.0
      %1325 = vmatpush1.msra.mxu0 0.0
      %1326 = vmatprep.subr.mxu0 0.0
      %1327 = vmatpush1.msra.mxu0 0.0
      %1328 = vmatprep.subr.mxu0 0.0
      %1329 = vmatpush1.msra.mxu0 0.0
      %1330 = vmatprep.subr.mxu0 0.0
      %1331 = vmatpush1.msra.mxu0 0.0
      %1332 = vmatprep.subr.mxu0 0.0
      %1333 = vmatpush1.msra.mxu0 0.0
      %1334 = vmatprep.subr.mxu0 0.0
      %1335 = vmatpush1.msra.mxu0 0.0
      %1336 = vmatprep.subr.mxu0 0.0
      %1337 = vmatpush1.msra.mxu0 0.0
      %1338 = vmatprep.subr.mxu0 0.0
      %1339 = vmatpush1.msra.mxu0 0.0
      %1340 = vmatprep.subr.mxu0 0.0
      %1341 = vmatpush1.msra.mxu0 0.0
      %1342 = vmatprep.subr.mxu0 0.0
      %1343 = vmatpush1.msra.mxu0 0.0
      %1344 = vmatprep.subr.mxu0 0.0
      %1345 = vmatpush1.msra.mxu0 0.0
      %1346 = vmatprep.mubr.f32.mxu0 0.0
      %1347 = vmatmul.mubr.f32.gmra.mrb[0].mxu0 %v1249
      %v1348 = vpop.f32.mrb[0].mxu0
      %v1349 = vadd.f32 0.0, %v1348
      %v1350 = vpop.f32.mrb[0].mxu0
      %1351 = vmatprep.mubr.f32.mxu0 0.0
      %1352 = vmatmul.mubr.f32.gmra.mrb[0].mxu0 %v1250
      %v1353 = vpop.f32.mrb[0].mxu0
      %v1354 = vadd.f32 0.0, %v1353
      %v1355 = vpop.f32.mrb[0].mxu0
      %1356 = vmatprep.mubr.f32.mxu0 0.0
      %1357 = vmatmul.mubr.f32.gmra.mrb[0].mxu0 %v1251
      %v1358 = vpop.f32.mrb[0].mxu0
      %v1359 = vadd.f32 0.0, %v1358
      %v1360 = vpop.f32.mrb[0].mxu0
      %1361 = vmatprep.mubr.f32.mxu0 0.0
      %1362 = vmatmul.mubr.f32.gmra.mrb[0].mxu0 %v1252
      %v1363 = vpop.f32.mrb[0].mxu0
      %v1364 = vadd.f32 0.0, %v1363
      %v1365 = vpop.f32.mrb[0].mxu0
      %1366 = vmatprep.mubr.f32.mxu0 0.0
      %1367 = vmatmul.mubr.f32.gmra.mrb[0].mxu0 %v1253
      %v1368 = vpop.f32.mrb[0].mxu0
      %v1369 = vadd.f32 0.0, %v1368
      %v1370 = vpop.f32.mrb[0].mxu0
      %1371 = vmatprep.mubr.f32.mxu0 0.0
      %1372 = vmatmul.mubr.f32.gmra.mrb[0].mxu0 %v1254
      %v1373 = vpop.f32.mrb[0].mxu0
      %v1374 = vadd.f32 0.0, %v1373
      %v1375 = vpop.f32.mrb[0].mxu0
      %1376 = vmatprep.mubr.f32.mxu0 0.0
      %1377 = vmatmul.mubr.f32.gmra.mrb[0].mxu0 %v1255
      %v1378 = vpop.f32.mrb[0].mxu0
      %v1379 = vadd.f32 0.0, %v1378
      %v1380 = vpop.f32.mrb[0].mxu0
      %1381 = vmatprep.mubr.f32.mxu0 0.0
      %1382 = vmatmul.mubr.f32.gmra.mrb[0].mxu0 %v1256
      %v1383 = vpop.f32.mrb[0].mxu0
      %v1384 = vadd.f32 0.0, %v1383
      %v1385 = vpop.f32.mrb[0].mxu0
      %1386 = vmatprep.mubr.f32.mxu0 0.0
      %1387 = vmatmul.mubr.f32.gmra.mrb[0].mxu0 %v1257
      %v1388 = vpop.f32.mrb[0].mxu0
      %v1389 = vadd.f32 0.0, %v1388
      %v1390 = vpop.f32.mrb[0].mxu0
      %1391 = vmatprep.mubr.f32.mxu0 0.0
      %1392 = vmatmul.mubr.f32.gmra.mrb[0].mxu0 %v1258
      %v1393 = vpop.f32.mrb[0].mxu0
      %v1394 = vadd.f32 0.0, %v1393
      %v1395 = vpop.f32.mrb[0].mxu0
      %1396 = vmatprep.mubr.f32.mxu0 0.0
      %1397 = vmatmul.mubr.f32.gmra.mrb[0].mxu0 %v1259
      %v1398 = vpop.f32.mrb[0].mxu0
      %v1399 = vadd.f32 0.0, %v1398
      %v1400 = vpop.f32.mrb[0].mxu0
      %1401 = vmatprep.mubr.f32.mxu0 0.0
      %1402 = vmatmul.mubr.f32.gmra.mrb[0].mxu0 %v1260
      %v1403 = vpop.f32.mrb[0].mxu0
      %v1404 = vadd.f32 0.0, %v1403
      %v1405 = vpop.f32.mrb[0].mxu0
      %1406 = vmatprep.mubr.f32.mxu0 0.0
      %1407 = vmatmul.mubr.f32.gmra.mrb[0].mxu0 %v1261
      %v1408 = vpop.f32.mrb[0].mxu0
      %v1409 = vadd.f32 0.0, %v1408
      %v1410 = vpop.f32.mrb[0].mxu0
      %1411 = vmatprep.mubr.f32.mxu0 0.0
      %1412 = vmatmul.mubr.f32.gmra.mrb[0].mxu0 %v1262
      %v1413 = vpop.f32.mrb[0].mxu0
      %v1414 = vadd.f32 0.0, %v1413
      %v1415 = vpop.f32.mrb[0].mxu0
      %1416 = vmatprep.mubr.f32.mxu0 0.0
      %1417 = vmatmul.mubr.f32.gmra.mrb[0].mxu0 %v1263
      %v1418 = vpop.f32.mrb[0].mxu0
      %v1419 = vadd.f32 0.0, %v1418
      %v1420 = vpop.f32.mrb[0].mxu0
      %1421 = vmatprep.mubr.f32.mxu0 0.0
      %1422 = vmatmul.mubr.f32.gmra.mrb[0].mxu0 %v1264
      %v1423 = vpop.f32.mrb[0].mxu0
      %v1424 = vadd.f32 0.0, %v1423
      %v1425 = vpop.f32.mrb[0].mxu0
      %1426 = vdwg.mxu0
      %v1427 = vadd.f32 %v1233, %v1349
      %v1428 = vadd.f32 %v1234, %v1354
      %v1429 = vadd.f32 %v1235, %v1359
      %v1430 = vadd.f32 %v1236, %v1364
      %v1431 = vadd.f32 %v1237, %v1369
      %v1432 = vadd.f32 %v1238, %v1374
      %v1433 = vadd.f32 %v1239, %v1379
      %v1434 = vadd.f32 %v1240, %v1384
      %v1435 = vadd.f32 %v1241, %v1389
      %v1436 = vadd.f32 %v1242, %v1394
      %v1437 = vadd.f32 %v1243, %v1399
      %v1438 = vadd.f32 %v1244, %v1404
      %v1439 = vadd.f32 %v1245, %v1409
      %v1440 = vadd.f32 %v1246, %v1414
      %v1441 = vadd.f32 %v1247, %v1419
      %v1442 = vadd.f32 %v1248, %v1424
      %s1443 = scalar_lea.vmem %s1, 768
      %v1444 = vld [vmem:[%s1443] sm:$0xff]
      %v1445 = vld [vmem:[%s1443 + $0x8] sm:$0xff]
      %v1446 = vld [vmem:[%s1443 + $0x10] sm:$0xff]
      %v1447 = vld [vmem:[%s1443 + $0x18] sm:$0xff]
      %v1448 = vld [vmem:[%s1443 + $0x20] sm:$0xff]
      %v1449 = vld [vmem:[%s1443 + $0x28] sm:$0xff]
      %v1450 = vld [vmem:[%s1443 + $0x30] sm:$0xff]
      %v1451 = vld [vmem:[%s1443 + $0x38] sm:$0xff]
      %v1452 = vld [vmem:[%s1443 + $0x40] sm:$0xff]
      %v1453 = vld [vmem:[%s1443 + $0x48] sm:$0xff]
      %v1454 = vld [vmem:[%s1443 + $0x50] sm:$0xff]
      %v1455 = vld [vmem:[%s1443 + $0x58] sm:$0xff]
      %v1456 = vld [vmem:[%s1443 + $0x60] sm:$0xff]
      %v1457 = vld [vmem:[%s1443 + $0x68] sm:$0xff]
      %v1458 = vld [vmem:[%s1443 + $0x70] sm:$0xff]
      %v1459 = vld [vmem:[%s1443 + $0x78] sm:$0xff]
      %1460 = vmatprep.subr.mxu0 0.0
      %1461 = vmatpush1.msra.mxu0 %v1444
      %1462 = vmatprep.subr.mxu0 0.0
      %1463 = vmatpush1.msra.mxu0 %v1445
      %1464 = vmatprep.subr.mxu0 0.0
      %1465 = vmatpush1.msra.mxu0 %v1446
      %1466 = vmatprep.subr.mxu0 0.0
      %1467 = vmatpush1.msra.mxu0 %v1447
      %1468 = vmatprep.subr.mxu0 0.0
      %1469 = vmatpush1.msra.mxu0 %v1448
      %1470 = vmatprep.subr.mxu0 0.0
      %1471 = vmatpush1.msra.mxu0 %v1449
      %1472 = vmatprep.subr.mxu0 0.0
      %1473 = vmatpush1.msra.mxu0 %v1450
      %1474 = vmatprep.subr.mxu0 0.0
      %1475 = vmatpush1.msra.mxu0 %v1451
      %1476 = vmatprep.subr.mxu0 0.0
      %1477 = vmatpush1.msra.mxu0 %v1452
      %1478 = vmatprep.subr.mxu0 0.0
      %1479 = vmatpush1.msra.mxu0 %v1453
      %1480 = vmatprep.subr.mxu0 0.0
      %1481 = vmatpush1.msra.mxu0 %v1454
      %1482 = vmatprep.subr.mxu0 0.0
      %1483 = vmatpush1.msra.mxu0 %v1455
      %1484 = vmatprep.subr.mxu0 0.0
      %1485 = vmatpush1.msra.mxu0 %v1456
      %1486 = vmatprep.subr.mxu0 0.0
      %1487 = vmatpush1.msra.mxu0 %v1457
      %1488 = vmatprep.subr.mxu0 0.0
      %1489 = vmatpush1.msra.mxu0 %v1458
      %1490 = vmatprep.subr.mxu0 0.0
      %1491 = vmatpush1.msra.mxu0 %v1459
      %1492 = vmatprep.subr.mxu0 0.0
      %1493 = vmatpush1.msra.mxu0 0.0
      %1494 = vmatprep.subr.mxu0 0.0
      %1495 = vmatpush1.msra.mxu0 0.0
      %1496 = vmatprep.subr.mxu0 0.0
      %1497 = vmatpush1.msra.mxu0 0.0
      %1498 = vmatprep.subr.mxu0 0.0
      %1499 = vmatpush1.msra.mxu0 0.0
      %1500 = vmatprep.subr.mxu0 0.0
      %1501 = vmatpush1.msra.mxu0 0.0
      %1502 = vmatprep.subr.mxu0 0.0
      %1503 = vmatpush1.msra.mxu0 0.0
      %1504 = vmatprep.subr.mxu0 0.0
      %1505 = vmatpush1.msra.mxu0 0.0
      %1506 = vmatprep.subr.mxu0 0.0
      %1507 = vmatpush1.msra.mxu0 0.0
      %1508 = vmatprep.subr.mxu0 0.0
      %1509 = vmatpush1.msra.mxu0 0.0
      %1510 = vmatprep.subr.mxu0 0.0
      %1511 = vmatpush1.msra.mxu0 0.0
      %1512 = vmatprep.subr.mxu0 0.0
      %1513 = vmatpush1.msra.mxu0 0.0
      %1514 = vmatprep.subr.mxu0 0.0
      %1515 = vmatpush1.msra.mxu0 0.0
      %1516 = vmatprep.subr.mxu0 0.0
      %1517 = vmatpush1.msra.mxu0 0.0
      %1518 = vmatprep.subr.mxu0 0.0
      %1519 = vmatpush1.msra.mxu0 0.0
      %1520 = vmatprep.subr.mxu0 0.0
      %1521 = vmatpush1.msra.mxu0 0.0
      %1522 = vmatprep.subr.mxu0 0.0
      %1523 = vmatpush1.msra.mxu0 0.0
      %1524 = vmatprep.mubr.f32.mxu0 0.0
      %1525 = vmatmul.mubr.f32.gmra.mrb[0].mxu0 %v877
      %v1526 = vpop.f32.mrb[0].mxu0
      %v1527 = vadd.f32 0.0, %v1526
      %v1528 = vpop.f32.mrb[0].mxu0
      %1529 = vmatprep.mubr.f32.mxu0 0.0
      %1530 = vmatmul.mubr.f32.gmra.mrb[0].mxu0 %v878
      %v1531 = vpop.f32.mrb[0].mxu0
      %v1532 = vadd.f32 0.0, %v1531
      %v1533 = vpop.f32.mrb[0].mxu0
      %1534 = vmatprep.mubr.f32.mxu0 0.0
      %1535 = vmatmul.mubr.f32.gmra.mrb[0].mxu0 %v879
      %v1536 = vpop.f32.mrb[0].mxu0
      %v1537 = vadd.f32 0.0, %v1536
      %v1538 = vpop.f32.mrb[0].mxu0
      %1539 = vmatprep.mubr.f32.mxu0 0.0
      %1540 = vmatmul.mubr.f32.gmra.mrb[0].mxu0 %v880
      %v1541 = vpop.f32.mrb[0].mxu0
      %v1542 = vadd.f32 0.0, %v1541
      %v1543 = vpop.f32.mrb[0].mxu0
      %1544 = vmatprep.mubr.f32.mxu0 0.0
      %1545 = vmatmul.mubr.f32.gmra.mrb[0].mxu0 %v881
      %v1546 = vpop.f32.mrb[0].mxu0
      %v1547 = vadd.f32 0.0, %v1546
      %v1548 = vpop.f32.mrb[0].mxu0
      %1549 = vmatprep.mubr.f32.mxu0 0.0
      %1550 = vmatmul.mubr.f32.gmra.mrb[0].mxu0 %v882
      %v1551 = vpop.f32.mrb[0].mxu0
      %v1552 = vadd.f32 0.0, %v1551
      %v1553 = vpop.f32.mrb[0].mxu0
      %1554 = vmatprep.mubr.f32.mxu0 0.0
      %1555 = vmatmul.mubr.f32.gmra.mrb[0].mxu0 %v883
      %v1556 = vpop.f32.mrb[0].mxu0
      %v1557 = vadd.f32 0.0, %v1556
      %v1558 = vpop.f32.mrb[0].mxu0
      %1559 = vmatprep.mubr.f32.mxu0 0.0
      %1560 = vmatmul.mubr.f32.gmra.mrb[0].mxu0 %v884
      %v1561 = vpop.f32.mrb[0].mxu0
      %v1562 = vadd.f32 0.0, %v1561
      %v1563 = vpop.f32.mrb[0].mxu0
      %1564 = vmatprep.mubr.f32.mxu0 0.0
      %1565 = vmatmul.mubr.f32.gmra.mrb[0].mxu0 %v885
      %v1566 = vpop.f32.mrb[0].mxu0
      %v1567 = vadd.f32 0.0, %v1566
      %v1568 = vpop.f32.mrb[0].mxu0
      %1569 = vmatprep.mubr.f32.mxu0 0.0
      %1570 = vmatmul.mubr.f32.gmra.mrb[0].mxu0 %v886
      %v1571 = vpop.f32.mrb[0].mxu0
      %v1572 = vadd.f32 0.0, %v1571
      %v1573 = vpop.f32.mrb[0].mxu0
      %1574 = vmatprep.mubr.f32.mxu0 0.0
      %1575 = vmatmul.mubr.f32.gmra.mrb[0].mxu0 %v887
      %v1576 = vpop.f32.mrb[0].mxu0
      %v1577 = vadd.f32 0.0, %v1576
      %v1578 = vpop.f32.mrb[0].mxu0
      %1579 = vmatprep.mubr.f32.mxu0 0.0
      %1580 = vmatmul.mubr.f32.gmra.mrb[0].mxu0 %v888
      %v1581 = vpop.f32.mrb[0].mxu0
      %v1582 = vadd.f32 0.0, %v1581
      %v1583 = vpop.f32.mrb[0].mxu0
      %1584 = vmatprep.mubr.f32.mxu0 0.0
      %1585 = vmatmul.mubr.f32.gmra.mrb[0].mxu0 %v889
      %v1586 = vpop.f32.mrb[0].mxu0
      %v1587 = vadd.f32 0.0, %v1586
      %v1588 = vpop.f32.mrb[0].mxu0
      %1589 = vmatprep.mubr.f32.mxu0 0.0
      %1590 = vmatmul.mubr.f32.gmra.mrb[0].mxu0 %v890
      %v1591 = vpop.f32.mrb[0].mxu0
      %v1592 = vadd.f32 0.0, %v1591
      %v1593 = vpop.f32.mrb[0].mxu0
      %1594 = vmatprep.mubr.f32.mxu0 0.0
      %1595 = vmatmul.mubr.f32.gmra.mrb[0].mxu0 %v891
      %v1596 = vpop.f32.mrb[0].mxu0
      %v1597 = vadd.f32 0.0, %v1596
      %v1598 = vpop.f32.mrb[0].mxu0
      %1599 = vmatprep.mubr.f32.mxu0 0.0
      %1600 = vmatmul.mubr.f32.gmra.mrb[0].mxu0 %v892
      %v1601 = vpop.f32.mrb[0].mxu0
      %v1602 = vadd.f32 0.0, %v1601
      %v1603 = vpop.f32.mrb[0].mxu0
      %1604 = vdwg.mxu0
      %v1605 = vadd.f32 %v1427, %v1527
      %v1606 = vadd.f32 %v1428, %v1532
      %v1607 = vadd.f32 %v1429, %v1537
      %v1608 = vadd.f32 %v1430, %v1542
      %v1609 = vadd.f32 %v1431, %v1547
      %v1610 = vadd.f32 %v1432, %v1552
      %v1611 = vadd.f32 %v1433, %v1557
      %v1612 = vadd.f32 %v1434, %v1562
      %v1613 = vadd.f32 %v1435, %v1567
      %v1614 = vadd.f32 %v1436, %v1572
      %v1615 = vadd.f32 %v1437, %v1577
      %v1616 = vadd.f32 %v1438, %v1582
      %v1617 = vadd.f32 %v1439, %v1587
      %v1618 = vadd.f32 %v1440, %v1592
      %v1619 = vadd.f32 %v1441, %v1597
      %v1620 = vadd.f32 %v1442, %v1602
      %v1621 = vld [vmem:[%s682 + $0x2] sm:$0xff]
      %v1622 = vld [vmem:[%s682 + $0xa] sm:$0xff]
      %v1623 = vld [vmem:[%s682 + $0x1a] sm:$0xff]
      %v1624 = vld [vmem:[%s682 + $0x22] sm:$0xff]
      %v1625 = vld [vmem:[%s682 + $0x32] sm:$0xff]
      %v1626 = vld [vmem:[%s682 + $0x3a] sm:$0xff]
      %v1627 = vld [vmem:[%s682 + $0x4a] sm:$0xff]
      %v1628 = vld [vmem:[%s682 + $0x52] sm:$0xff]
      %v1629 = vld [vmem:[%s682 + $0x62] sm:$0xff]
      %v1630 = vld [vmem:[%s682 + $0x6a] sm:$0xff]
      %v1631 = vld [vmem:[%s682 + $0x7a] sm:$0xff]
      %v1632 = vld [vmem:[%s682 + $0x82] sm:$0xff]
      %v1633 = vld [vmem:[%s682 + $0x92] sm:$0xff]
      %v1634 = vld [vmem:[%s682 + $0x9a] sm:$0xff]
      %v1635 = vld [vmem:[%s682 + $0xaa] sm:$0xff]
      %v1636 = vld [vmem:[%s682 + $0xb2] sm:$0xff]
      %s1637 = scalar_lea.vmem %s1, 896
      %v1638 = vld [vmem:[%s1637] sm:$0xff]
      %v1639 = vld [vmem:[%s1637 + $0x8] sm:$0xff]
      %v1640 = vld [vmem:[%s1637 + $0x10] sm:$0xff]
      %v1641 = vld [vmem:[%s1637 + $0x18] sm:$0xff]
      %v1642 = vld [vmem:[%s1637 + $0x20] sm:$0xff]
      %v1643 = vld [vmem:[%s1637 + $0x28] sm:$0xff]
      %v1644 = vld [vmem:[%s1637 + $0x30] sm:$0xff]
      %v1645 = vld [vmem:[%s1637 + $0x38] sm:$0xff]
      %v1646 = vld [vmem:[%s1637 + $0x40] sm:$0xff]
      %v1647 = vld [vmem:[%s1637 + $0x48] sm:$0xff]
      %v1648 = vld [vmem:[%s1637 + $0x50] sm:$0xff]
      %v1649 = vld [vmem:[%s1637 + $0x58] sm:$0xff]
      %v1650 = vld [vmem:[%s1637 + $0x60] sm:$0xff]
      %v1651 = vld [vmem:[%s1637 + $0x68] sm:$0xff]
      %v1652 = vld [vmem:[%s1637 + $0x70] sm:$0xff]
      %v1653 = vld [vmem:[%s1637 + $0x78] sm:$0xff]
      %1654 = vmatprep.subr.mxu0 0.0
      %1655 = vmatpush1.msra.mxu0 %v1638
      %1656 = vmatprep.subr.mxu0 0.0
      %1657 = vmatpush1.msra.mxu0 %v1639
      %1658 = vmatprep.subr.mxu0 0.0
      %1659 = vmatpush1.msra.mxu0 %v1640
      %1660 = vmatprep.subr.mxu0 0.0
      %1661 = vmatpush1.msra.mxu0 %v1641
      %1662 = vmatprep.subr.mxu0 0.0
      %1663 = vmatpush1.msra.mxu0 %v1642
      %1664 = vmatprep.subr.mxu0 0.0
      %1665 = vmatpush1.msra.mxu0 %v1643
      %1666 = vmatprep.subr.mxu0 0.0
      %1667 = vmatpush1.msra.mxu0 %v1644
      %1668 = vmatprep.subr.mxu0 0.0
      %1669 = vmatpush1.msra.mxu0 %v1645
      %1670 = vmatprep.subr.mxu0 0.0
      %1671 = vmatpush1.msra.mxu0 %v1646
      %1672 = vmatprep.subr.mxu0 0.0
      %1673 = vmatpush1.msra.mxu0 %v1647
      %1674 = vmatprep.subr.mxu0 0.0
      %1675 = vmatpush1.msra.mxu0 %v1648
      %1676 = vmatprep.subr.mxu0 0.0
      %1677 = vmatpush1.msra.mxu0 %v1649
      %1678 = vmatprep.subr.mxu0 0.0
      %1679 = vmatpush1.msra.mxu0 %v1650
      %1680 = vmatprep.subr.mxu0 0.0
      %1681 = vmatpush1.msra.mxu0 %v1651
      %1682 = vmatprep.subr.mxu0 0.0
      %1683 = vmatpush1.msra.mxu0 %v1652
      %1684 = vmatprep.subr.mxu0 0.0
      %1685 = vmatpush1.msra.mxu0 %v1653
      %1686 = vmatprep.subr.mxu0 0.0
      %1687 = vmatpush1.msra.mxu0 0.0
      %1688 = vmatprep.subr.mxu0 0.0
      %1689 = vmatpush1.msra.mxu0 0.0
      %1690 = vmatprep.subr.mxu0 0.0
      %1691 = vmatpush1.msra.mxu0 0.0
      %1692 = vmatprep.subr.mxu0 0.0
      %1693 = vmatpush1.msra.mxu0 0.0
      %1694 = vmatprep.subr.mxu0 0.0
      %1695 = vmatpush1.msra.mxu0 0.0
      %1696 = vmatprep.subr.mxu0 0.0
      %1697 = vmatpush1.msra.mxu0 0.0
      %1698 = vmatprep.subr.mxu0 0.0
      %1699 = vmatpush1.msra.mxu0 0.0
      %1700 = vmatprep.subr.mxu0 0.0
      %1701 = vmatpush1.msra.mxu0 0.0
      %1702 = vmatprep.subr.mxu0 0.0
      %1703 = vmatpush1.msra.mxu0 0.0
      %1704 = vmatprep.subr.mxu0 0.0
      %1705 = vmatpush1.msra.mxu0 0.0
      %1706 = vmatprep.subr.mxu0 0.0
      %1707 = vmatpush1.msra.mxu0 0.0
      %1708 = vmatprep.subr.mxu0 0.0
      %1709 = vmatpush1.msra.mxu0 0.0
      %1710 = vmatprep.subr.mxu0 0.0
      %1711 = vmatpush1.msra.mxu0 0.0
      %1712 = vmatprep.subr.mxu0 0.0
      %1713 = vmatpush1.msra.mxu0 0.0
      %1714 = vmatprep.subr.mxu0 0.0
      %1715 = vmatpush1.msra.mxu0 0.0
      %1716 = vmatprep.subr.mxu0 0.0
      %1717 = vmatpush1.msra.mxu0 0.0
      %1718 = vmatprep.mubr.f32.mxu0 0.0
      %1719 = vmatmul.mubr.f32.gmra.mrb[0].mxu0 %v1621
      %v1720 = vpop.f32.mrb[0].mxu0
      %v1721 = vadd.f32 0.0, %v1720
      %v1722 = vpop.f32.mrb[0].mxu0
      %1723 = vmatprep.mubr.f32.mxu0 0.0
      %1724 = vmatmul.mubr.f32.gmra.mrb[0].mxu0 %v1622
      %v1725 = vpop.f32.mrb[0].mxu0
      %v1726 = vadd.f32 0.0, %v1725
      %v1727 = vpop.f32.mrb[0].mxu0
      %1728 = vmatprep.mubr.f32.mxu0 0.0
      %1729 = vmatmul.mubr.f32.gmra.mrb[0].mxu0 %v1623
      %v1730 = vpop.f32.mrb[0].mxu0
      %v1731 = vadd.f32 0.0, %v1730
      %v1732 = vpop.f32.mrb[0].mxu0
      %1733 = vmatprep.mubr.f32.mxu0 0.0
      %1734 = vmatmul.mubr.f32.gmra.mrb[0].mxu0 %v1624
      %v1735 = vpop.f32.mrb[0].mxu0
      %v1736 = vadd.f32 0.0, %v1735
      %v1737 = vpop.f32.mrb[0].mxu0
      %1738 = vmatprep.mubr.f32.mxu0 0.0
      %1739 = vmatmul.mubr.f32.gmra.mrb[0].mxu0 %v1625
      %v1740 = vpop.f32.mrb[0].mxu0
      %v1741 = vadd.f32 0.0, %v1740
      %v1742 = vpop.f32.mrb[0].mxu0
      %1743 = vmatprep.mubr.f32.mxu0 0.0
      %1744 = vmatmul.mubr.f32.gmra.mrb[0].mxu0 %v1626
      %v1745 = vpop.f32.mrb[0].mxu0
      %v1746 = vadd.f32 0.0, %v1745
      %v1747 = vpop.f32.mrb[0].mxu0
      %1748 = vmatprep.mubr.f32.mxu0 0.0
      %1749 = vmatmul.mubr.f32.gmra.mrb[0].mxu0 %v1627
      %v1750 = vpop.f32.mrb[0].mxu0
      %v1751 = vadd.f32 0.0, %v1750
      %v1752 = vpop.f32.mrb[0].mxu0
      %1753 = vmatprep.mubr.f32.mxu0 0.0
      %1754 = vmatmul.mubr.f32.gmra.mrb[0].mxu0 %v1628
      %v1755 = vpop.f32.mrb[0].mxu0
      %v1756 = vadd.f32 0.0, %v1755
      %v1757 = vpop.f32.mrb[0].mxu0
      %1758 = vmatprep.mubr.f32.mxu0 0.0
      %1759 = vmatmul.mubr.f32.gmra.mrb[0].mxu0 %v1629
      %v1760 = vpop.f32.mrb[0].mxu0
      %v1761 = vadd.f32 0.0, %v1760
      %v1762 = vpop.f32.mrb[0].mxu0
      %1763 = vmatprep.mubr.f32.mxu0 0.0
      %1764 = vmatmul.mubr.f32.gmra.mrb[0].mxu0 %v1630
      %v1765 = vpop.f32.mrb[0].mxu0
      %v1766 = vadd.f32 0.0, %v1765
      %v1767 = vpop.f32.mrb[0].mxu0
      %1768 = vmatprep.mubr.f32.mxu0 0.0
      %1769 = vmatmul.mubr.f32.gmra.mrb[0].mxu0 %v1631
      %v1770 = vpop.f32.mrb[0].mxu0
      %v1771 = vadd.f32 0.0, %v1770
      %v1772 = vpop.f32.mrb[0].mxu0
      %1773 = vmatprep.mubr.f32.mxu0 0.0
      %1774 = vmatmul.mubr.f32.gmra.mrb[0].mxu0 %v1632
      %v1775 = vpop.f32.mrb[0].mxu0
      %v1776 = vadd.f32 0.0, %v1775
      %v1777 = vpop.f32.mrb[0].mxu0
      %1778 = vmatprep.mubr.f32.mxu0 0.0
      %1779 = vmatmul.mubr.f32.gmra.mrb[0].mxu0 %v1633
      %v1780 = vpop.f32.mrb[0].mxu0
      %v1781 = vadd.f32 0.0, %v1780
      %v1782 = vpop.f32.mrb[0].mxu0
      %1783 = vmatprep.mubr.f32.mxu0 0.0
      %1784 = vmatmul.mubr.f32.gmra.mrb[0].mxu0 %v1634
      %v1785 = vpop.f32.mrb[0].mxu0
      %v1786 = vadd.f32 0.0, %v1785
      %v1787 = vpop.f32.mrb[0].mxu0
      %1788 = vmatprep.mubr.f32.mxu0 0.0
      %1789 = vmatmul.mubr.f32.gmra.mrb[0].mxu0 %v1635
      %v1790 = vpop.f32.mrb[0].mxu0
      %v1791 = vadd.f32 0.0, %v1790
      %v1792 = vpop.f32.mrb[0].mxu0
      %1793 = vmatprep.mubr.f32.mxu0 0.0
      %1794 = vmatmul.mubr.f32.gmra.mrb[0].mxu0 %v1636
      %v1795 = vpop.f32.mrb[0].mxu0
      %v1796 = vadd.f32 0.0, %v1795
      %v1797 = vpop.f32.mrb[0].mxu0
      %1798 = vdwg.mxu0
      %v1799 = vadd.f32 %v1605, %v1721
      %v1800 = vadd.f32 %v1606, %v1726
      %v1801 = vadd.f32 %v1607, %v1731
      %v1802 = vadd.f32 %v1608, %v1736
      %v1803 = vadd.f32 %v1609, %v1741
      %v1804 = vadd.f32 %v1610, %v1746
      %v1805 = vadd.f32 %v1611, %v1751
      %v1806 = vadd.f32 %v1612, %v1756
      %v1807 = vadd.f32 %v1613, %v1761
      %v1808 = vadd.f32 %v1614, %v1766
      %v1809 = vadd.f32 %v1615, %v1771
      %v1810 = vadd.f32 %v1616, %v1776
      %v1811 = vadd.f32 %v1617, %v1781
      %v1812 = vadd.f32 %v1618, %v1786
      %v1813 = vadd.f32 %v1619, %v1791
      %v1814 = vadd.f32 %v1620, %v1796
      %1815 = vst [vmem:[%s148] sm:$0xff] %v1055
      %1816 = vst [vmem:[%s148 + $0x8] sm:$0xff] %v1799
      %1817 = vst [vmem:[%s148 + $0x10] sm:$0xff] %v1056
      %1818 = vst [vmem:[%s148 + $0x18] sm:$0xff] %v1800
      %1819 = vst [vmem:[%s148 + $0x40] sm:$0xff] %v1057
      %1820 = vst [vmem:[%s148 + $0x48] sm:$0xff] %v1801
      %1821 = vst [vmem:[%s148 + $0x50] sm:$0xff] %v1058
      %1822 = vst [vmem:[%s148 + $0x58] sm:$0xff] %v1802
      %1823 = vst [vmem:[%s148 + $0x80] sm:$0xff] %v1059
      %1824 = vst [vmem:[%s148 + $0x88] sm:$0xff] %v1803
      %1825 = vst [vmem:[%s148 + $0x90] sm:$0xff] %v1060
      %1826 = vst [vmem:[%s148 + $0x98] sm:$0xff] %v1804
      %1827 = vst [vmem:[%s148 + $0xc0] sm:$0xff] %v1061
      %1828 = vst [vmem:[%s148 + $0xc8] sm:$0xff] %v1805
      %1829 = vst [vmem:[%s148 + $0xd0] sm:$0xff] %v1062
      %1830 = vst [vmem:[%s148 + $0xd8] sm:$0xff] %v1806
      %1831 = vst [vmem:[%s148 + $0x100] sm:$0xff] %v1063
      %1832 = vst [vmem:[%s148 + $0x108] sm:$0xff] %v1807
      %1833 = vst [vmem:[%s148 + $0x110] sm:$0xff] %v1064
      %1834 = vst [vmem:[%s148 + $0x118] sm:$0xff] %v1808
      %1835 = vst [vmem:[%s148 + $0x140] sm:$0xff] %v1065
      %1836 = vst [vmem:[%s148 + $0x148] sm:$0xff] %v1809
      %1837 = vst [vmem:[%s148 + $0x150] sm:$0xff] %v1066
      %1838 = vst [vmem:[%s148 + $0x158] sm:$0xff] %v1810
      %1839 = vst [vmem:[%s148 + $0x180] sm:$0xff] %v1067
      %1840 = vst [vmem:[%s148 + $0x188] sm:$0xff] %v1811
      %1841 = vst [vmem:[%s148 + $0x190] sm:$0xff] %v1068
      %1842 = vst [vmem:[%s148 + $0x198] sm:$0xff] %v1812
      %1843 = vst [vmem:[%s148 + $0x1c0] sm:$0xff] %v1069
      %1844 = vst [vmem:[%s148 + $0x1c8] sm:$0xff] %v1813
      %1845 = vst [vmem:[%s148 + $0x1d0] sm:$0xff] %v1070
      %1846 = vst [vmem:[%s148 + $0x1d8] sm:$0xff] %v1814
      %v1847 = vld [vmem:[%s682] sm:$0xff]
      %v1848 = vld [vmem:[%s682 + $0x8] sm:$0xff]
      %v1849 = vld [vmem:[%s682 + $0x18] sm:$0xff]
      %v1850 = vld [vmem:[%s682 + $0x20] sm:$0xff]
      %v1851 = vld [vmem:[%s682 + $0x30] sm:$0xff]
      %v1852 = vld [vmem:[%s682 + $0x38] sm:$0xff]
      %v1853 = vld [vmem:[%s682 + $0x48] sm:$0xff]
      %v1854 = vld [vmem:[%s682 + $0x50] sm:$0xff]
      %v1855 = vld [vmem:[%s682 + $0x60] sm:$0xff]
      %v1856 = vld [vmem:[%s682 + $0x68] sm:$0xff]
      %v1857 = vld [vmem:[%s682 + $0x78] sm:$0xff]
      %v1858 = vld [vmem:[%s682 + $0x80] sm:$0xff]
      %v1859 = vld [vmem:[%s682 + $0x90] sm:$0xff]
      %v1860 = vld [vmem:[%s682 + $0x98] sm:$0xff]
      %v1861 = vld [vmem:[%s682 + $0xa8] sm:$0xff]
      %v1862 = vld [vmem:[%s682 + $0xb0] sm:$0xff]
      %s1863 = scalar_lea.vmem %s1, 1024
      %v1864 = vld [vmem:[%s1863] sm:$0xff]
      %v1865 = vld [vmem:[%s1863 + $0x8] sm:$0xff]
      %v1866 = vld [vmem:[%s1863 + $0x10] sm:$0xff]
      %v1867 = vld [vmem:[%s1863 + $0x18] sm:$0xff]
      %v1868 = vld [vmem:[%s1863 + $0x20] sm:$0xff]
      %v1869 = vld [vmem:[%s1863 + $0x28] sm:$0xff]
      %v1870 = vld [vmem:[%s1863 + $0x30] sm:$0xff]
      %v1871 = vld [vmem:[%s1863 + $0x38] sm:$0xff]
      %v1872 = vld [vmem:[%s1863 + $0x40] sm:$0xff]
      %v1873 = vld [vmem:[%s1863 + $0x48] sm:$0xff]
      %v1874 = vld [vmem:[%s1863 + $0x50] sm:$0xff]
      %v1875 = vld [vmem:[%s1863 + $0x58] sm:$0xff]
      %v1876 = vld [vmem:[%s1863 + $0x60] sm:$0xff]
      %v1877 = vld [vmem:[%s1863 + $0x68] sm:$0xff]
      %v1878 = vld [vmem:[%s1863 + $0x70] sm:$0xff]
      %v1879 = vld [vmem:[%s1863 + $0x78] sm:$0xff]
      %1880 = vmatprep.subr.mxu0 0.0
      %1881 = vmatpush1.msra.mxu0 %v1864
      %1882 = vmatprep.subr.mxu0 0.0
      %1883 = vmatpush1.msra.mxu0 %v1865
      %1884 = vmatprep.subr.mxu0 0.0
      %1885 = vmatpush1.msra.mxu0 %v1866
      %1886 = vmatprep.subr.mxu0 0.0
      %1887 = vmatpush1.msra.mxu0 %v1867
      %1888 = vmatprep.subr.mxu0 0.0
      %1889 = vmatpush1.msra.mxu0 %v1868
      %1890 = vmatprep.subr.mxu0 0.0
      %1891 = vmatpush1.msra.mxu0 %v1869
      %1892 = vmatprep.subr.mxu0 0.0
      %1893 = vmatpush1.msra.mxu0 %v1870
      %1894 = vmatprep.subr.mxu0 0.0
      %1895 = vmatpush1.msra.mxu0 %v1871
      %1896 = vmatprep.subr.mxu0 0.0
      %1897 = vmatpush1.msra.mxu0 %v1872
      %1898 = vmatprep.subr.mxu0 0.0
      %1899 = vmatpush1.msra.mxu0 %v1873
      %1900 = vmatprep.subr.mxu0 0.0
      %1901 = vmatpush1.msra.mxu0 %v1874
      %1902 = vmatprep.subr.mxu0 0.0
      %1903 = vmatpush1.msra.mxu0 %v1875
      %1904 = vmatprep.subr.mxu0 0.0
      %1905 = vmatpush1.msra.mxu0 %v1876
      %1906 = vmatprep.subr.mxu0 0.0
      %1907 = vmatpush1.msra.mxu0 %v1877
      %1908 = vmatprep.subr.mxu0 0.0
      %1909 = vmatpush1.msra.mxu0 %v1878
      %1910 = vmatprep.subr.mxu0 0.0
      %1911 = vmatpush1.msra.mxu0 %v1879
      %1912 = vmatprep.subr.mxu0 0.0
      %1913 = vmatpush1.msra.mxu0 0.0
      %1914 = vmatprep.subr.mxu0 0.0
      %1915 = vmatpush1.msra.mxu0 0.0
      %1916 = vmatprep.subr.mxu0 0.0
      %1917 = vmatpush1.msra.mxu0 0.0
      %1918 = vmatprep.subr.mxu0 0.0
      %1919 = vmatpush1.msra.mxu0 0.0
      %1920 = vmatprep.subr.mxu0 0.0
      %1921 = vmatpush1.msra.mxu0 0.0
      %1922 = vmatprep.subr.mxu0 0.0
      %1923 = vmatpush1.msra.mxu0 0.0
      %1924 = vmatprep.subr.mxu0 0.0
      %1925 = vmatpush1.msra.mxu0 0.0
      %1926 = vmatprep.subr.mxu0 0.0
      %1927 = vmatpush1.msra.mxu0 0.0
      %1928 = vmatprep.subr.mxu0 0.0
      %1929 = vmatpush1.msra.mxu0 0.0
      %1930 = vmatprep.subr.mxu0 0.0
      %1931 = vmatpush1.msra.mxu0 0.0
      %1932 = vmatprep.subr.mxu0 0.0
      %1933 = vmatpush1.msra.mxu0 0.0
      %1934 = vmatprep.subr.mxu0 0.0
      %1935 = vmatpush1.msra.mxu0 0.0
      %1936 = vmatprep.subr.mxu0 0.0
      %1937 = vmatpush1.msra.mxu0 0.0
      %1938 = vmatprep.subr.mxu0 0.0
      %1939 = vmatpush1.msra.mxu0 0.0
      %1940 = vmatprep.subr.mxu0 0.0
      %1941 = vmatpush1.msra.mxu0 0.0
      %1942 = vmatprep.subr.mxu0 0.0
      %1943 = vmatpush1.msra.mxu0 0.0
      %1944 = vmatprep.mubr.f32.mxu0 0.0
      %1945 = vmatmul.mubr.f32.gmra.mrb[0].mxu0 %v1847
      %v1946 = vpop.f32.mrb[0].mxu0
      %v1947 = vadd.f32 0.0, %v1946
      %v1948 = vpop.f32.mrb[0].mxu0
      %1949 = vmatprep.mubr.f32.mxu0 0.0
      %1950 = vmatmul.mubr.f32.gmra.mrb[0].mxu0 %v1848
      %v1951 = vpop.f32.mrb[0].mxu0
      %v1952 = vadd.f32 0.0, %v1951
      %v1953 = vpop.f32.mrb[0].mxu0
      %1954 = vmatprep.mubr.f32.mxu0 0.0
      %1955 = vmatmul.mubr.f32.gmra.mrb[0].mxu0 %v1849
      %v1956 = vpop.f32.mrb[0].mxu0
      %v1957 = vadd.f32 0.0, %v1956
      %v1958 = vpop.f32.mrb[0].mxu0
      %1959 = vmatprep.mubr.f32.mxu0 0.0
      %1960 = vmatmul.mubr.f32.gmra.mrb[0].mxu0 %v1850
      %v1961 = vpop.f32.mrb[0].mxu0
      %v1962 = vadd.f32 0.0, %v1961
      %v1963 = vpop.f32.mrb[0].mxu0
      %1964 = vmatprep.mubr.f32.mxu0 0.0
      %1965 = vmatmul.mubr.f32.gmra.mrb[0].mxu0 %v1851
      %v1966 = vpop.f32.mrb[0].mxu0
      %v1967 = vadd.f32 0.0, %v1966
      %v1968 = vpop.f32.mrb[0].mxu0
      %1969 = vmatprep.mubr.f32.mxu0 0.0
      %1970 = vmatmul.mubr.f32.gmra.mrb[0].mxu0 %v1852
      %v1971 = vpop.f32.mrb[0].mxu0
      %v1972 = vadd.f32 0.0, %v1971
      %v1973 = vpop.f32.mrb[0].mxu0
      %1974 = vmatprep.mubr.f32.mxu0 0.0
      %1975 = vmatmul.mubr.f32.gmra.mrb[0].mxu0 %v1853
      %v1976 = vpop.f32.mrb[0].mxu0
      %v1977 = vadd.f32 0.0, %v1976
      %v1978 = vpop.f32.mrb[0].mxu0
      %1979 = vmatprep.mubr.f32.mxu0 0.0
      %1980 = vmatmul.mubr.f32.gmra.mrb[0].mxu0 %v1854
      %v1981 = vpop.f32.mrb[0].mxu0
      %v1982 = vadd.f32 0.0, %v1981
      %v1983 = vpop.f32.mrb[0].mxu0
      %1984 = vmatprep.mubr.f32.mxu0 0.0
      %1985 = vmatmul.mubr.f32.gmra.mrb[0].mxu0 %v1855
      %v1986 = vpop.f32.mrb[0].mxu0
      %v1987 = vadd.f32 0.0, %v1986
      %v1988 = vpop.f32.mrb[0].mxu0
      %1989 = vmatprep.mubr.f32.mxu0 0.0
      %1990 = vmatmul.mubr.f32.gmra.mrb[0].mxu0 %v1856
      %v1991 = vpop.f32.mrb[0].mxu0
      %v1992 = vadd.f32 0.0, %v1991
      %v1993 = vpop.f32.mrb[0].mxu0
      %1994 = vmatprep.mubr.f32.mxu0 0.0
      %1995 = vmatmul.mubr.f32.gmra.mrb[0].mxu0 %v1857
      %v1996 = vpop.f32.mrb[0].mxu0
      %v1997 = vadd.f32 0.0, %v1996
      %v1998 = vpop.f32.mrb[0].mxu0
      %1999 = vmatprep.mubr.f32.mxu0 0.0
      %2000 = vmatmul.mubr.f32.gmra.mrb[0].mxu0 %v1858
      %v2001 = vpop.f32.mrb[0].mxu0
      %v2002 = vadd.f32 0.0, %v2001
      %v2003 = vpop.f32.mrb[0].mxu0
      %2004 = vmatprep.mubr.f32.mxu0 0.0
      %2005 = vmatmul.mubr.f32.gmra.mrb[0].mxu0 %v1859
      %v2006 = vpop.f32.mrb[0].mxu0
      %v2007 = vadd.f32 0.0, %v2006
      %v2008 = vpop.f32.mrb[0].mxu0
      %2009 = vmatprep.mubr.f32.mxu0 0.0
      %2010 = vmatmul.mubr.f32.gmra.mrb[0].mxu0 %v1860
      %v2011 = vpop.f32.mrb[0].mxu0
      %v2012 = vadd.f32 0.0, %v2011
      %v2013 = vpop.f32.mrb[0].mxu0
      %2014 = vmatprep.mubr.f32.mxu0 0.0
      %2015 = vmatmul.mubr.f32.gmra.mrb[0].mxu0 %v1861
      %v2016 = vpop.f32.mrb[0].mxu0
      %v2017 = vadd.f32 0.0, %v2016
      %v2018 = vpop.f32.mrb[0].mxu0
      %2019 = vmatprep.mubr.f32.mxu0 0.0
      %2020 = vmatmul.mubr.f32.gmra.mrb[0].mxu0 %v1862
      %v2021 = vpop.f32.mrb[0].mxu0
      %v2022 = vadd.f32 0.0, %v2021
      %v2023 = vpop.f32.mrb[0].mxu0
      %2024 = vdwg.mxu0
      %v2025 = vadd.f32 %v294, %v1947
      %v2026 = vadd.f32 %v294, %v1952
      %v2027 = vadd.f32 %v294, %v1957
      %v2028 = vadd.f32 %v294, %v1962
      %v2029 = vadd.f32 %v294, %v1967
      %v2030 = vadd.f32 %v294, %v1972
      %v2031 = vadd.f32 %v294, %v1977
      %v2032 = vadd.f32 %v294, %v1982
      %v2033 = vadd.f32 %v294, %v1987
      %v2034 = vadd.f32 %v294, %v1992
      %v2035 = vadd.f32 %v294, %v1997
      %v2036 = vadd.f32 %v294, %v2002
      %v2037 = vadd.f32 %v294, %v2007
      %v2038 = vadd.f32 %v294, %v2012
      %v2039 = vadd.f32 %v294, %v2017
      %v2040 = vadd.f32 %v294, %v2022
      %v2041 = vld [vmem:[%s682 + $0x1] sm:$0xff]
      %v2042 = vld [vmem:[%s682 + $0x9] sm:$0xff]
      %v2043 = vld [vmem:[%s682 + $0x19] sm:$0xff]
      %v2044 = vld [vmem:[%s682 + $0x21] sm:$0xff]
      %v2045 = vld [vmem:[%s682 + $0x31] sm:$0xff]
      %v2046 = vld [vmem:[%s682 + $0x39] sm:$0xff]
      %v2047 = vld [vmem:[%s682 + $0x49] sm:$0xff]
      %v2048 = vld [vmem:[%s682 + $0x51] sm:$0xff]
      %v2049 = vld [vmem:[%s682 + $0x61] sm:$0xff]
      %v2050 = vld [vmem:[%s682 + $0x69] sm:$0xff]
      %v2051 = vld [vmem:[%s682 + $0x79] sm:$0xff]
      %v2052 = vld [vmem:[%s682 + $0x81] sm:$0xff]
      %v2053 = vld [vmem:[%s682 + $0x91] sm:$0xff]
      %v2054 = vld [vmem:[%s682 + $0x99] sm:$0xff]
      %v2055 = vld [vmem:[%s682 + $0xa9] sm:$0xff]
      %v2056 = vld [vmem:[%s682 + $0xb1] sm:$0xff]
      %s2057 = scalar_lea.vmem %s1, 1152
      %v2058 = vld [vmem:[%s2057] sm:$0xff]
      %v2059 = vld [vmem:[%s2057 + $0x8] sm:$0xff]
      %v2060 = vld [vmem:[%s2057 + $0x10] sm:$0xff]
      %v2061 = vld [vmem:[%s2057 + $0x18] sm:$0xff]
      %v2062 = vld [vmem:[%s2057 + $0x20] sm:$0xff]
      %v2063 = vld [vmem:[%s2057 + $0x28] sm:$0xff]
      %v2064 = vld [vmem:[%s2057 + $0x30] sm:$0xff]
      %v2065 = vld [vmem:[%s2057 + $0x38] sm:$0xff]
      %v2066 = vld [vmem:[%s2057 + $0x40] sm:$0xff]
      %v2067 = vld [vmem:[%s2057 + $0x48] sm:$0xff]
      %v2068 = vld [vmem:[%s2057 + $0x50] sm:$0xff]
      %v2069 = vld [vmem:[%s2057 + $0x58] sm:$0xff]
      %v2070 = vld [vmem:[%s2057 + $0x60] sm:$0xff]
      %v2071 = vld [vmem:[%s2057 + $0x68] sm:$0xff]
      %v2072 = vld [vmem:[%s2057 + $0x70] sm:$0xff]
      %v2073 = vld [vmem:[%s2057 + $0x78] sm:$0xff]
      %2074 = vmatprep.subr.mxu0 0.0
      %2075 = vmatpush1.msra.mxu0 %v2058
      %2076 = vmatprep.subr.mxu0 0.0
      %2077 = vmatpush1.msra.mxu0 %v2059
      %2078 = vmatprep.subr.mxu0 0.0
      %2079 = vmatpush1.msra.mxu0 %v2060
      %2080 = vmatprep.subr.mxu0 0.0
      %2081 = vmatpush1.msra.mxu0 %v2061
      %2082 = vmatprep.subr.mxu0 0.0
      %2083 = vmatpush1.msra.mxu0 %v2062
      %2084 = vmatprep.subr.mxu0 0.0
      %2085 = vmatpush1.msra.mxu0 %v2063
      %2086 = vmatprep.subr.mxu0 0.0
      %2087 = vmatpush1.msra.mxu0 %v2064
      %2088 = vmatprep.subr.mxu0 0.0
      %2089 = vmatpush1.msra.mxu0 %v2065
      %2090 = vmatprep.subr.mxu0 0.0
      %2091 = vmatpush1.msra.mxu0 %v2066
      %2092 = vmatprep.subr.mxu0 0.0
      %2093 = vmatpush1.msra.mxu0 %v2067
      %2094 = vmatprep.subr.mxu0 0.0
      %2095 = vmatpush1.msra.mxu0 %v2068
      %2096 = vmatprep.subr.mxu0 0.0
      %2097 = vmatpush1.msra.mxu0 %v2069
      %2098 = vmatprep.subr.mxu0 0.0
      %2099 = vmatpush1.msra.mxu0 %v2070
      %2100 = vmatprep.subr.mxu0 0.0
      %2101 = vmatpush1.msra.mxu0 %v2071
      %2102 = vmatprep.subr.mxu0 0.0
      %2103 = vmatpush1.msra.mxu0 %v2072
      %2104 = vmatprep.subr.mxu0 0.0
      %2105 = vmatpush1.msra.mxu0 %v2073
      %2106 = vmatprep.subr.mxu0 0.0
      %2107 = vmatpush1.msra.mxu0 0.0
      %2108 = vmatprep.subr.mxu0 0.0
      %2109 = vmatpush1.msra.mxu0 0.0
      %2110 = vmatprep.subr.mxu0 0.0
      %2111 = vmatpush1.msra.mxu0 0.0
      %2112 = vmatprep.subr.mxu0 0.0
      %2113 = vmatpush1.msra.mxu0 0.0
      %2114 = vmatprep.subr.mxu0 0.0
      %2115 = vmatpush1.msra.mxu0 0.0
      %2116 = vmatprep.subr.mxu0 0.0
      %2117 = vmatpush1.msra.mxu0 0.0
      %2118 = vmatprep.subr.mxu0 0.0
      %2119 = vmatpush1.msra.mxu0 0.0
      %2120 = vmatprep.subr.mxu0 0.0
      %2121 = vmatpush1.msra.mxu0 0.0
      %2122 = vmatprep.subr.mxu0 0.0
      %2123 = vmatpush1.msra.mxu0 0.0
      %2124 = vmatprep.subr.mxu0 0.0
      %2125 = vmatpush1.msra.mxu0 0.0
      %2126 = vmatprep.subr.mxu0 0.0
      %2127 = vmatpush1.msra.mxu0 0.0
      %2128 = vmatprep.subr.mxu0 0.0
      %2129 = vmatpush1.msra.mxu0 0.0
      %2130 = vmatprep.subr.mxu0 0.0
      %2131 = vmatpush1.msra.mxu0 0.0
      %2132 = vmatprep.subr.mxu0 0.0
      %2133 = vmatpush1.msra.mxu0 0.0
      %2134 = vmatprep.subr.mxu0 0.0
      %2135 = vmatpush1.msra.mxu0 0.0
      %2136 = vmatprep.subr.mxu0 0.0
      %2137 = vmatpush1.msra.mxu0 0.0
      %2138 = vmatprep.mubr.f32.mxu0 0.0
      %2139 = vmatmul.mubr.f32.gmra.mrb[0].mxu0 %v2041
      %v2140 = vpop.f32.mrb[0].mxu0
      %v2141 = vadd.f32 0.0, %v2140
      %v2142 = vpop.f32.mrb[0].mxu0
      %2143 = vmatprep.mubr.f32.mxu0 0.0
      %2144 = vmatmul.mubr.f32.gmra.mrb[0].mxu0 %v2042
      %v2145 = vpop.f32.mrb[0].mxu0
      %v2146 = vadd.f32 0.0, %v2145
      %v2147 = vpop.f32.mrb[0].mxu0
      %2148 = vmatprep.mubr.f32.mxu0 0.0
      %2149 = vmatmul.mubr.f32.gmra.mrb[0].mxu0 %v2043
      %v2150 = vpop.f32.mrb[0].mxu0
      %v2151 = vadd.f32 0.0, %v2150
      %v2152 = vpop.f32.mrb[0].mxu0
      %2153 = vmatprep.mubr.f32.mxu0 0.0
      %2154 = vmatmul.mubr.f32.gmra.mrb[0].mxu0 %v2044
      %v2155 = vpop.f32.mrb[0].mxu0
      %v2156 = vadd.f32 0.0, %v2155
      %v2157 = vpop.f32.mrb[0].mxu0
      %2158 = vmatprep.mubr.f32.mxu0 0.0
      %2159 = vmatmul.mubr.f32.gmra.mrb[0].mxu0 %v2045
      %v2160 = vpop.f32.mrb[0].mxu0
      %v2161 = vadd.f32 0.0, %v2160
      %v2162 = vpop.f32.mrb[0].mxu0
      %2163 = vmatprep.mubr.f32.mxu0 0.0
      %2164 = vmatmul.mubr.f32.gmra.mrb[0].mxu0 %v2046
      %v2165 = vpop.f32.mrb[0].mxu0
      %v2166 = vadd.f32 0.0, %v2165
      %v2167 = vpop.f32.mrb[0].mxu0
      %2168 = vmatprep.mubr.f32.mxu0 0.0
      %2169 = vmatmul.mubr.f32.gmra.mrb[0].mxu0 %v2047
      %v2170 = vpop.f32.mrb[0].mxu0
      %v2171 = vadd.f32 0.0, %v2170
      %v2172 = vpop.f32.mrb[0].mxu0
      %2173 = vmatprep.mubr.f32.mxu0 0.0
      %2174 = vmatmul.mubr.f32.gmra.mrb[0].mxu0 %v2048
      %v2175 = vpop.f32.mrb[0].mxu0
      %v2176 = vadd.f32 0.0, %v2175
      %v2177 = vpop.f32.mrb[0].mxu0
      %2178 = vmatprep.mubr.f32.mxu0 0.0
      %2179 = vmatmul.mubr.f32.gmra.mrb[0].mxu0 %v2049
      %v2180 = vpop.f32.mrb[0].mxu0
      %v2181 = vadd.f32 0.0, %v2180
      %v2182 = vpop.f32.mrb[0].mxu0
      %2183 = vmatprep.mubr.f32.mxu0 0.0
      %2184 = vmatmul.mubr.f32.gmra.mrb[0].mxu0 %v2050
      %v2185 = vpop.f32.mrb[0].mxu0
      %v2186 = vadd.f32 0.0, %v2185
      %v2187 = vpop.f32.mrb[0].mxu0
      %2188 = vmatprep.mubr.f32.mxu0 0.0
      %2189 = vmatmul.mubr.f32.gmra.mrb[0].mxu0 %v2051
      %v2190 = vpop.f32.mrb[0].mxu0
      %v2191 = vadd.f32 0.0, %v2190
      %v2192 = vpop.f32.mrb[0].mxu0
      %2193 = vmatprep.mubr.f32.mxu0 0.0
      %2194 = vmatmul.mubr.f32.gmra.mrb[0].mxu0 %v2052
      %v2195 = vpop.f32.mrb[0].mxu0
      %v2196 = vadd.f32 0.0, %v2195
      %v2197 = vpop.f32.mrb[0].mxu0
      %2198 = vmatprep.mubr.f32.mxu0 0.0
      %2199 = vmatmul.mubr.f32.gmra.mrb[0].mxu0 %v2053
      %v2200 = vpop.f32.mrb[0].mxu0
      %v2201 = vadd.f32 0.0, %v2200
      %v2202 = vpop.f32.mrb[0].mxu0
      %2203 = vmatprep.mubr.f32.mxu0 0.0
      %2204 = vmatmul.mubr.f32.gmra.mrb[0].mxu0 %v2054
      %v2205 = vpop.f32.mrb[0].mxu0
      %v2206 = vadd.f32 0.0, %v2205
      %v2207 = vpop.f32.mrb[0].mxu0
      %2208 = vmatprep.mubr.f32.mxu0 0.0
      %2209 = vmatmul.mubr.f32.gmra.mrb[0].mxu0 %v2055
      %v2210 = vpop.f32.mrb[0].mxu0
      %v2211 = vadd.f32 0.0, %v2210
      %v2212 = vpop.f32.mrb[0].mxu0
      %2213 = vmatprep.mubr.f32.mxu0 0.0
      %2214 = vmatmul.mubr.f32.gmra.mrb[0].mxu0 %v2056
      %v2215 = vpop.f32.mrb[0].mxu0
      %v2216 = vadd.f32 0.0, %v2215
      %v2217 = vpop.f32.mrb[0].mxu0
      %2218 = vdwg.mxu0
      %v2219 = vadd.f32 %v2025, %v2141
      %v2220 = vadd.f32 %v2026, %v2146
      %v2221 = vadd.f32 %v2027, %v2151
      %v2222 = vadd.f32 %v2028, %v2156
      %v2223 = vadd.f32 %v2029, %v2161
      %v2224 = vadd.f32 %v2030, %v2166
      %v2225 = vadd.f32 %v2031, %v2171
      %v2226 = vadd.f32 %v2032, %v2176
      %v2227 = vadd.f32 %v2033, %v2181
      %v2228 = vadd.f32 %v2034, %v2186
      %v2229 = vadd.f32 %v2035, %v2191
      %v2230 = vadd.f32 %v2036, %v2196
      %v2231 = vadd.f32 %v2037, %v2201
      %v2232 = vadd.f32 %v2038, %v2206
      %v2233 = vadd.f32 %v2039, %v2211
      %v2234 = vadd.f32 %v2040, %v2216
      %s2235 = scalar_lea.vmem [#allocation2], 48
      %v2236 = vld [vmem:[%s2235] sm:$0xff]
      %v2237 = vld [vmem:[%s2235 + $0x8] sm:$0xff]
      %v2238 = vld [vmem:[%s2235 + $0x18] sm:$0xff]
      %v2239 = vld [vmem:[%s2235 + $0x20] sm:$0xff]
      %v2240 = vld [vmem:[%s2235 + $0x30] sm:$0xff]
      %v2241 = vld [vmem:[%s2235 + $0x38] sm:$0xff]
      %v2242 = vld [vmem:[%s2235 + $0x48] sm:$0xff]
      %v2243 = vld [vmem:[%s2235 + $0x50] sm:$0xff]
      %v2244 = vld [vmem:[%s2235 + $0x60] sm:$0xff]
      %v2245 = vld [vmem:[%s2235 + $0x68] sm:$0xff]
      %v2246 = vld [vmem:[%s2235 + $0x78] sm:$0xff]
      %v2247 = vld [vmem:[%s2235 + $0x80] sm:$0xff]
      %v2248 = vld [vmem:[%s2235 + $0x90] sm:$0xff]
      %v2249 = vld [vmem:[%s2235 + $0x98] sm:$0xff]
      %v2250 = vld [vmem:[%s2235 + $0xa8] sm:$0xff]
      %v2251 = vld [vmem:[%s2235 + $0xb0] sm:$0xff]
      %s2252 = scalar_lea.vmem %s1, 1280
      %v2253 = vld [vmem:[%s2252] sm:$0xff]
      %v2254 = vld [vmem:[%s2252 + $0x8] sm:$0xff]
      %v2255 = vld [vmem:[%s2252 + $0x10] sm:$0xff]
      %v2256 = vld [vmem:[%s2252 + $0x18] sm:$0xff]
      %v2257 = vld [vmem:[%s2252 + $0x20] sm:$0xff]
      %v2258 = vld [vmem:[%s2252 + $0x28] sm:$0xff]
      %v2259 = vld [vmem:[%s2252 + $0x30] sm:$0xff]
      %v2260 = vld [vmem:[%s2252 + $0x38] sm:$0xff]
      %v2261 = vld [vmem:[%s2252 + $0x40] sm:$0xff]
      %v2262 = vld [vmem:[%s2252 + $0x48] sm:$0xff]
      %v2263 = vld [vmem:[%s2252 + $0x50] sm:$0xff]
      %v2264 = vld [vmem:[%s2252 + $0x58] sm:$0xff]
      %v2265 = vld [vmem:[%s2252 + $0x60] sm:$0xff]
      %v2266 = vld [vmem:[%s2252 + $0x68] sm:$0xff]
      %v2267 = vld [vmem:[%s2252 + $0x70] sm:$0xff]
      %v2268 = vld [vmem:[%s2252 + $0x78] sm:$0xff]
      %2269 = vmatprep.subr.mxu0 0.0
      %2270 = vmatpush1.msra.mxu0 %v2253
      %2271 = vmatprep.subr.mxu0 0.0
      %2272 = vmatpush1.msra.mxu0 %v2254
      %2273 = vmatprep.subr.mxu0 0.0
      %2274 = vmatpush1.msra.mxu0 %v2255
      %2275 = vmatprep.subr.mxu0 0.0
      %2276 = vmatpush1.msra.mxu0 %v2256
      %2277 = vmatprep.subr.mxu0 0.0
      %2278 = vmatpush1.msra.mxu0 %v2257
      %2279 = vmatprep.subr.mxu0 0.0
      %2280 = vmatpush1.msra.mxu0 %v2258
      %2281 = vmatprep.subr.mxu0 0.0
      %2282 = vmatpush1.msra.mxu0 %v2259
      %2283 = vmatprep.subr.mxu0 0.0
      %2284 = vmatpush1.msra.mxu0 %v2260
      %2285 = vmatprep.subr.mxu0 0.0
      %2286 = vmatpush1.msra.mxu0 %v2261
      %2287 = vmatprep.subr.mxu0 0.0
      %2288 = vmatpush1.msra.mxu0 %v2262
      %2289 = vmatprep.subr.mxu0 0.0
      %2290 = vmatpush1.msra.mxu0 %v2263
      %2291 = vmatprep.subr.mxu0 0.0
      %2292 = vmatpush1.msra.mxu0 %v2264
      %2293 = vmatprep.subr.mxu0 0.0
      %2294 = vmatpush1.msra.mxu0 %v2265
      %2295 = vmatprep.subr.mxu0 0.0
      %2296 = vmatpush1.msra.mxu0 %v2266
      %2297 = vmatprep.subr.mxu0 0.0
      %2298 = vmatpush1.msra.mxu0 %v2267
      %2299 = vmatprep.subr.mxu0 0.0
      %2300 = vmatpush1.msra.mxu0 %v2268
      %2301 = vmatprep.subr.mxu0 0.0
      %2302 = vmatpush1.msra.mxu0 0.0
      %2303 = vmatprep.subr.mxu0 0.0
      %2304 = vmatpush1.msra.mxu0 0.0
      %2305 = vmatprep.subr.mxu0 0.0
      %2306 = vmatpush1.msra.mxu0 0.0
      %2307 = vmatprep.subr.mxu0 0.0
      %2308 = vmatpush1.msra.mxu0 0.0
      %2309 = vmatprep.subr.mxu0 0.0
      %2310 = vmatpush1.msra.mxu0 0.0
      %2311 = vmatprep.subr.mxu0 0.0
      %2312 = vmatpush1.msra.mxu0 0.0
      %2313 = vmatprep.subr.mxu0 0.0
      %2314 = vmatpush1.msra.mxu0 0.0
      %2315 = vmatprep.subr.mxu0 0.0
      %2316 = vmatpush1.msra.mxu0 0.0
      %2317 = vmatprep.subr.mxu0 0.0
      %2318 = vmatpush1.msra.mxu0 0.0
      %2319 = vmatprep.subr.mxu0 0.0
      %2320 = vmatpush1.msra.mxu0 0.0
      %2321 = vmatprep.subr.mxu0 0.0
      %2322 = vmatpush1.msra.mxu0 0.0
      %2323 = vmatprep.subr.mxu0 0.0
      %2324 = vmatpush1.msra.mxu0 0.0
      %2325 = vmatprep.subr.mxu0 0.0
      %2326 = vmatpush1.msra.mxu0 0.0
      %2327 = vmatprep.subr.mxu0 0.0
      %2328 = vmatpush1.msra.mxu0 0.0
      %2329 = vmatprep.subr.mxu0 0.0
      %2330 = vmatpush1.msra.mxu0 0.0
      %2331 = vmatprep.subr.mxu0 0.0
      %2332 = vmatpush1.msra.mxu0 0.0
      %2333 = vmatprep.mubr.f32.mxu0 0.0
      %2334 = vmatmul.mubr.f32.gmra.mrb[0].mxu0 %v2236
      %v2335 = vpop.f32.mrb[0].mxu0
      %v2336 = vadd.f32 0.0, %v2335
      %v2337 = vpop.f32.mrb[0].mxu0
      %2338 = vmatprep.mubr.f32.mxu0 0.0
      %2339 = vmatmul.mubr.f32.gmra.mrb[0].mxu0 %v2237
      %v2340 = vpop.f32.mrb[0].mxu0
      %v2341 = vadd.f32 0.0, %v2340
      %v2342 = vpop.f32.mrb[0].mxu0
      %2343 = vmatprep.mubr.f32.mxu0 0.0
      %2344 = vmatmul.mubr.f32.gmra.mrb[0].mxu0 %v2238
      %v2345 = vpop.f32.mrb[0].mxu0
      %v2346 = vadd.f32 0.0, %v2345
      %v2347 = vpop.f32.mrb[0].mxu0
      %2348 = vmatprep.mubr.f32.mxu0 0.0
      %2349 = vmatmul.mubr.f32.gmra.mrb[0].mxu0 %v2239
      %v2350 = vpop.f32.mrb[0].mxu0
      %v2351 = vadd.f32 0.0, %v2350
      %v2352 = vpop.f32.mrb[0].mxu0
      %2353 = vmatprep.mubr.f32.mxu0 0.0
      %2354 = vmatmul.mubr.f32.gmra.mrb[0].mxu0 %v2240
      %v2355 = vpop.f32.mrb[0].mxu0
      %v2356 = vadd.f32 0.0, %v2355
      %v2357 = vpop.f32.mrb[0].mxu0
      %2358 = vmatprep.mubr.f32.mxu0 0.0
      %2359 = vmatmul.mubr.f32.gmra.mrb[0].mxu0 %v2241
      %v2360 = vpop.f32.mrb[0].mxu0
      %v2361 = vadd.f32 0.0, %v2360
      %v2362 = vpop.f32.mrb[0].mxu0
      %2363 = vmatprep.mubr.f32.mxu0 0.0
      %2364 = vmatmul.mubr.f32.gmra.mrb[0].mxu0 %v2242
      %v2365 = vpop.f32.mrb[0].mxu0
      %v2366 = vadd.f32 0.0, %v2365
      %v2367 = vpop.f32.mrb[0].mxu0
      %2368 = vmatprep.mubr.f32.mxu0 0.0
      %2369 = vmatmul.mubr.f32.gmra.mrb[0].mxu0 %v2243
      %v2370 = vpop.f32.mrb[0].mxu0
      %v2371 = vadd.f32 0.0, %v2370
      %v2372 = vpop.f32.mrb[0].mxu0
      %2373 = vmatprep.mubr.f32.mxu0 0.0
      %2374 = vmatmul.mubr.f32.gmra.mrb[0].mxu0 %v2244
      %v2375 = vpop.f32.mrb[0].mxu0
      %v2376 = vadd.f32 0.0, %v2375
      %v2377 = vpop.f32.mrb[0].mxu0
      %2378 = vmatprep.mubr.f32.mxu0 0.0
      %2379 = vmatmul.mubr.f32.gmra.mrb[0].mxu0 %v2245
      %v2380 = vpop.f32.mrb[0].mxu0
      %v2381 = vadd.f32 0.0, %v2380
      %v2382 = vpop.f32.mrb[0].mxu0
      %2383 = vmatprep.mubr.f32.mxu0 0.0
      %2384 = vmatmul.mubr.f32.gmra.mrb[0].mxu0 %v2246
      %v2385 = vpop.f32.mrb[0].mxu0
      %v2386 = vadd.f32 0.0, %v2385
      %v2387 = vpop.f32.mrb[0].mxu0
      %2388 = vmatprep.mubr.f32.mxu0 0.0
      %2389 = vmatmul.mubr.f32.gmra.mrb[0].mxu0 %v2247
      %v2390 = vpop.f32.mrb[0].mxu0
      %v2391 = vadd.f32 0.0, %v2390
      %v2392 = vpop.f32.mrb[0].mxu0
      %2393 = vmatprep.mubr.f32.mxu0 0.0
      %2394 = vmatmul.mubr.f32.gmra.mrb[0].mxu0 %v2248
      %v2395 = vpop.f32.mrb[0].mxu0
      %v2396 = vadd.f32 0.0, %v2395
      %v2397 = vpop.f32.mrb[0].mxu0
      %2398 = vmatprep.mubr.f32.mxu0 0.0
      %2399 = vmatmul.mubr.f32.gmra.mrb[0].mxu0 %v2249
      %v2400 = vpop.f32.mrb[0].mxu0
      %v2401 = vadd.f32 0.0, %v2400
      %v2402 = vpop.f32.mrb[0].mxu0
      %2403 = vmatprep.mubr.f32.mxu0 0.0
      %2404 = vmatmul.mubr.f32.gmra.mrb[0].mxu0 %v2250
      %v2405 = vpop.f32.mrb[0].mxu0
      %v2406 = vadd.f32 0.0, %v2405
      %v2407 = vpop.f32.mrb[0].mxu0
      %2408 = vmatprep.mubr.f32.mxu0 0.0
      %2409 = vmatmul.mubr.f32.gmra.mrb[0].mxu0 %v2251
      %v2410 = vpop.f32.mrb[0].mxu0
      %v2411 = vadd.f32 0.0, %v2410
      %v2412 = vpop.f32.mrb[0].mxu0
      %2413 = vdwg.mxu0
      %v2414 = vadd.f32 %v2219, %v2336
      %v2415 = vadd.f32 %v2220, %v2341
      %v2416 = vadd.f32 %v2221, %v2346
      %v2417 = vadd.f32 %v2222, %v2351
      %v2418 = vadd.f32 %v2223, %v2356
      %v2419 = vadd.f32 %v2224, %v2361
      %v2420 = vadd.f32 %v2225, %v2366
      %v2421 = vadd.f32 %v2226, %v2371
      %v2422 = vadd.f32 %v2227, %v2376
      %v2423 = vadd.f32 %v2228, %v2381
      %v2424 = vadd.f32 %v2229, %v2386
      %v2425 = vadd.f32 %v2230, %v2391
      %v2426 = vadd.f32 %v2231, %v2396
      %v2427 = vadd.f32 %v2232, %v2401
      %v2428 = vadd.f32 %v2233, %v2406
      %v2429 = vadd.f32 %v2234, %v2411
      %v2430 = vld [vmem:[%s2235 + $0x1] sm:$0xff]
      %v2431 = vld [vmem:[%s2235 + $0x9] sm:$0xff]
      %v2432 = vld [vmem:[%s2235 + $0x19] sm:$0xff]
      %v2433 = vld [vmem:[%s2235 + $0x21] sm:$0xff]
      %v2434 = vld [vmem:[%s2235 + $0x31] sm:$0xff]
      %v2435 = vld [vmem:[%s2235 + $0x39] sm:$0xff]
      %v2436 = vld [vmem:[%s2235 + $0x49] sm:$0xff]
      %v2437 = vld [vmem:[%s2235 + $0x51] sm:$0xff]
      %v2438 = vld [vmem:[%s2235 + $0x61] sm:$0xff]
      %v2439 = vld [vmem:[%s2235 + $0x69] sm:$0xff]
      %v2440 = vld [vmem:[%s2235 + $0x79] sm:$0xff]
      %v2441 = vld [vmem:[%s2235 + $0x81] sm:$0xff]
      %v2442 = vld [vmem:[%s2235 + $0x91] sm:$0xff]
      %v2443 = vld [vmem:[%s2235 + $0x99] sm:$0xff]
      %v2444 = vld [vmem:[%s2235 + $0xa9] sm:$0xff]
      %v2445 = vld [vmem:[%s2235 + $0xb1] sm:$0xff]
      %s2446 = scalar_lea.vmem %s1, 1408
      %v2447 = vld [vmem:[%s2446] sm:$0xff]
      %v2448 = vld [vmem:[%s2446 + $0x8] sm:$0xff]
      %v2449 = vld [vmem:[%s2446 + $0x10] sm:$0xff]
      %v2450 = vld [vmem:[%s2446 + $0x18] sm:$0xff]
      %v2451 = vld [vmem:[%s2446 + $0x20] sm:$0xff]
      %v2452 = vld [vmem:[%s2446 + $0x28] sm:$0xff]
      %v2453 = vld [vmem:[%s2446 + $0x30] sm:$0xff]
      %v2454 = vld [vmem:[%s2446 + $0x38] sm:$0xff]
      %v2455 = vld [vmem:[%s2446 + $0x40] sm:$0xff]
      %v2456 = vld [vmem:[%s2446 + $0x48] sm:$0xff]
      %v2457 = vld [vmem:[%s2446 + $0x50] sm:$0xff]
      %v2458 = vld [vmem:[%s2446 + $0x58] sm:$0xff]
      %v2459 = vld [vmem:[%s2446 + $0x60] sm:$0xff]
      %v2460 = vld [vmem:[%s2446 + $0x68] sm:$0xff]
      %v2461 = vld [vmem:[%s2446 + $0x70] sm:$0xff]
      %v2462 = vld [vmem:[%s2446 + $0x78] sm:$0xff]
      %2463 = vmatprep.subr.mxu0 0.0
      %2464 = vmatpush1.msra.mxu0 %v2447
      %2465 = vmatprep.subr.mxu0 0.0
      %2466 = vmatpush1.msra.mxu0 %v2448
      %2467 = vmatprep.subr.mxu0 0.0
      %2468 = vmatpush1.msra.mxu0 %v2449
      %2469 = vmatprep.subr.mxu0 0.0
      %2470 = vmatpush1.msra.mxu0 %v2450
      %2471 = vmatprep.subr.mxu0 0.0
      %2472 = vmatpush1.msra.mxu0 %v2451
      %2473 = vmatprep.subr.mxu0 0.0
      %2474 = vmatpush1.msra.mxu0 %v2452
      %2475 = vmatprep.subr.mxu0 0.0
      %2476 = vmatpush1.msra.mxu0 %v2453
      %2477 = vmatprep.subr.mxu0 0.0
      %2478 = vmatpush1.msra.mxu0 %v2454
      %2479 = vmatprep.subr.mxu0 0.0
      %2480 = vmatpush1.msra.mxu0 %v2455
      %2481 = vmatprep.subr.mxu0 0.0
      %2482 = vmatpush1.msra.mxu0 %v2456
      %2483 = vmatprep.subr.mxu0 0.0
      %2484 = vmatpush1.msra.mxu0 %v2457
      %2485 = vmatprep.subr.mxu0 0.0
      %2486 = vmatpush1.msra.mxu0 %v2458
      %2487 = vmatprep.subr.mxu0 0.0
      %2488 = vmatpush1.msra.mxu0 %v2459
      %2489 = vmatprep.subr.mxu0 0.0
      %2490 = vmatpush1.msra.mxu0 %v2460
      %2491 = vmatprep.subr.mxu0 0.0
      %2492 = vmatpush1.msra.mxu0 %v2461
      %2493 = vmatprep.subr.mxu0 0.0
      %2494 = vmatpush1.msra.mxu0 %v2462
      %2495 = vmatprep.subr.mxu0 0.0
      %2496 = vmatpush1.msra.mxu0 0.0
      %2497 = vmatprep.subr.mxu0 0.0
      %2498 = vmatpush1.msra.mxu0 0.0
      %2499 = vmatprep.subr.mxu0 0.0
      %2500 = vmatpush1.msra.mxu0 0.0
      %2501 = vmatprep.subr.mxu0 0.0
      %2502 = vmatpush1.msra.mxu0 0.0
      %2503 = vmatprep.subr.mxu0 0.0
      %2504 = vmatpush1.msra.mxu0 0.0
      %2505 = vmatprep.subr.mxu0 0.0
      %2506 = vmatpush1.msra.mxu0 0.0
      %2507 = vmatprep.subr.mxu0 0.0
      %2508 = vmatpush1.msra.mxu0 0.0
      %2509 = vmatprep.subr.mxu0 0.0
      %2510 = vmatpush1.msra.mxu0 0.0
      %2511 = vmatprep.subr.mxu0 0.0
      %2512 = vmatpush1.msra.mxu0 0.0
      %2513 = vmatprep.subr.mxu0 0.0
      %2514 = vmatpush1.msra.mxu0 0.0
      %2515 = vmatprep.subr.mxu0 0.0
      %2516 = vmatpush1.msra.mxu0 0.0
      %2517 = vmatprep.subr.mxu0 0.0
      %2518 = vmatpush1.msra.mxu0 0.0
      %2519 = vmatprep.subr.mxu0 0.0
      %2520 = vmatpush1.msra.mxu0 0.0
      %2521 = vmatprep.subr.mxu0 0.0
      %2522 = vmatpush1.msra.mxu0 0.0
      %2523 = vmatprep.subr.mxu0 0.0
      %2524 = vmatpush1.msra.mxu0 0.0
      %2525 = vmatprep.subr.mxu0 0.0
      %2526 = vmatpush1.msra.mxu0 0.0
      %2527 = vmatprep.mubr.f32.mxu0 0.0
      %2528 = vmatmul.mubr.f32.gmra.mrb[0].mxu0 %v2430
      %v2529 = vpop.f32.mrb[0].mxu0
      %v2530 = vadd.f32 0.0, %v2529
      %v2531 = vpop.f32.mrb[0].mxu0
      %2532 = vmatprep.mubr.f32.mxu0 0.0
      %2533 = vmatmul.mubr.f32.gmra.mrb[0].mxu0 %v2431
      %v2534 = vpop.f32.mrb[0].mxu0
      %v2535 = vadd.f32 0.0, %v2534
      %v2536 = vpop.f32.mrb[0].mxu0
      %2537 = vmatprep.mubr.f32.mxu0 0.0
      %2538 = vmatmul.mubr.f32.gmra.mrb[0].mxu0 %v2432
      %v2539 = vpop.f32.mrb[0].mxu0
      %v2540 = vadd.f32 0.0, %v2539
      %v2541 = vpop.f32.mrb[0].mxu0
      %2542 = vmatprep.mubr.f32.mxu0 0.0
      %2543 = vmatmul.mubr.f32.gmra.mrb[0].mxu0 %v2433
      %v2544 = vpop.f32.mrb[0].mxu0
      %v2545 = vadd.f32 0.0, %v2544
      %v2546 = vpop.f32.mrb[0].mxu0
      %2547 = vmatprep.mubr.f32.mxu0 0.0
      %2548 = vmatmul.mubr.f32.gmra.mrb[0].mxu0 %v2434
      %v2549 = vpop.f32.mrb[0].mxu0
      %v2550 = vadd.f32 0.0, %v2549
      %v2551 = vpop.f32.mrb[0].mxu0
      %2552 = vmatprep.mubr.f32.mxu0 0.0
      %2553 = vmatmul.mubr.f32.gmra.mrb[0].mxu0 %v2435
      %v2554 = vpop.f32.mrb[0].mxu0
      %v2555 = vadd.f32 0.0, %v2554
      %v2556 = vpop.f32.mrb[0].mxu0
      %2557 = vmatprep.mubr.f32.mxu0 0.0
      %2558 = vmatmul.mubr.f32.gmra.mrb[0].mxu0 %v2436
      %v2559 = vpop.f32.mrb[0].mxu0
      %v2560 = vadd.f32 0.0, %v2559
      %v2561 = vpop.f32.mrb[0].mxu0
      %2562 = vmatprep.mubr.f32.mxu0 0.0
      %2563 = vmatmul.mubr.f32.gmra.mrb[0].mxu0 %v2437
      %v2564 = vpop.f32.mrb[0].mxu0
      %v2565 = vadd.f32 0.0, %v2564
      %v2566 = vpop.f32.mrb[0].mxu0
      %2567 = vmatprep.mubr.f32.mxu0 0.0
      %2568 = vmatmul.mubr.f32.gmra.mrb[0].mxu0 %v2438
      %v2569 = vpop.f32.mrb[0].mxu0
      %v2570 = vadd.f32 0.0, %v2569
      %v2571 = vpop.f32.mrb[0].mxu0
      %2572 = vmatprep.mubr.f32.mxu0 0.0
      %2573 = vmatmul.mubr.f32.gmra.mrb[0].mxu0 %v2439
      %v2574 = vpop.f32.mrb[0].mxu0
      %v2575 = vadd.f32 0.0, %v2574
      %v2576 = vpop.f32.mrb[0].mxu0
      %2577 = vmatprep.mubr.f32.mxu0 0.0
      %2578 = vmatmul.mubr.f32.gmra.mrb[0].mxu0 %v2440
      %v2579 = vpop.f32.mrb[0].mxu0
      %v2580 = vadd.f32 0.0, %v2579
      %v2581 = vpop.f32.mrb[0].mxu0
      %2582 = vmatprep.mubr.f32.mxu0 0.0
      %2583 = vmatmul.mubr.f32.gmra.mrb[0].mxu0 %v2441
      %v2584 = vpop.f32.mrb[0].mxu0
      %v2585 = vadd.f32 0.0, %v2584
      %v2586 = vpop.f32.mrb[0].mxu0
      %2587 = vmatprep.mubr.f32.mxu0 0.0
      %2588 = vmatmul.mubr.f32.gmra.mrb[0].mxu0 %v2442
      %v2589 = vpop.f32.mrb[0].mxu0
      %v2590 = vadd.f32 0.0, %v2589
      %v2591 = vpop.f32.mrb[0].mxu0
      %2592 = vmatprep.mubr.f32.mxu0 0.0
      %2593 = vmatmul.mubr.f32.gmra.mrb[0].mxu0 %v2443
      %v2594 = vpop.f32.mrb[0].mxu0
      %v2595 = vadd.f32 0.0, %v2594
      %v2596 = vpop.f32.mrb[0].mxu0
      %2597 = vmatprep.mubr.f32.mxu0 0.0
      %2598 = vmatmul.mubr.f32.gmra.mrb[0].mxu0 %v2444
      %v2599 = vpop.f32.mrb[0].mxu0
      %v2600 = vadd.f32 0.0, %v2599
      %v2601 = vpop.f32.mrb[0].mxu0
      %2602 = vmatprep.mubr.f32.mxu0 0.0
      %2603 = vmatmul.mubr.f32.gmra.mrb[0].mxu0 %v2445
      %v2604 = vpop.f32.mrb[0].mxu0
      %v2605 = vadd.f32 0.0, %v2604
      %v2606 = vpop.f32.mrb[0].mxu0
      %2607 = vdwg.mxu0
      %v2608 = vadd.f32 %v2414, %v2530
      %v2609 = vadd.f32 %v2415, %v2535
      %v2610 = vadd.f32 %v2416, %v2540
      %v2611 = vadd.f32 %v2417, %v2545
      %v2612 = vadd.f32 %v2418, %v2550
      %v2613 = vadd.f32 %v2419, %v2555
      %v2614 = vadd.f32 %v2420, %v2560
      %v2615 = vadd.f32 %v2421, %v2565
      %v2616 = vadd.f32 %v2422, %v2570
      %v2617 = vadd.f32 %v2423, %v2575
      %v2618 = vadd.f32 %v2424, %v2580
      %v2619 = vadd.f32 %v2425, %v2585
      %v2620 = vadd.f32 %v2426, %v2590
      %v2621 = vadd.f32 %v2427, %v2595
      %v2622 = vadd.f32 %v2428, %v2600
      %v2623 = vadd.f32 %v2429, %v2605
      %s2624 = scalar_lea.vmem %s1, 1536
      %v2625 = vld [vmem:[%s2624] sm:$0xff]
      %v2626 = vld [vmem:[%s2624 + $0x8] sm:$0xff]
      %v2627 = vld [vmem:[%s2624 + $0x10] sm:$0xff]
      %v2628 = vld [vmem:[%s2624 + $0x18] sm:$0xff]
      %v2629 = vld [vmem:[%s2624 + $0x20] sm:$0xff]
      %v2630 = vld [vmem:[%s2624 + $0x28] sm:$0xff]
      %v2631 = vld [vmem:[%s2624 + $0x30] sm:$0xff]
      %v2632 = vld [vmem:[%s2624 + $0x38] sm:$0xff]
      %v2633 = vld [vmem:[%s2624 + $0x40] sm:$0xff]
      %v2634 = vld [vmem:[%s2624 + $0x48] sm:$0xff]
      %v2635 = vld [vmem:[%s2624 + $0x50] sm:$0xff]
      %v2636 = vld [vmem:[%s2624 + $0x58] sm:$0xff]
      %v2637 = vld [vmem:[%s2624 + $0x60] sm:$0xff]
      %v2638 = vld [vmem:[%s2624 + $0x68] sm:$0xff]
      %v2639 = vld [vmem:[%s2624 + $0x70] sm:$0xff]
      %v2640 = vld [vmem:[%s2624 + $0x78] sm:$0xff]
      %2641 = vmatprep.subr.mxu0 0.0
      %2642 = vmatpush1.msra.mxu0 %v2625
      %2643 = vmatprep.subr.mxu0 0.0
      %2644 = vmatpush1.msra.mxu0 %v2626
      %2645 = vmatprep.subr.mxu0 0.0
      %2646 = vmatpush1.msra.mxu0 %v2627
      %2647 = vmatprep.subr.mxu0 0.0
      %2648 = vmatpush1.msra.mxu0 %v2628
      %2649 = vmatprep.subr.mxu0 0.0
      %2650 = vmatpush1.msra.mxu0 %v2629
      %2651 = vmatprep.subr.mxu0 0.0
      %2652 = vmatpush1.msra.mxu0 %v2630
      %2653 = vmatprep.subr.mxu0 0.0
      %2654 = vmatpush1.msra.mxu0 %v2631
      %2655 = vmatprep.subr.mxu0 0.0
      %2656 = vmatpush1.msra.mxu0 %v2632
      %2657 = vmatprep.subr.mxu0 0.0
      %2658 = vmatpush1.msra.mxu0 %v2633
      %2659 = vmatprep.subr.mxu0 0.0
      %2660 = vmatpush1.msra.mxu0 %v2634
      %2661 = vmatprep.subr.mxu0 0.0
      %2662 = vmatpush1.msra.mxu0 %v2635
      %2663 = vmatprep.subr.mxu0 0.0
      %2664 = vmatpush1.msra.mxu0 %v2636
      %2665 = vmatprep.subr.mxu0 0.0
      %2666 = vmatpush1.msra.mxu0 %v2637
      %2667 = vmatprep.subr.mxu0 0.0
      %2668 = vmatpush1.msra.mxu0 %v2638
      %2669 = vmatprep.subr.mxu0 0.0
      %2670 = vmatpush1.msra.mxu0 %v2639
      %2671 = vmatprep.subr.mxu0 0.0
      %2672 = vmatpush1.msra.mxu0 %v2640
      %2673 = vmatprep.subr.mxu0 0.0
      %2674 = vmatpush1.msra.mxu0 0.0
      %2675 = vmatprep.subr.mxu0 0.0
      %2676 = vmatpush1.msra.mxu0 0.0
      %2677 = vmatprep.subr.mxu0 0.0
      %2678 = vmatpush1.msra.mxu0 0.0
      %2679 = vmatprep.subr.mxu0 0.0
      %2680 = vmatpush1.msra.mxu0 0.0
      %2681 = vmatprep.subr.mxu0 0.0
      %2682 = vmatpush1.msra.mxu0 0.0
      %2683 = vmatprep.subr.mxu0 0.0
      %2684 = vmatpush1.msra.mxu0 0.0
      %2685 = vmatprep.subr.mxu0 0.0
      %2686 = vmatpush1.msra.mxu0 0.0
      %2687 = vmatprep.subr.mxu0 0.0
      %2688 = vmatpush1.msra.mxu0 0.0
      %2689 = vmatprep.subr.mxu0 0.0
      %2690 = vmatpush1.msra.mxu0 0.0
      %2691 = vmatprep.subr.mxu0 0.0
      %2692 = vmatpush1.msra.mxu0 0.0
      %2693 = vmatprep.subr.mxu0 0.0
      %2694 = vmatpush1.msra.mxu0 0.0
      %2695 = vmatprep.subr.mxu0 0.0
      %2696 = vmatpush1.msra.mxu0 0.0
      %2697 = vmatprep.subr.mxu0 0.0
      %2698 = vmatpush1.msra.mxu0 0.0
      %2699 = vmatprep.subr.mxu0 0.0
      %2700 = vmatpush1.msra.mxu0 0.0
      %2701 = vmatprep.subr.mxu0 0.0
      %2702 = vmatpush1.msra.mxu0 0.0
      %2703 = vmatprep.subr.mxu0 0.0
      %2704 = vmatpush1.msra.mxu0 0.0
      %2705 = vmatprep.mubr.f32.mxu0 0.0
      %2706 = vmatmul.mubr.f32.gmra.mrb[0].mxu0 %v2041
      %v2707 = vpop.f32.mrb[0].mxu0
      %v2708 = vadd.f32 0.0, %v2707
      %v2709 = vpop.f32.mrb[0].mxu0
      %2710 = vmatprep.mubr.f32.mxu0 0.0
      %2711 = vmatmul.mubr.f32.gmra.mrb[0].mxu0 %v2042
      %v2712 = vpop.f32.mrb[0].mxu0
      %v2713 = vadd.f32 0.0, %v2712
      %v2714 = vpop.f32.mrb[0].mxu0
      %2715 = vmatprep.mubr.f32.mxu0 0.0
      %2716 = vmatmul.mubr.f32.gmra.mrb[0].mxu0 %v2043
      %v2717 = vpop.f32.mrb[0].mxu0
      %v2718 = vadd.f32 0.0, %v2717
      %v2719 = vpop.f32.mrb[0].mxu0
      %2720 = vmatprep.mubr.f32.mxu0 0.0
      %2721 = vmatmul.mubr.f32.gmra.mrb[0].mxu0 %v2044
      %v2722 = vpop.f32.mrb[0].mxu0
      %v2723 = vadd.f32 0.0, %v2722
      %v2724 = vpop.f32.mrb[0].mxu0
      %2725 = vmatprep.mubr.f32.mxu0 0.0
      %2726 = vmatmul.mubr.f32.gmra.mrb[0].mxu0 %v2045
      %v2727 = vpop.f32.mrb[0].mxu0
      %v2728 = vadd.f32 0.0, %v2727
      %v2729 = vpop.f32.mrb[0].mxu0
      %2730 = vmatprep.mubr.f32.mxu0 0.0
      %2731 = vmatmul.mubr.f32.gmra.mrb[0].mxu0 %v2046
      %v2732 = vpop.f32.mrb[0].mxu0
      %v2733 = vadd.f32 0.0, %v2732
      %v2734 = vpop.f32.mrb[0].mxu0
      %2735 = vmatprep.mubr.f32.mxu0 0.0
      %2736 = vmatmul.mubr.f32.gmra.mrb[0].mxu0 %v2047
      %v2737 = vpop.f32.mrb[0].mxu0
      %v2738 = vadd.f32 0.0, %v2737
      %v2739 = vpop.f32.mrb[0].mxu0
      %2740 = vmatprep.mubr.f32.mxu0 0.0
      %2741 = vmatmul.mubr.f32.gmra.mrb[0].mxu0 %v2048
      %v2742 = vpop.f32.mrb[0].mxu0
      %v2743 = vadd.f32 0.0, %v2742
      %v2744 = vpop.f32.mrb[0].mxu0
      %2745 = vmatprep.mubr.f32.mxu0 0.0
      %2746 = vmatmul.mubr.f32.gmra.mrb[0].mxu0 %v2049
      %v2747 = vpop.f32.mrb[0].mxu0
      %v2748 = vadd.f32 0.0, %v2747
      %v2749 = vpop.f32.mrb[0].mxu0
      %2750 = vmatprep.mubr.f32.mxu0 0.0
      %2751 = vmatmul.mubr.f32.gmra.mrb[0].mxu0 %v2050
      %v2752 = vpop.f32.mrb[0].mxu0
      %v2753 = vadd.f32 0.0, %v2752
      %v2754 = vpop.f32.mrb[0].mxu0
      %2755 = vmatprep.mubr.f32.mxu0 0.0
      %2756 = vmatmul.mubr.f32.gmra.mrb[0].mxu0 %v2051
      %v2757 = vpop.f32.mrb[0].mxu0
      %v2758 = vadd.f32 0.0, %v2757
      %v2759 = vpop.f32.mrb[0].mxu0
      %2760 = vmatprep.mubr.f32.mxu0 0.0
      %2761 = vmatmul.mubr.f32.gmra.mrb[0].mxu0 %v2052
      %v2762 = vpop.f32.mrb[0].mxu0
      %v2763 = vadd.f32 0.0, %v2762
      %v2764 = vpop.f32.mrb[0].mxu0
      %2765 = vmatprep.mubr.f32.mxu0 0.0
      %2766 = vmatmul.mubr.f32.gmra.mrb[0].mxu0 %v2053
      %v2767 = vpop.f32.mrb[0].mxu0
      %v2768 = vadd.f32 0.0, %v2767
      %v2769 = vpop.f32.mrb[0].mxu0
      %2770 = vmatprep.mubr.f32.mxu0 0.0
      %2771 = vmatmul.mubr.f32.gmra.mrb[0].mxu0 %v2054
      %v2772 = vpop.f32.mrb[0].mxu0
      %v2773 = vadd.f32 0.0, %v2772
      %v2774 = vpop.f32.mrb[0].mxu0
      %2775 = vmatprep.mubr.f32.mxu0 0.0
      %2776 = vmatmul.mubr.f32.gmra.mrb[0].mxu0 %v2055
      %v2777 = vpop.f32.mrb[0].mxu0
      %v2778 = vadd.f32 0.0, %v2777
      %v2779 = vpop.f32.mrb[0].mxu0
      %2780 = vmatprep.mubr.f32.mxu0 0.0
      %2781 = vmatmul.mubr.f32.gmra.mrb[0].mxu0 %v2056
      %v2782 = vpop.f32.mrb[0].mxu0
      %v2783 = vadd.f32 0.0, %v2782
      %v2784 = vpop.f32.mrb[0].mxu0
      %2785 = vdwg.mxu0
      %v2786 = vadd.f32 %v294, %v2708
      %v2787 = vadd.f32 %v294, %v2713
      %v2788 = vadd.f32 %v294, %v2718
      %v2789 = vadd.f32 %v294, %v2723
      %v2790 = vadd.f32 %v294, %v2728
      %v2791 = vadd.f32 %v294, %v2733
      %v2792 = vadd.f32 %v294, %v2738
      %v2793 = vadd.f32 %v294, %v2743
      %v2794 = vadd.f32 %v294, %v2748
      %v2795 = vadd.f32 %v294, %v2753
      %v2796 = vadd.f32 %v294, %v2758
      %v2797 = vadd.f32 %v294, %v2763
      %v2798 = vadd.f32 %v294, %v2768
      %v2799 = vadd.f32 %v294, %v2773
      %v2800 = vadd.f32 %v294, %v2778
      %v2801 = vadd.f32 %v294, %v2783
      %v2802 = vld [vmem:[%s682 + $0x2] sm:$0xff]
      %v2803 = vld [vmem:[%s682 + $0xa] sm:$0xff]
      %v2804 = vld [vmem:[%s682 + $0x1a] sm:$0xff]
      %v2805 = vld [vmem:[%s682 + $0x22] sm:$0xff]
      %v2806 = vld [vmem:[%s682 + $0x32] sm:$0xff]
      %v2807 = vld [vmem:[%s682 + $0x3a] sm:$0xff]
      %v2808 = vld [vmem:[%s682 + $0x4a] sm:$0xff]
      %v2809 = vld [vmem:[%s682 + $0x52] sm:$0xff]
      %v2810 = vld [vmem:[%s682 + $0x62] sm:$0xff]
      %v2811 = vld [vmem:[%s682 + $0x6a] sm:$0xff]
      %v2812 = vld [vmem:[%s682 + $0x7a] sm:$0xff]
      %v2813 = vld [vmem:[%s682 + $0x82] sm:$0xff]
      %v2814 = vld [vmem:[%s682 + $0x92] sm:$0xff]
      %v2815 = vld [vmem:[%s682 + $0x9a] sm:$0xff]
      %v2816 = vld [vmem:[%s682 + $0xaa] sm:$0xff]
      %v2817 = vld [vmem:[%s682 + $0xb2] sm:$0xff]
      %s2818 = scalar_lea.vmem %s1, 1664
      %v2819 = vld [vmem:[%s2818] sm:$0xff]
      %v2820 = vld [vmem:[%s2818 + $0x8] sm:$0xff]
      %v2821 = vld [vmem:[%s2818 + $0x10] sm:$0xff]
      %v2822 = vld [vmem:[%s2818 + $0x18] sm:$0xff]
      %v2823 = vld [vmem:[%s2818 + $0x20] sm:$0xff]
      %v2824 = vld [vmem:[%s2818 + $0x28] sm:$0xff]
      %v2825 = vld [vmem:[%s2818 + $0x30] sm:$0xff]
      %v2826 = vld [vmem:[%s2818 + $0x38] sm:$0xff]
      %v2827 = vld [vmem:[%s2818 + $0x40] sm:$0xff]
      %v2828 = vld [vmem:[%s2818 + $0x48] sm:$0xff]
      %v2829 = vld [vmem:[%s2818 + $0x50] sm:$0xff]
      %v2830 = vld [vmem:[%s2818 + $0x58] sm:$0xff]
      %v2831 = vld [vmem:[%s2818 + $0x60] sm:$0xff]
      %v2832 = vld [vmem:[%s2818 + $0x68] sm:$0xff]
      %v2833 = vld [vmem:[%s2818 + $0x70] sm:$0xff]
      %v2834 = vld [vmem:[%s2818 + $0x78] sm:$0xff]
      %2835 = vmatprep.subr.mxu0 0.0
      %2836 = vmatpush1.msra.mxu0 %v2819
      %2837 = vmatprep.subr.mxu0 0.0
      %2838 = vmatpush1.msra.mxu0 %v2820
      %2839 = vmatprep.subr.mxu0 0.0
      %2840 = vmatpush1.msra.mxu0 %v2821
      %2841 = vmatprep.subr.mxu0 0.0
      %2842 = vmatpush1.msra.mxu0 %v2822
      %2843 = vmatprep.subr.mxu0 0.0
      %2844 = vmatpush1.msra.mxu0 %v2823
      %2845 = vmatprep.subr.mxu0 0.0
      %2846 = vmatpush1.msra.mxu0 %v2824
      %2847 = vmatprep.subr.mxu0 0.0
      %2848 = vmatpush1.msra.mxu0 %v2825
      %2849 = vmatprep.subr.mxu0 0.0
      %2850 = vmatpush1.msra.mxu0 %v2826
      %2851 = vmatprep.subr.mxu0 0.0
      %2852 = vmatpush1.msra.mxu0 %v2827
      %2853 = vmatprep.subr.mxu0 0.0
      %2854 = vmatpush1.msra.mxu0 %v2828
      %2855 = vmatprep.subr.mxu0 0.0
      %2856 = vmatpush1.msra.mxu0 %v2829
      %2857 = vmatprep.subr.mxu0 0.0
      %2858 = vmatpush1.msra.mxu0 %v2830
      %2859 = vmatprep.subr.mxu0 0.0
      %2860 = vmatpush1.msra.mxu0 %v2831
      %2861 = vmatprep.subr.mxu0 0.0
      %2862 = vmatpush1.msra.mxu0 %v2832
      %2863 = vmatprep.subr.mxu0 0.0
      %2864 = vmatpush1.msra.mxu0 %v2833
      %2865 = vmatprep.subr.mxu0 0.0
      %2866 = vmatpush1.msra.mxu0 %v2834
      %2867 = vmatprep.subr.mxu0 0.0
      %2868 = vmatpush1.msra.mxu0 0.0
      %2869 = vmatprep.subr.mxu0 0.0
      %2870 = vmatpush1.msra.mxu0 0.0
      %2871 = vmatprep.subr.mxu0 0.0
      %2872 = vmatpush1.msra.mxu0 0.0
      %2873 = vmatprep.subr.mxu0 0.0
      %2874 = vmatpush1.msra.mxu0 0.0
      %2875 = vmatprep.subr.mxu0 0.0
      %2876 = vmatpush1.msra.mxu0 0.0
      %2877 = vmatprep.subr.mxu0 0.0
      %2878 = vmatpush1.msra.mxu0 0.0
      %2879 = vmatprep.subr.mxu0 0.0
      %2880 = vmatpush1.msra.mxu0 0.0
      %2881 = vmatprep.subr.mxu0 0.0
      %2882 = vmatpush1.msra.mxu0 0.0
      %2883 = vmatprep.subr.mxu0 0.0
      %2884 = vmatpush1.msra.mxu0 0.0
      %2885 = vmatprep.subr.mxu0 0.0
      %2886 = vmatpush1.msra.mxu0 0.0
      %2887 = vmatprep.subr.mxu0 0.0
      %2888 = vmatpush1.msra.mxu0 0.0
      %2889 = vmatprep.subr.mxu0 0.0
      %2890 = vmatpush1.msra.mxu0 0.0
      %2891 = vmatprep.subr.mxu0 0.0
      %2892 = vmatpush1.msra.mxu0 0.0
      %2893 = vmatprep.subr.mxu0 0.0
      %2894 = vmatpush1.msra.mxu0 0.0
      %2895 = vmatprep.subr.mxu0 0.0
      %2896 = vmatpush1.msra.mxu0 0.0
      %2897 = vmatprep.subr.mxu0 0.0
      %2898 = vmatpush1.msra.mxu0 0.0
      %2899 = vmatprep.mubr.f32.mxu0 0.0
      %2900 = vmatmul.mubr.f32.gmra.mrb[0].mxu0 %v2802
      %v2901 = vpop.f32.mrb[0].mxu0
      %v2902 = vadd.f32 0.0, %v2901
      %v2903 = vpop.f32.mrb[0].mxu0
      %2904 = vmatprep.mubr.f32.mxu0 0.0
      %2905 = vmatmul.mubr.f32.gmra.mrb[0].mxu0 %v2803
      %v2906 = vpop.f32.mrb[0].mxu0
      %v2907 = vadd.f32 0.0, %v2906
      %v2908 = vpop.f32.mrb[0].mxu0
      %2909 = vmatprep.mubr.f32.mxu0 0.0
      %2910 = vmatmul.mubr.f32.gmra.mrb[0].mxu0 %v2804
      %v2911 = vpop.f32.mrb[0].mxu0
      %v2912 = vadd.f32 0.0, %v2911
      %v2913 = vpop.f32.mrb[0].mxu0
      %2914 = vmatprep.mubr.f32.mxu0 0.0
      %2915 = vmatmul.mubr.f32.gmra.mrb[0].mxu0 %v2805
      %v2916 = vpop.f32.mrb[0].mxu0
      %v2917 = vadd.f32 0.0, %v2916
      %v2918 = vpop.f32.mrb[0].mxu0
      %2919 = vmatprep.mubr.f32.mxu0 0.0
      %2920 = vmatmul.mubr.f32.gmra.mrb[0].mxu0 %v2806
      %v2921 = vpop.f32.mrb[0].mxu0
      %v2922 = vadd.f32 0.0, %v2921
      %v2923 = vpop.f32.mrb[0].mxu0
      %2924 = vmatprep.mubr.f32.mxu0 0.0
      %2925 = vmatmul.mubr.f32.gmra.mrb[0].mxu0 %v2807
      %v2926 = vpop.f32.mrb[0].mxu0
      %v2927 = vadd.f32 0.0, %v2926
      %v2928 = vpop.f32.mrb[0].mxu0
      %2929 = vmatprep.mubr.f32.mxu0 0.0
      %2930 = vmatmul.mubr.f32.gmra.mrb[0].mxu0 %v2808
      %v2931 = vpop.f32.mrb[0].mxu0
      %v2932 = vadd.f32 0.0, %v2931
      %v2933 = vpop.f32.mrb[0].mxu0
      %2934 = vmatprep.mubr.f32.mxu0 0.0
      %2935 = vmatmul.mubr.f32.gmra.mrb[0].mxu0 %v2809
      %v2936 = vpop.f32.mrb[0].mxu0
      %v2937 = vadd.f32 0.0, %v2936
      %v2938 = vpop.f32.mrb[0].mxu0
      %2939 = vmatprep.mubr.f32.mxu0 0.0
      %2940 = vmatmul.mubr.f32.gmra.mrb[0].mxu0 %v2810
      %v2941 = vpop.f32.mrb[0].mxu0
      %v2942 = vadd.f32 0.0, %v2941
      %v2943 = vpop.f32.mrb[0].mxu0
      %2944 = vmatprep.mubr.f32.mxu0 0.0
      %2945 = vmatmul.mubr.f32.gmra.mrb[0].mxu0 %v2811
      %v2946 = vpop.f32.mrb[0].mxu0
      %v2947 = vadd.f32 0.0, %v2946
      %v2948 = vpop.f32.mrb[0].mxu0
      %2949 = vmatprep.mubr.f32.mxu0 0.0
      %2950 = vmatmul.mubr.f32.gmra.mrb[0].mxu0 %v2812
      %v2951 = vpop.f32.mrb[0].mxu0
      %v2952 = vadd.f32 0.0, %v2951
      %v2953 = vpop.f32.mrb[0].mxu0
      %2954 = vmatprep.mubr.f32.mxu0 0.0
      %2955 = vmatmul.mubr.f32.gmra.mrb[0].mxu0 %v2813
      %v2956 = vpop.f32.mrb[0].mxu0
      %v2957 = vadd.f32 0.0, %v2956
      %v2958 = vpop.f32.mrb[0].mxu0
      %2959 = vmatprep.mubr.f32.mxu0 0.0
      %2960 = vmatmul.mubr.f32.gmra.mrb[0].mxu0 %v2814
      %v2961 = vpop.f32.mrb[0].mxu0
      %v2962 = vadd.f32 0.0, %v2961
      %v2963 = vpop.f32.mrb[0].mxu0
      %2964 = vmatprep.mubr.f32.mxu0 0.0
      %2965 = vmatmul.mubr.f32.gmra.mrb[0].mxu0 %v2815
      %v2966 = vpop.f32.mrb[0].mxu0
      %v2967 = vadd.f32 0.0, %v2966
      %v2968 = vpop.f32.mrb[0].mxu0
      %2969 = vmatprep.mubr.f32.mxu0 0.0
      %2970 = vmatmul.mubr.f32.gmra.mrb[0].mxu0 %v2816
      %v2971 = vpop.f32.mrb[0].mxu0
      %v2972 = vadd.f32 0.0, %v2971
      %v2973 = vpop.f32.mrb[0].mxu0
      %2974 = vmatprep.mubr.f32.mxu0 0.0
      %2975 = vmatmul.mubr.f32.gmra.mrb[0].mxu0 %v2817
      %v2976 = vpop.f32.mrb[0].mxu0
      %v2977 = vadd.f32 0.0, %v2976
      %v2978 = vpop.f32.mrb[0].mxu0
      %2979 = vdwg.mxu0
      %v2980 = vadd.f32 %v2786, %v2902
      %v2981 = vadd.f32 %v2787, %v2907
      %v2982 = vadd.f32 %v2788, %v2912
      %v2983 = vadd.f32 %v2789, %v2917
      %v2984 = vadd.f32 %v2790, %v2922
      %v2985 = vadd.f32 %v2791, %v2927
      %v2986 = vadd.f32 %v2792, %v2932
      %v2987 = vadd.f32 %v2793, %v2937
      %v2988 = vadd.f32 %v2794, %v2942
      %v2989 = vadd.f32 %v2795, %v2947
      %v2990 = vadd.f32 %v2796, %v2952
      %v2991 = vadd.f32 %v2797, %v2957
      %v2992 = vadd.f32 %v2798, %v2962
      %v2993 = vadd.f32 %v2799, %v2967
      %v2994 = vadd.f32 %v2800, %v2972
      %v2995 = vadd.f32 %v2801, %v2977
      %s2996 = scalar_lea.vmem %s1, 1792
      %v2997 = vld [vmem:[%s2996] sm:$0xff]
      %v2998 = vld [vmem:[%s2996 + $0x8] sm:$0xff]
      %v2999 = vld [vmem:[%s2996 + $0x10] sm:$0xff]
      %v3000 = vld [vmem:[%s2996 + $0x18] sm:$0xff]
      %v3001 = vld [vmem:[%s2996 + $0x20] sm:$0xff]
      %v3002 = vld [vmem:[%s2996 + $0x28] sm:$0xff]
      %v3003 = vld [vmem:[%s2996 + $0x30] sm:$0xff]
      %v3004 = vld [vmem:[%s2996 + $0x38] sm:$0xff]
      %v3005 = vld [vmem:[%s2996 + $0x40] sm:$0xff]
      %v3006 = vld [vmem:[%s2996 + $0x48] sm:$0xff]
      %v3007 = vld [vmem:[%s2996 + $0x50] sm:$0xff]
      %v3008 = vld [vmem:[%s2996 + $0x58] sm:$0xff]
      %v3009 = vld [vmem:[%s2996 + $0x60] sm:$0xff]
      %v3010 = vld [vmem:[%s2996 + $0x68] sm:$0xff]
      %v3011 = vld [vmem:[%s2996 + $0x70] sm:$0xff]
      %v3012 = vld [vmem:[%s2996 + $0x78] sm:$0xff]
      %3013 = vmatprep.subr.mxu0 0.0
      %3014 = vmatpush1.msra.mxu0 %v2997
      %3015 = vmatprep.subr.mxu0 0.0
      %3016 = vmatpush1.msra.mxu0 %v2998
      %3017 = vmatprep.subr.mxu0 0.0
      %3018 = vmatpush1.msra.mxu0 %v2999
      %3019 = vmatprep.subr.mxu0 0.0
      %3020 = vmatpush1.msra.mxu0 %v3000
      %3021 = vmatprep.subr.mxu0 0.0
      %3022 = vmatpush1.msra.mxu0 %v3001
      %3023 = vmatprep.subr.mxu0 0.0
      %3024 = vmatpush1.msra.mxu0 %v3002
      %3025 = vmatprep.subr.mxu0 0.0
      %3026 = vmatpush1.msra.mxu0 %v3003
      %3027 = vmatprep.subr.mxu0 0.0
      %3028 = vmatpush1.msra.mxu0 %v3004
      %3029 = vmatprep.subr.mxu0 0.0
      %3030 = vmatpush1.msra.mxu0 %v3005
      %3031 = vmatprep.subr.mxu0 0.0
      %3032 = vmatpush1.msra.mxu0 %v3006
      %3033 = vmatprep.subr.mxu0 0.0
      %3034 = vmatpush1.msra.mxu0 %v3007
      %3035 = vmatprep.subr.mxu0 0.0
      %3036 = vmatpush1.msra.mxu0 %v3008
      %3037 = vmatprep.subr.mxu0 0.0
      %3038 = vmatpush1.msra.mxu0 %v3009
      %3039 = vmatprep.subr.mxu0 0.0
      %3040 = vmatpush1.msra.mxu0 %v3010
      %3041 = vmatprep.subr.mxu0 0.0
      %3042 = vmatpush1.msra.mxu0 %v3011
      %3043 = vmatprep.subr.mxu0 0.0
      %3044 = vmatpush1.msra.mxu0 %v3012
      %3045 = vmatprep.subr.mxu0 0.0
      %3046 = vmatpush1.msra.mxu0 0.0
      %3047 = vmatprep.subr.mxu0 0.0
      %3048 = vmatpush1.msra.mxu0 0.0
      %3049 = vmatprep.subr.mxu0 0.0
      %3050 = vmatpush1.msra.mxu0 0.0
      %3051 = vmatprep.subr.mxu0 0.0
      %3052 = vmatpush1.msra.mxu0 0.0
      %3053 = vmatprep.subr.mxu0 0.0
      %3054 = vmatpush1.msra.mxu0 0.0
      %3055 = vmatprep.subr.mxu0 0.0
      %3056 = vmatpush1.msra.mxu0 0.0
      %3057 = vmatprep.subr.mxu0 0.0
      %3058 = vmatpush1.msra.mxu0 0.0
      %3059 = vmatprep.subr.mxu0 0.0
      %3060 = vmatpush1.msra.mxu0 0.0
      %3061 = vmatprep.subr.mxu0 0.0
      %3062 = vmatpush1.msra.mxu0 0.0
      %3063 = vmatprep.subr.mxu0 0.0
      %3064 = vmatpush1.msra.mxu0 0.0
      %3065 = vmatprep.subr.mxu0 0.0
      %3066 = vmatpush1.msra.mxu0 0.0
      %3067 = vmatprep.subr.mxu0 0.0
      %3068 = vmatpush1.msra.mxu0 0.0
      %3069 = vmatprep.subr.mxu0 0.0
      %3070 = vmatpush1.msra.mxu0 0.0
      %3071 = vmatprep.subr.mxu0 0.0
      %3072 = vmatpush1.msra.mxu0 0.0
      %3073 = vmatprep.subr.mxu0 0.0
      %3074 = vmatpush1.msra.mxu0 0.0
      %3075 = vmatprep.subr.mxu0 0.0
      %3076 = vmatpush1.msra.mxu0 0.0
      %3077 = vmatprep.mubr.f32.mxu0 0.0
      %3078 = vmatmul.mubr.f32.gmra.mrb[0].mxu0 %v2430
      %v3079 = vpop.f32.mrb[0].mxu0
      %v3080 = vadd.f32 0.0, %v3079
      %v3081 = vpop.f32.mrb[0].mxu0
      %3082 = vmatprep.mubr.f32.mxu0 0.0
      %3083 = vmatmul.mubr.f32.gmra.mrb[0].mxu0 %v2431
      %v3084 = vpop.f32.mrb[0].mxu0
      %v3085 = vadd.f32 0.0, %v3084
      %v3086 = vpop.f32.mrb[0].mxu0
      %3087 = vmatprep.mubr.f32.mxu0 0.0
      %3088 = vmatmul.mubr.f32.gmra.mrb[0].mxu0 %v2432
      %v3089 = vpop.f32.mrb[0].mxu0
      %v3090 = vadd.f32 0.0, %v3089
      %v3091 = vpop.f32.mrb[0].mxu0
      %3092 = vmatprep.mubr.f32.mxu0 0.0
      %3093 = vmatmul.mubr.f32.gmra.mrb[0].mxu0 %v2433
      %v3094 = vpop.f32.mrb[0].mxu0
      %v3095 = vadd.f32 0.0, %v3094
      %v3096 = vpop.f32.mrb[0].mxu0
      %3097 = vmatprep.mubr.f32.mxu0 0.0
      %3098 = vmatmul.mubr.f32.gmra.mrb[0].mxu0 %v2434
      %v3099 = vpop.f32.mrb[0].mxu0
      %v3100 = vadd.f32 0.0, %v3099
      %v3101 = vpop.f32.mrb[0].mxu0
      %3102 = vmatprep.mubr.f32.mxu0 0.0
      %3103 = vmatmul.mubr.f32.gmra.mrb[0].mxu0 %v2435
      %v3104 = vpop.f32.mrb[0].mxu0
      %v3105 = vadd.f32 0.0, %v3104
      %v3106 = vpop.f32.mrb[0].mxu0
      %3107 = vmatprep.mubr.f32.mxu0 0.0
      %3108 = vmatmul.mubr.f32.gmra.mrb[0].mxu0 %v2436
      %v3109 = vpop.f32.mrb[0].mxu0
      %v3110 = vadd.f32 0.0, %v3109
      %v3111 = vpop.f32.mrb[0].mxu0
      %3112 = vmatprep.mubr.f32.mxu0 0.0
      %3113 = vmatmul.mubr.f32.gmra.mrb[0].mxu0 %v2437
      %v3114 = vpop.f32.mrb[0].mxu0
      %v3115 = vadd.f32 0.0, %v3114
      %v3116 = vpop.f32.mrb[0].mxu0
      %3117 = vmatprep.mubr.f32.mxu0 0.0
      %3118 = vmatmul.mubr.f32.gmra.mrb[0].mxu0 %v2438
      %v3119 = vpop.f32.mrb[0].mxu0
      %v3120 = vadd.f32 0.0, %v3119
      %v3121 = vpop.f32.mrb[0].mxu0
      %3122 = vmatprep.mubr.f32.mxu0 0.0
      %3123 = vmatmul.mubr.f32.gmra.mrb[0].mxu0 %v2439
      %v3124 = vpop.f32.mrb[0].mxu0
      %v3125 = vadd.f32 0.0, %v3124
      %v3126 = vpop.f32.mrb[0].mxu0
      %3127 = vmatprep.mubr.f32.mxu0 0.0
      %3128 = vmatmul.mubr.f32.gmra.mrb[0].mxu0 %v2440
      %v3129 = vpop.f32.mrb[0].mxu0
      %v3130 = vadd.f32 0.0, %v3129
      %v3131 = vpop.f32.mrb[0].mxu0
      %3132 = vmatprep.mubr.f32.mxu0 0.0
      %3133 = vmatmul.mubr.f32.gmra.mrb[0].mxu0 %v2441
      %v3134 = vpop.f32.mrb[0].mxu0
      %v3135 = vadd.f32 0.0, %v3134
      %v3136 = vpop.f32.mrb[0].mxu0
      %3137 = vmatprep.mubr.f32.mxu0 0.0
      %3138 = vmatmul.mubr.f32.gmra.mrb[0].mxu0 %v2442
      %v3139 = vpop.f32.mrb[0].mxu0
      %v3140 = vadd.f32 0.0, %v3139
      %v3141 = vpop.f32.mrb[0].mxu0
      %3142 = vmatprep.mubr.f32.mxu0 0.0
      %3143 = vmatmul.mubr.f32.gmra.mrb[0].mxu0 %v2443
      %v3144 = vpop.f32.mrb[0].mxu0
      %v3145 = vadd.f32 0.0, %v3144
      %v3146 = vpop.f32.mrb[0].mxu0
      %3147 = vmatprep.mubr.f32.mxu0 0.0
      %3148 = vmatmul.mubr.f32.gmra.mrb[0].mxu0 %v2444
      %v3149 = vpop.f32.mrb[0].mxu0
      %v3150 = vadd.f32 0.0, %v3149
      %v3151 = vpop.f32.mrb[0].mxu0
      %3152 = vmatprep.mubr.f32.mxu0 0.0
      %3153 = vmatmul.mubr.f32.gmra.mrb[0].mxu0 %v2445
      %v3154 = vpop.f32.mrb[0].mxu0
      %v3155 = vadd.f32 0.0, %v3154
      %v3156 = vpop.f32.mrb[0].mxu0
      %3157 = vdwg.mxu0
      %v3158 = vadd.f32 %v2980, %v3080
      %v3159 = vadd.f32 %v2981, %v3085
      %v3160 = vadd.f32 %v2982, %v3090
      %v3161 = vadd.f32 %v2983, %v3095
      %v3162 = vadd.f32 %v2984, %v3100
      %v3163 = vadd.f32 %v2985, %v3105
      %v3164 = vadd.f32 %v2986, %v3110
      %v3165 = vadd.f32 %v2987, %v3115
      %v3166 = vadd.f32 %v2988, %v3120
      %v3167 = vadd.f32 %v2989, %v3125
      %v3168 = vadd.f32 %v2990, %v3130
      %v3169 = vadd.f32 %v2991, %v3135
      %v3170 = vadd.f32 %v2992, %v3140
      %v3171 = vadd.f32 %v2993, %v3145
      %v3172 = vadd.f32 %v2994, %v3150
      %v3173 = vadd.f32 %v2995, %v3155
      %v3174 = vld [vmem:[%s2235 + $0x2] sm:$0xff]
      %v3175 = vld [vmem:[%s2235 + $0xa] sm:$0xff]
      %v3176 = vld [vmem:[%s2235 + $0x1a] sm:$0xff]
      %v3177 = vld [vmem:[%s2235 + $0x22] sm:$0xff]
      %v3178 = vld [vmem:[%s2235 + $0x32] sm:$0xff]
      %v3179 = vld [vmem:[%s2235 + $0x3a] sm:$0xff]
      %v3180 = vld [vmem:[%s2235 + $0x4a] sm:$0xff]
      %v3181 = vld [vmem:[%s2235 + $0x52] sm:$0xff]
      %v3182 = vld [vmem:[%s2235 + $0x62] sm:$0xff]
      %v3183 = vld [vmem:[%s2235 + $0x6a] sm:$0xff]
      %v3184 = vld [vmem:[%s2235 + $0x7a] sm:$0xff]
      %v3185 = vld [vmem:[%s2235 + $0x82] sm:$0xff]
      %v3186 = vld [vmem:[%s2235 + $0x92] sm:$0xff]
      %v3187 = vld [vmem:[%s2235 + $0x9a] sm:$0xff]
      %v3188 = vld [vmem:[%s2235 + $0xaa] sm:$0xff]
      %v3189 = vld [vmem:[%s2235 + $0xb2] sm:$0xff]
      %s3190 = scalar_lea.vmem %s1, 1920
      %v3191 = vld [vmem:[%s3190] sm:$0xff]
      %v3192 = vld [vmem:[%s3190 + $0x8] sm:$0xff]
      %v3193 = vld [vmem:[%s3190 + $0x10] sm:$0xff]
      %v3194 = vld [vmem:[%s3190 + $0x18] sm:$0xff]
      %v3195 = vld [vmem:[%s3190 + $0x20] sm:$0xff]
      %v3196 = vld [vmem:[%s3190 + $0x28] sm:$0xff]
      %v3197 = vld [vmem:[%s3190 + $0x30] sm:$0xff]
      %v3198 = vld [vmem:[%s3190 + $0x38] sm:$0xff]
      %v3199 = vld [vmem:[%s3190 + $0x40] sm:$0xff]
      %v3200 = vld [vmem:[%s3190 + $0x48] sm:$0xff]
      %v3201 = vld [vmem:[%s3190 + $0x50] sm:$0xff]
      %v3202 = vld [vmem:[%s3190 + $0x58] sm:$0xff]
      %v3203 = vld [vmem:[%s3190 + $0x60] sm:$0xff]
      %v3204 = vld [vmem:[%s3190 + $0x68] sm:$0xff]
      %v3205 = vld [vmem:[%s3190 + $0x70] sm:$0xff]
      %v3206 = vld [vmem:[%s3190 + $0x78] sm:$0xff]
      %3207 = vmatprep.subr.mxu0 0.0
      %3208 = vmatpush1.msra.mxu0 %v3191
      %3209 = vmatprep.subr.mxu0 0.0
      %3210 = vmatpush1.msra.mxu0 %v3192
      %3211 = vmatprep.subr.mxu0 0.0
      %3212 = vmatpush1.msra.mxu0 %v3193
      %3213 = vmatprep.subr.mxu0 0.0
      %3214 = vmatpush1.msra.mxu0 %v3194
      %3215 = vmatprep.subr.mxu0 0.0
      %3216 = vmatpush1.msra.mxu0 %v3195
      %3217 = vmatprep.subr.mxu0 0.0
      %3218 = vmatpush1.msra.mxu0 %v3196
      %3219 = vmatprep.subr.mxu0 0.0
      %3220 = vmatpush1.msra.mxu0 %v3197
      %3221 = vmatprep.subr.mxu0 0.0
      %3222 = vmatpush1.msra.mxu0 %v3198
      %3223 = vmatprep.subr.mxu0 0.0
      %3224 = vmatpush1.msra.mxu0 %v3199
      %3225 = vmatprep.subr.mxu0 0.0
      %3226 = vmatpush1.msra.mxu0 %v3200
      %3227 = vmatprep.subr.mxu0 0.0
      %3228 = vmatpush1.msra.mxu0 %v3201
      %3229 = vmatprep.subr.mxu0 0.0
      %3230 = vmatpush1.msra.mxu0 %v3202
      %3231 = vmatprep.subr.mxu0 0.0
      %3232 = vmatpush1.msra.mxu0 %v3203
      %3233 = vmatprep.subr.mxu0 0.0
      %3234 = vmatpush1.msra.mxu0 %v3204
      %3235 = vmatprep.subr.mxu0 0.0
      %3236 = vmatpush1.msra.mxu0 %v3205
      %3237 = vmatprep.subr.mxu0 0.0
      %3238 = vmatpush1.msra.mxu0 %v3206
      %3239 = vmatprep.subr.mxu0 0.0
      %3240 = vmatpush1.msra.mxu0 0.0
      %3241 = vmatprep.subr.mxu0 0.0
      %3242 = vmatpush1.msra.mxu0 0.0
      %3243 = vmatprep.subr.mxu0 0.0
      %3244 = vmatpush1.msra.mxu0 0.0
      %3245 = vmatprep.subr.mxu0 0.0
      %3246 = vmatpush1.msra.mxu0 0.0
      %3247 = vmatprep.subr.mxu0 0.0
      %3248 = vmatpush1.msra.mxu0 0.0
      %3249 = vmatprep.subr.mxu0 0.0
      %3250 = vmatpush1.msra.mxu0 0.0
      %3251 = vmatprep.subr.mxu0 0.0
      %3252 = vmatpush1.msra.mxu0 0.0
      %3253 = vmatprep.subr.mxu0 0.0
      %3254 = vmatpush1.msra.mxu0 0.0
      %3255 = vmatprep.subr.mxu0 0.0
      %3256 = vmatpush1.msra.mxu0 0.0
      %3257 = vmatprep.subr.mxu0 0.0
      %3258 = vmatpush1.msra.mxu0 0.0
      %3259 = vmatprep.subr.mxu0 0.0
      %3260 = vmatpush1.msra.mxu0 0.0
      %3261 = vmatprep.subr.mxu0 0.0
      %3262 = vmatpush1.msra.mxu0 0.0
      %3263 = vmatprep.subr.mxu0 0.0
      %3264 = vmatpush1.msra.mxu0 0.0
      %3265 = vmatprep.subr.mxu0 0.0
      %3266 = vmatpush1.msra.mxu0 0.0
      %3267 = vmatprep.subr.mxu0 0.0
      %3268 = vmatpush1.msra.mxu0 0.0
      %3269 = vmatprep.subr.mxu0 0.0
      %3270 = vmatpush1.msra.mxu0 0.0
      %3271 = vmatprep.mubr.f32.mxu0 0.0
      %3272 = vmatmul.mubr.f32.gmra.mrb[0].mxu0 %v3174
      %v3273 = vpop.f32.mrb[0].mxu0
      %v3274 = vadd.f32 0.0, %v3273
      %v3275 = vpop.f32.mrb[0].mxu0
      %3276 = vmatprep.mubr.f32.mxu0 0.0
      %3277 = vmatmul.mubr.f32.gmra.mrb[0].mxu0 %v3175
      %v3278 = vpop.f32.mrb[0].mxu0
      %v3279 = vadd.f32 0.0, %v3278
      %v3280 = vpop.f32.mrb[0].mxu0
      %3281 = vmatprep.mubr.f32.mxu0 0.0
      %3282 = vmatmul.mubr.f32.gmra.mrb[0].mxu0 %v3176
      %v3283 = vpop.f32.mrb[0].mxu0
      %v3284 = vadd.f32 0.0, %v3283
      %v3285 = vpop.f32.mrb[0].mxu0
      %3286 = vmatprep.mubr.f32.mxu0 0.0
      %3287 = vmatmul.mubr.f32.gmra.mrb[0].mxu0 %v3177
      %v3288 = vpop.f32.mrb[0].mxu0
      %v3289 = vadd.f32 0.0, %v3288
      %v3290 = vpop.f32.mrb[0].mxu0
      %3291 = vmatprep.mubr.f32.mxu0 0.0
      %3292 = vmatmul.mubr.f32.gmra.mrb[0].mxu0 %v3178
      %v3293 = vpop.f32.mrb[0].mxu0
      %v3294 = vadd.f32 0.0, %v3293
      %v3295 = vpop.f32.mrb[0].mxu0
      %3296 = vmatprep.mubr.f32.mxu0 0.0
      %3297 = vmatmul.mubr.f32.gmra.mrb[0].mxu0 %v3179
      %v3298 = vpop.f32.mrb[0].mxu0
      %v3299 = vadd.f32 0.0, %v3298
      %v3300 = vpop.f32.mrb[0].mxu0
      %3301 = vmatprep.mubr.f32.mxu0 0.0
      %3302 = vmatmul.mubr.f32.gmra.mrb[0].mxu0 %v3180
      %v3303 = vpop.f32.mrb[0].mxu0
      %v3304 = vadd.f32 0.0, %v3303
      %v3305 = vpop.f32.mrb[0].mxu0
      %3306 = vmatprep.mubr.f32.mxu0 0.0
      %3307 = vmatmul.mubr.f32.gmra.mrb[0].mxu0 %v3181
      %v3308 = vpop.f32.mrb[0].mxu0
      %v3309 = vadd.f32 0.0, %v3308
      %v3310 = vpop.f32.mrb[0].mxu0
      %3311 = vmatprep.mubr.f32.mxu0 0.0
      %3312 = vmatmul.mubr.f32.gmra.mrb[0].mxu0 %v3182
      %v3313 = vpop.f32.mrb[0].mxu0
      %v3314 = vadd.f32 0.0, %v3313
      %v3315 = vpop.f32.mrb[0].mxu0
      %3316 = vmatprep.mubr.f32.mxu0 0.0
      %3317 = vmatmul.mubr.f32.gmra.mrb[0].mxu0 %v3183
      %v3318 = vpop.f32.mrb[0].mxu0
      %v3319 = vadd.f32 0.0, %v3318
      %v3320 = vpop.f32.mrb[0].mxu0
      %3321 = vmatprep.mubr.f32.mxu0 0.0
      %3322 = vmatmul.mubr.f32.gmra.mrb[0].mxu0 %v3184
      %v3323 = vpop.f32.mrb[0].mxu0
      %v3324 = vadd.f32 0.0, %v3323
      %v3325 = vpop.f32.mrb[0].mxu0
      %3326 = vmatprep.mubr.f32.mxu0 0.0
      %3327 = vmatmul.mubr.f32.gmra.mrb[0].mxu0 %v3185
      %v3328 = vpop.f32.mrb[0].mxu0
      %v3329 = vadd.f32 0.0, %v3328
      %v3330 = vpop.f32.mrb[0].mxu0
      %3331 = vmatprep.mubr.f32.mxu0 0.0
      %3332 = vmatmul.mubr.f32.gmra.mrb[0].mxu0 %v3186
      %v3333 = vpop.f32.mrb[0].mxu0
      %v3334 = vadd.f32 0.0, %v3333
      %v3335 = vpop.f32.mrb[0].mxu0
      %3336 = vmatprep.mubr.f32.mxu0 0.0
      %3337 = vmatmul.mubr.f32.gmra.mrb[0].mxu0 %v3187
      %v3338 = vpop.f32.mrb[0].mxu0
      %v3339 = vadd.f32 0.0, %v3338
      %v3340 = vpop.f32.mrb[0].mxu0
      %3341 = vmatprep.mubr.f32.mxu0 0.0
      %3342 = vmatmul.mubr.f32.gmra.mrb[0].mxu0 %v3188
      %v3343 = vpop.f32.mrb[0].mxu0
      %v3344 = vadd.f32 0.0, %v3343
      %v3345 = vpop.f32.mrb[0].mxu0
      %3346 = vmatprep.mubr.f32.mxu0 0.0
      %3347 = vmatmul.mubr.f32.gmra.mrb[0].mxu0 %v3189
      %v3348 = vpop.f32.mrb[0].mxu0
      %v3349 = vadd.f32 0.0, %v3348
      %v3350 = vpop.f32.mrb[0].mxu0
      %3351 = vdwg.mxu0
      %v3352 = vadd.f32 %v3158, %v3274
      %v3353 = vadd.f32 %v3159, %v3279
      %v3354 = vadd.f32 %v3160, %v3284
      %v3355 = vadd.f32 %v3161, %v3289
      %v3356 = vadd.f32 %v3162, %v3294
      %v3357 = vadd.f32 %v3163, %v3299
      %v3358 = vadd.f32 %v3164, %v3304
      %v3359 = vadd.f32 %v3165, %v3309
      %v3360 = vadd.f32 %v3166, %v3314
      %v3361 = vadd.f32 %v3167, %v3319
      %v3362 = vadd.f32 %v3168, %v3324
      %v3363 = vadd.f32 %v3169, %v3329
      %v3364 = vadd.f32 %v3170, %v3334
      %v3365 = vadd.f32 %v3171, %v3339
      %v3366 = vadd.f32 %v3172, %v3344
      %v3367 = vadd.f32 %v3173, %v3349
      %s3368 = scalar_lea.vmem %s148, 32
      %3369 = vst [vmem:[%s3368] sm:$0xff] %v2608
      %3370 = vst [vmem:[%s3368 + $0x8] sm:$0xff] %v3352
      %3371 = vst [vmem:[%s3368 + $0x10] sm:$0xff] %v2609
      %3372 = vst [vmem:[%s3368 + $0x18] sm:$0xff] %v3353
      %3373 = vst [vmem:[%s3368 + $0x40] sm:$0xff] %v2610
      %3374 = vst [vmem:[%s3368 + $0x48] sm:$0xff] %v3354
      %3375 = vst [vmem:[%s3368 + $0x50] sm:$0xff] %v2611
      %3376 = vst [vmem:[%s3368 + $0x58] sm:$0xff] %v3355
      %3377 = vst [vmem:[%s3368 + $0x80] sm:$0xff] %v2612
      %3378 = vst [vmem:[%s3368 + $0x88] sm:$0xff] %v3356
      %3379 = vst [vmem:[%s3368 + $0x90] sm:$0xff] %v2613
      %3380 = vst [vmem:[%s3368 + $0x98] sm:$0xff] %v3357
      %3381 = vst [vmem:[%s3368 + $0xc0] sm:$0xff] %v2614
      %3382 = vst [vmem:[%s3368 + $0xc8] sm:$0xff] %v3358
      %3383 = vst [vmem:[%s3368 + $0xd0] sm:$0xff] %v2615
      %3384 = vst [vmem:[%s3368 + $0xd8] sm:$0xff] %v3359
      %3385 = vst [vmem:[%s3368 + $0x100] sm:$0xff] %v2616
      %3386 = vst [vmem:[%s3368 + $0x108] sm:$0xff] %v3360
      %3387 = vst [vmem:[%s3368 + $0x110] sm:$0xff] %v2617
      %3388 = vst [vmem:[%s3368 + $0x118] sm:$0xff] %v3361
      %3389 = vst [vmem:[%s3368 + $0x140] sm:$0xff] %v2618
      %3390 = vst [vmem:[%s3368 + $0x148] sm:$0xff] %v3362
      %3391 = vst [vmem:[%s3368 + $0x150] sm:$0xff] %v2619
      %3392 = vst [vmem:[%s3368 + $0x158] sm:$0xff] %v3363
      %3393 = vst [vmem:[%s3368 + $0x180] sm:$0xff] %v2620
      %3394 = vst [vmem:[%s3368 + $0x188] sm:$0xff] %v3364
      %3395 = vst [vmem:[%s3368 + $0x190] sm:$0xff] %v2621
      %3396 = vst [vmem:[%s3368 + $0x198] sm:$0xff] %v3365
      %3397 = vst [vmem:[%s3368 + $0x1c0] sm:$0xff] %v2622
      %3398 = vst [vmem:[%s3368 + $0x1c8] sm:$0xff] %v3366
      %3399 = vst [vmem:[%s3368 + $0x1d0] sm:$0xff] %v2623
      %3400 = vst [vmem:[%s3368 + $0x1d8] sm:$0xff] %v3367
      %s3401 = smul.u32 8, %s19
      %p3402 = scmp.lt.s32.totalorder %s18, 1
      %s3403 = scalar_select %p3402, %s18, 1
      %p3404 = scmp.lt.s32.totalorder %s3401, 15
      %s3405 = scalar_select %p3404, %s3401, 15
      %s3406 = smul.addr %s3405, 8
      %s3407 = smul.addr %s3403, 128
      %s3408 = sadd.s32 %s3406, %s3407
      %s3409 = smul.addr %s3408, 8
      %s3410 = scalar_lea.vmem %s3, %s3409
      // Predicated region
      $region66: #{_lambda_.1} parent=27 // pred_check
        %p3411 = pneg %p88
      $region67: #{_lambda_.1} parent=27 // pred_check_branch
        %3413 = sbr.rel (%p3411) target = $region69
      $region68: #{_lambda_.1} parent=27 // pred_region
        %s3414 = smul.u32 8, %s19
      $region69: #{_lambda_.1} parent=27 // pred_fallthru
        _
    $region28: #{_lambda_.1} parent=5 // pred_fallthru
      _
    %p3415 = scmp.le.s32.totalorder 2, %s9
    // Predicated region
    $region70: #{_lambda_.1} parent=5 // pred_check
      %p3416 = pneg %p3415
    $region71: #{_lambda_.1} parent=5 // pred_check_branch
      %3418 = sbr.rel (%p3416) target = $region73
    $region72: #{_lambda_.1} parent=5 // pred_region
      %s3419 = ssub.s32 %s9, 2
      // Predicated region
      $region74: #{_lambda_.1} parent=72 // pred_check
        %p3420 = pneg %p94
      $region75: #{_lambda_.1} parent=72 // pred_check_branch
        %3422 = sbr.rel (%p3420) target = $region77
      $region76: #{_lambda_.1} parent=72 // pred_region
        %s3423 = smul.u32 8, %s21
        %p3424 = scmp.lt.s32.totalorder %s20, 1
        %s3425 = scalar_select %p3424, %s20, 1
        %p3426 = scmp.lt.s32.totalorder %s3423, 15
        %s3427 = scalar_select %p3426, %s3423, 15
        %s3428 = smul.addr %s3427, 8
        %s3429 = smul.addr %s3425, 128
        %s3430 = sadd.s32 %s3428, %s3429
        %s3431 = smul.addr %s3430, 8
        %s3432 = scalar_lea.vmem %s3, %s3431
      $region77: #{_lambda_.1} parent=72 // pred_fallthru
        _
    $region73: #{_lambda_.1} parent=5 // pred_fallthru
      _
  $region6: #{_lambda_.1} parent=0 // loop_footer
    %s13 = sadd.s32 1, %s9
  $region7: #{_lambda_.1} parent=0 // loop_footer_branch
    %8 = sbr.rel target = $region3
  $region8: #{_lambda_.1} parent=0 // loop_exit
    _
  %3433 = vsyncmov [#allocation3]
  %s3434 = vpop.sfrf %3433
  %p3435 = scmp.eq.s32.totalorder %s3434, 0
  %p3436 = pneg %p3435
  %3438 = shalt.err (%p3436)

</llo_original>
